<compile_context>
chip_gen: v7x
topology: tpu7x:2x2x1
jax: 0.10.0
libtpu: 0.0.40
codegen_flags: <defaults>
</compile_context>

<pallas_src>
import jax
import jax.numpy as jnp
from jax.experimental import pallas as pl
from jax.experimental.pallas import tpu as pltpu


def _pos_emb_kernel(pos_ref, inv_freq_ref, out_ref):
    # pos_ref:      (TS, 1)     float32
    # inv_freq_ref: (1, half)   float32   (resident across all grid steps)
    # out_ref:      (TS, demb)  out dtype (half % 128 == 0 -> lane-dense halves)
    half = inv_freq_ref.shape[1]
    sinusoid = pos_ref[...] * inv_freq_ref[...]          # outer product -> (TS, half), f32
    out_ref[:, :half] = jnp.sin(sinusoid).astype(out_ref.dtype)
    out_ref[:, half:] = jnp.cos(sinusoid).astype(out_ref.dtype)


def _round_up(x: int, m: int) -> int:
    return -(-x // m) * m


def _tpu_vmem_capacity_bytes() -> int:
    try:
        return int(pltpu.get_tpu_info().vmem_capacity_bytes)
    except Exception:  # CPU interpret / older jax — assume the smallest (v7x per-TC)
        return 64 * 1024 * 1024


def _pos_emb_pallas(pos_seq: jax.Array, inv_freq: jax.Array, demb: int,
                    out_dtype=jnp.float32, max_tile_rows: int = 1024) -> jax.Array:
    """Compute [sin(pos ⊗ inv_freq) | cos(pos ⊗ inv_freq)] -> (S, demb)."""
    S = pos_seq.shape[0]
    half = demb // 2
    itemsize = jnp.dtype(out_dtype).itemsize
    sub = {4: 8, 2: 16, 1: 32}.get(itemsize, 8)          # sublane tile for out dtype

    # --- tile-height selection -------------------------------------------------
    cap = _tpu_vmem_capacity_bytes()
    # Per-tile budget for the (double-buffered) output; generation-aware so v7x's
    # 64 MiB VMEM is respected while v5e/v6e get bigger tiles for wide demb.
    tile_budget = min(12 * 1024 * 1024, max(4 * 1024 * 1024, cap // 10))
    rows_budget = max(sub, (tile_budget // (demb * itemsize)) // sub * sub)

    # Target >=4 grid steps when S is large enough: lets "parallel" shard across
    # v7x's two TensorCores and hides the output DMA on all generations.
    quarter = _round_up(max(1, -(-S // 4)), sub)
    TS = min(max_tile_rows, rows_budget, max(256, quarter), _round_up(S, sub))
    TS = max(sub, (TS // sub) * sub)

    # Prefer a TS that evenly divides S (no short masked tail step), but do not
    # shrink the tile below half the budgeted height for it.
    if S % TS != 0:
        for t in range(TS - sub, max(sub, TS // 2) - 1, -sub):
            if S % t == 0:
                TS = t
                break

    pos_col = pos_seq.astype(jnp.float32).reshape(S, 1)
    inv_row = inv_freq.astype(jnp.float32).reshape(1, half)

    grid = (pl.cdiv(S, TS),)

    # Explicit, generation-aware VMEM limit: double-buffered output + inputs +
    # f32 intermediates (sinusoid, sin, cos) with headroom, capped at cap/2.
    out_tile_bytes = TS * demb * itemsize
    in_tile_bytes = TS * 4 + half * 4
    interm_bytes = 3 * TS * half * 4
    vmem_limit = int(min(cap // 2,
                         max(2 * (out_tile_bytes + in_tile_bytes) + interm_bytes
                             + (4 << 20), 16 << 20)))

    out = pl.pallas_call(
        _pos_emb_kernel,
        out_shape=jax.ShapeDtypeStruct((S, demb), out_dtype),   # true shape: no slice copy
        grid=grid,
        in_specs=[
            pl.BlockSpec((TS, 1), lambda i: (i, 0)),       # pos tile streams over S
            pl.BlockSpec((1, half), lambda i: (0, 0)),     # inv_freq stays resident
        ],
        out_specs=pl.BlockSpec((TS, demb), lambda i: (i, 0)),
        compiler_params=pltpu.CompilerParams(
            dimension_semantics=("parallel",),             # shard tiles across TCs (v7x)
            vmem_limit_bytes=vmem_limit,
        ),
        cost_estimate=pl.CostEstimate(
            flops=S * half,                                # one vmul per (row, freq)
            transcendentals=S * demb,                      # sin + cos
            bytes_accessed=S * demb * itemsize + S * 4 + half * 4,
        ),
    )(pos_col, inv_row)

    return out


class PositionalEmbedding:
    """JAX/Pallas port of the PyTorch PositionalEmbedding module."""

    def __init__(self, demb: int, dtype=jnp.float32):
        assert demb % 2 == 0, "demb must be even"
        self.demb = demb
        self.dtype = jnp.dtype(dtype)
        # inv_freq = 1 / 10000 ** (arange(0, demb, 2) / demb)
        self.inv_freq = 1.0 / (
            10000.0 ** (jnp.arange(0.0, demb, 2.0, dtype=jnp.float32) / demb)
        )

    def __call__(self, pos_seq: jax.Array, bsz: int | None = None) -> jax.Array:
        pos_seq = pos_seq.astype(jnp.float32)
        S = pos_seq.shape[0]
        half = self.demb // 2

        # Pallas path only when both halves are lane-tile aligned (half % 128 == 0)
        # and S is big enough that the pallas_call overhead pays off.  Misaligned /
        # tiny shapes take the plain-jnp path (fuses trivially in XLA).
        if S >= 64 and half >= 128 and half % 128 == 0:
            pos_emb = _pos_emb_pallas(pos_seq, self.inv_freq, self.demb,
                                      out_dtype=self.dtype)
        else:
            sinusoid = jnp.outer(pos_seq, self.inv_freq)
            pos_emb = jnp.concatenate(
                [jnp.sin(sinusoid), jnp.cos(sinusoid)], axis=-1).astype(self.dtype)

        # pos_emb[:, None, :] (and optional expand over bsz) — plain-JAX glue.
        # Under jit the broadcast stays lazy and fuses into the consumer
        # (mirrors torch's expand(); no HBM materialization).
        if bsz is not None:
            return jnp.broadcast_to(pos_emb[:, None, :], (S, bsz, self.demb))
        return pos_emb[:, None, :]


def _reference(pos_seq, inv_freq, bsz=None):
    sinusoid_inp = jnp.outer(pos_seq, inv_freq)
    pos_emb = jnp.concatenate([jnp.sin(sinusoid_inp), jnp.cos(sinusoid_inp)], axis=-1)
    if bsz is not None:
        return jnp.broadcast_to(pos_emb[:, None, :],
                                (pos_emb.shape[0], bsz, pos_emb.shape[1]))
    return pos_emb[:, None, :]


if __name__ == "__main__":
    key = jax.random.PRNGKey(0)

    # --- small shapes (matches the module's typical demo sizes): plain-JAX path
    demb_s, seq_s, bsz = 32, 8, 2
    base_s = jnp.arange(seq_s - 1, -1, -1.0, dtype=jnp.float32)
    pos_s = base_s + 0.01 * jax.random.normal(key, (seq_s,), dtype=jnp.float32)

    mod_s = PositionalEmbedding(demb_s)
    out_s_nobsz = mod_s(pos_s)              # (seq_s, 1, demb_s)
    out_s_bsz = mod_s(pos_s, bsz=bsz)       # (seq_s, bsz, demb_s)
    jax.block_until_ready(out_s_nobsz)
    jax.block_until_ready(out_s_bsz)

    assert out_s_nobsz.shape == (seq_s, 1, demb_s)
    assert out_s_bsz.shape == (seq_s, bsz, demb_s)
    assert jnp.allclose(out_s_nobsz, _reference(pos_s, mod_s.inv_freq), atol=1e-5, rtol=1e-5)
    assert jnp.allclose(out_s_bsz, _reference(pos_s, mod_s.inv_freq, bsz=bsz), atol=1e-5, rtol=1e-5)

    # --- Pallas path, f32, S chosen so an even-dividing tile exists (TS=160, 4 steps)
    demb_l, seq_l = 256, 640
    base_l = jnp.arange(seq_l - 1, -1, -1.0, dtype=jnp.float32)
    pos_l = base_l + 0.01 * jax.random.normal(jax.random.PRNGKey(1), (seq_l,),
                                              dtype=jnp.float32)

    mod_l = PositionalEmbedding(demb_l)
    out_l_nobsz = mod_l(pos_l)              # (seq_l, 1, demb_l) via Pallas
    out_l_bsz = mod_l(pos_l, bsz=bsz)       # (seq_l, bsz, demb_l) via Pallas
    jax.block_until_ready(out_l_nobsz)
    jax.block_until_ready(out_l_bsz)

    ref_l_nobsz = _reference(pos_l, mod_l.inv_freq)
    ref_l_bsz = _reference(pos_l, mod_l.inv_freq, bsz=bsz)

    assert out_l_nobsz.shape == (seq_l, 1, demb_l)
    assert out_l_bsz.shape == (seq_l, bsz, demb_l)
    assert jnp.allclose(out_l_nobsz, ref_l_nobsz, atol=1e-4, rtol=1e-4)
    assert jnp.allclose(out_l_bsz, ref_l_bsz, atol=1e-4, rtol=1e-4)

    # --- Pallas path, S not a multiple of 8/TS (masked tail block, no padding copy)
    seq_r = 250
    pos_r = jnp.arange(seq_r - 1, -1, -1.0, dtype=jnp.float32)
    out_r = mod_l(pos_r)
    jax.block_until_ready(out_r)
    assert out_r.shape == (seq_r, 1, demb_l)
    assert jnp.allclose(out_r, _reference(pos_r, mod_l.inv_freq), atol=1e-4, rtol=1e-4)

    # --- Pallas path, bf16 output (halved HBM writeback; f32 math, cast on store)
    mod_bf = PositionalEmbedding(demb_l, dtype=jnp.bfloat16)
    out_bf = mod_bf(pos_l)
    jax.block_until_ready(out_bf)
    assert out_bf.dtype == jnp.bfloat16
    assert jnp.allclose(out_bf.astype(jnp.float32), ref_l_nobsz, atol=2e-2, rtol=2e-2)

    print("KERNEL_OK")
</pallas_src>

<mosaic_0001>
module attributes {stable_mosaic.version = 11 : i64} {
  func.func @_pos_emb_kernel(%arg0: i32, %arg1: memref<160x1xf32, #tpu.memory_space<vmem>>, %arg2: memref<1x128xf32, #tpu.memory_space<vmem>>, %arg3: memref<160x256xf32, #tpu.memory_space<vmem>>) attributes {dimension_semantics = [#tpu.dimension_semantics<parallel>], iteration_bounds = array<i64: 4>, scalar_prefetch = 0 : i64, scratch_operands = 0 : i64, tpu.core_type = #tpu.core_type<tc>, window_params = [{transform_indices = @transform_0, window_bounds = array<i64: 160, 1>}, {pipeline_mode = #tpu.pipeline_mode<synchronous>, transform_indices = @transform_1, window_bounds = array<i64: 1, 128>}, {transform_indices = @transform_2, window_bounds = array<i64: 160, 256>}]} {
    %c0 = arith.constant 0 : index
    %c0_0 = arith.constant 0 : index
    %0 = vector.load %arg1[%c0, %c0_0] : memref<160x1xf32, #tpu.memory_space<vmem>>, vector<160x1xf32>
    %c0_1 = arith.constant 0 : index
    %c0_2 = arith.constant 0 : index
    %1 = vector.load %arg2[%c0_1, %c0_2] : memref<1x128xf32, #tpu.memory_space<vmem>>, vector<1x128xf32>
    %2 = vector.broadcast %0 : vector<160x1xf32> to vector<160x128xf32>
    %3 = vector.broadcast %1 : vector<1x128xf32> to vector<160x128xf32>
    %4 = arith.mulf %2, %3 : vector<160x128xf32>
    %5 = math.sin %4 : vector<160x128xf32>
    %c0_3 = arith.constant 0 : index
    %c0_4 = arith.constant 0 : index
    %6 = vector.load %arg3[%c0_3, %c0_4] : memref<160x256xf32, #tpu.memory_space<vmem>>, vector<160x128xf32>
    tpu.vector_store %arg3[%c0_3, %c0_4], %5 {strides = array<i32>} : memref<160x256xf32, #tpu.memory_space<vmem>>, vector<160x128xf32>,
    %7 = math.cos %4 : vector<160x128xf32>
    %c0_5 = arith.constant 0 : index
    %c128 = arith.constant 128 : index
    %8 = vector.load %arg3[%c0_5, %c128] : memref<160x256xf32, #tpu.memory_space<vmem>>, vector<160x128xf32>
    tpu.vector_store %arg3[%c0_5, %c128], %7 {strides = array<i32>} : memref<160x256xf32, #tpu.memory_space<vmem>>, vector<160x128xf32>,
    return
  }
  func.func @transform_0(%arg0: i32) -> (i32, i32) {
    %c0_i32 = arith.constant 0 : i32
    %c0_i32_0 = arith.constant 0 : i32
    return %arg0, %c0_i32 : i32, i32
  }
  func.func @transform_1(%arg0: i32) -> (i32, i32) {
    %c0_i32 = arith.constant 0 : i32
    %c0_i32_0 = arith.constant 0 : i32
    %c0_i32_1 = arith.constant 0 : i32
    return %c0_i32, %c0_i32_0 : i32, i32
  }
  func.func @transform_2(%arg0: i32) -> (i32, i32) {
    %c0_i32 = arith.constant 0 : i32
    %c0_i32_0 = arith.constant 0 : i32
    return %arg0, %c0_i32 : i32, i32
  }
}

</mosaic_0001>

<llo_original>
// kernel: tpu_custom_call.1
$region0: #{tpu_custom_call.1}
  #allocation0 [shape = 'u32[]', space=smem, size = 0x4, offset = 0x4, fixed_abs, tag = 'smem constant byte address 0x4 - core index']
  #allocation1 [shape = 'u32[144,128]{1,0:T(1,128)}', space=vmem, size = 0x12000, scoped, tag = 'internal scratch']
  %s0 = inlined_call_operand.vmem [shape: f32[640,1], index: 0, kind: input, shape index: {}]
  %s1 = inlined_call_operand.vmem [shape: f32[1,128], index: 1, kind: input, shape index: {}]
  %s2 = inlined_call_operand.hbm [shape: f32[640,256], index: 2, kind: output, shape index: {}]
  %s3 = sld [smem:[#allocation0]]
  $region41: #{tpu_custom_call.1} parent=0
    _
  %s5 = ssub.s32 1, %s3
  %s6 = scalar_select 0, %s5, %s3
  $region1: #{tpu_custom_call.1} parent=0
    #allocation2 [shape = 'u8[327680]{0}', space=vmem, size = 0x50000, scoped, tag = 'output window, operand 0']
    #allocation3 [shape = 's32[2]{0}', space=sflag, size = 0x8, scoped, tag = 'scoped memory for tpu_custom_call.1']
    %7 = vsyncpa [#allocation3], 0
    %s8 = scalar_lea.sflag [#allocation3], 1
    %9 = vsyncpa %s8, 0
    loop: start=0, step=1, limit=6
    $region2: #{tpu_custom_call.1} parent=1 // loop_pre_header
      _
    $region3: #{tpu_custom_call.1} parent=1 // loop_header
      %s11 = sphi 0, %s15
      %p12 = scmp.ge.s32.totalorder %s11, 6
      %s21 = sphi 0, %s23
      %s24 = sphi 0, %s21
      %s25 = sphi 0, %s24
      %s41 = sphi 0, %s25
      %s45 = sphi 0, %s45
      %s47 = sphi 0, %s45
      %s48 = sphi 0, %s47
      %s62 = sphi 0, %s48
      %s68 = sphi 0, %s70
      %s71 = sphi 0, %s68
      %s72 = sphi 0, %s71
      %s88 = sphi 0, %s72
    $region4: #{tpu_custom_call.1} parent=1 // loop_header_branch
      %14 = sbr.rel (%p12) target = $region8
    $region5: #{tpu_custom_call.1} parent=1 // loop_body
      %s16 = ssub.s32 %s11, 1
      %s17 = ssub.s32 %s11, 2
      %s18 = sadd.s32 %s11, 1
      %s19 = ssub.s32 %s11, %s18
      %p20 = scmp.eq.s32.totalorder %s19, 0
      %s22 = sadd.s32 %s21, 1
      %s23 = scalar_select %p20, %s21, %s22
      %p26 = pneg %p20
      %p27 = scmp.eq.s32.totalorder %s11, 3
      %p28 = por %p26, %p27
      %p29 = scmp.ne.s32.totalorder %s21, %s24
      %p30 = scmp.eq.s32.totalorder %s11, 0
      %p31 = por %p29, %p30
      %p32 = scmp.ne.s32.totalorder %s21, %s24
      %p33 = scmp.eq.s32.totalorder %s16, 3
      %p34 = por %p32, %p33
      %p35 = scmp.ne.s32.totalorder %s24, %s25
      %p36 = scmp.eq.s32.totalorder %s16, 0
      %p37 = por %p35, %p36
      %p38 = scmp.ne.s32.totalorder %s24, %s25
      %p39 = scmp.eq.s32.totalorder %s17, 3
      %p40 = por %p38, %p39
      %p42 = scmp.ne.s32.totalorder %s25, %s41
      %p43 = scmp.eq.s32.totalorder %s17, 0
      %p44 = por %p42, %p43
      %s46 = sadd.s32 %s45, 1
      %p49 = scmp.eq.s32.totalorder %s11, 3
      %p50 = scmp.ne.s32.totalorder %s45, %s47
      %p51 = scmp.eq.s32.totalorder %s11, 0
      %p52 = por %p50, %p51
      %p53 = scmp.ne.s32.totalorder %s45, %s47
      %p54 = scmp.eq.s32.totalorder %s16, 3
      %p55 = por %p53, %p54
      %p56 = scmp.ne.s32.totalorder %s47, %s48
      %p57 = scmp.eq.s32.totalorder %s16, 0
      %p58 = por %p56, %p57
      %p59 = scmp.ne.s32.totalorder %s47, %s48
      %p60 = scmp.eq.s32.totalorder %s17, 3
      %p61 = por %p59, %p60
      %p63 = scmp.ne.s32.totalorder %s48, %s62
      %p64 = scmp.eq.s32.totalorder %s17, 0
      %p65 = por %p63, %p64
      %s66 = ssub.s32 %s11, %s18
      %p67 = scmp.eq.s32.totalorder %s66, 0
      %s69 = sadd.s32 %s68, 1
      %s70 = scalar_select %p67, %s68, %s69
      %p73 = pneg %p67
      %p74 = scmp.eq.s32.totalorder %s11, 3
      %p75 = por %p73, %p74
      %p76 = scmp.ne.s32.totalorder %s68, %s71
      %p77 = scmp.eq.s32.totalorder %s11, 0
      %p78 = por %p76, %p77
      %p79 = scmp.ne.s32.totalorder %s68, %s71
      %p80 = scmp.eq.s32.totalorder %s16, 3
      %p81 = por %p79, %p80
      %p82 = scmp.ne.s32.totalorder %s71, %s72
      %p83 = scmp.eq.s32.totalorder %s16, 0
      %p84 = por %p82, %p83
      %p85 = scmp.ne.s32.totalorder %s71, %s72
      %p86 = scmp.eq.s32.totalorder %s17, 3
      %p87 = por %p85, %p86
      %p89 = scmp.ne.s32.totalorder %s72, %s88
      %p90 = scmp.eq.s32.totalorder %s17, 0
      %p91 = por %p89, %p90
      %p92 = scmp.le.s32.totalorder 1, %s11
      %p93 = scmp.lt.s32.totalorder %s11, 5
      %p94 = pnand %p92, %p93
      %p95 = pneg %p94
      // Predicated region
      $region9: #{tpu_custom_call.1} parent=5 // pred_check
        _
      $region10: #{tpu_custom_call.1} parent=5 // pred_check_branch
        %97 = sbr.rel (%p94) target = $region12
      $region11: #{tpu_custom_call.1} parent=5 // pred_region
        %s98 = ssub.s32 %s11, 1
        // Predicated region
        $region13: #{tpu_custom_call.1} parent=11 // pred_check
          %p99 = pneg %p58
        $region14: #{tpu_custom_call.1} parent=11 // pred_check_branch
          %101 = sbr.rel (%p99) target = $region16
        $region15: #{tpu_custom_call.1} parent=11 // pred_region
          _
        $region16: #{tpu_custom_call.1} parent=11 // pred_fallthru
          _
      $region12: #{tpu_custom_call.1} parent=5 // pred_fallthru
        _
      %p102 = scmp.lt.s32.totalorder %s11, 4
      // Predicated region
      $region17: #{tpu_custom_call.1} parent=5 // pred_check
        %p103 = pneg %p102
      $region18: #{tpu_custom_call.1} parent=5 // pred_check_branch
        %105 = sbr.rel (%p103) target = $region20
      $region19: #{tpu_custom_call.1} parent=5 // pred_region
        // Predicated region
        $region21: #{tpu_custom_call.1} parent=19 // pred_check
          %p106 = pneg %p31
        $region22: #{tpu_custom_call.1} parent=19 // pred_check_branch
          %108 = sbr.rel (%p106) target = $region24
        $region23: #{tpu_custom_call.1} parent=19 // pred_region
          %s109 = smul.u32 20, %s11
          %p110 = scmp.lt.s32.totalorder %s109, 79
          %s111 = scalar_select %p110, %s109, 79
          %s112 = smul.addr %s111, 8
          %s113 = scalar_lea.vmem %s0, %s112
          %s114 = smul.u32 20, %s11
        $region24: #{tpu_custom_call.1} parent=19 // pred_fallthru
          _
      $region20: #{tpu_custom_call.1} parent=5 // pred_fallthru
        _
      %p115 = scmp.le.s32.totalorder 1, %s11
      %p116 = scmp.lt.s32.totalorder %s11, 5
      %p117 = pnand %p115, %p116
      %p118 = pneg %p117
      // Predicated region
      $region25: #{tpu_custom_call.1} parent=5 // pred_check
        _
      $region26: #{tpu_custom_call.1} parent=5 // pred_check_branch
        %120 = sbr.rel (%p117) target = $region28
      $region27: #{tpu_custom_call.1} parent=5 // pred_region
        %s121 = ssub.s32 %s11, 1
        %s122 = smul.u32 20, %s16
        %p123 = scmp.lt.s32.totalorder %s122, 79
        %s124 = scalar_select %p123, %s122, 79
        %s125 = smul.addr %s124, 8
        %s126 = scalar_lea.vmem %s0, %s125
        %p127 = pneg %p37
        %p128 = pneg %p34
        %p129 = pneg %p58
        %p130 = pneg %p55
        %p131 = pneg %p84
        %p132 = pneg %p81
        %s133 = sand.u32 %s71, 1
        %s134 = scalar_lea.sflag [#allocation3], %s133
        %s135 = sand.u32 %s71, 1
        %s136 = smul.addr %s135, 320
        %s137 = scalar_lea.vmem [#allocation2], %s136
        %s138 = smul.u32 20, %s16
        %p139 = scmp.lt.s32.totalorder %s138, 79
        %s140 = scalar_select %p139, %s138, 79
        %s141 = smul.addr %s140, 8
        %s142 = scalar_lea.vmem %s0, %s141
        %s143 = smul.u32 20, %s16
        %s144 = smul.u32 20, %s16
        %v145 = vld [vmem:[%s142] sm:$0xff]
        %v146 = vld [vmem:[%s142 + $0x8] sm:$0xff]
        %v147 = vld [vmem:[%s142 + $0x10] sm:$0xff]
        %v148 = vld [vmem:[%s142 + $0x18] sm:$0xff]
        %v149 = vld [vmem:[%s142 + $0x20] sm:$0xff]
        %v150 = vld [vmem:[%s142 + $0x28] sm:$0xff]
        %v151 = vld [vmem:[%s142 + $0x30] sm:$0xff]
        %v152 = vld [vmem:[%s142 + $0x38] sm:$0xff]
        %v153 = vld [vmem:[%s142 + $0x40] sm:$0xff]
        %v154 = vld [vmem:[%s142 + $0x48] sm:$0xff]
        %v155 = vld [vmem:[%s142 + $0x50] sm:$0xff]
        %v156 = vld [vmem:[%s142 + $0x58] sm:$0xff]
        %v157 = vld [vmem:[%s142 + $0x60] sm:$0xff]
        %v158 = vld [vmem:[%s142 + $0x68] sm:$0xff]
        %v159 = vld [vmem:[%s142 + $0x70] sm:$0xff]
        %v160 = vld [vmem:[%s142 + $0x78] sm:$0xff]
        %v161 = vld [vmem:[%s142 + $0x80] sm:$0xff]
        %v162 = vld [vmem:[%s142 + $0x88] sm:$0xff]
        %v163 = vld [vmem:[%s142 + $0x90] sm:$0xff]
        %v164 = vld [vmem:[%s142 + $0x98] sm:$0xff]
        %v165 = vld [vmem:[%s1] sm:$0x1]
        %167 = vset.pattern.permute.xlu0 0
        %168 = vperm.xlu0 %167, %v145
        %v169 = vpop.permute.xlu0 %168
        %172 = vset.pattern.permute.xlu0 0
        %173 = vperm.xlu0 %172, %v146
        %v174 = vpop.permute.xlu0 %173
        %177 = vset.pattern.permute.xlu0 0
        %178 = vperm.xlu0 %177, %v147
        %v179 = vpop.permute.xlu0 %178
        %182 = vset.pattern.permute.xlu0 0
        %183 = vperm.xlu0 %182, %v148
        %v184 = vpop.permute.xlu0 %183
        %187 = vset.pattern.permute.xlu0 0
        %188 = vperm.xlu0 %187, %v149
        %v189 = vpop.permute.xlu0 %188
        %192 = vset.pattern.permute.xlu0 0
        %193 = vperm.xlu0 %192, %v150
        %v194 = vpop.permute.xlu0 %193
        %197 = vset.pattern.permute.xlu0 0
        %198 = vperm.xlu0 %197, %v151
        %v199 = vpop.permute.xlu0 %198
        %202 = vset.pattern.permute.xlu0 0
        %203 = vperm.xlu0 %202, %v152
        %v204 = vpop.permute.xlu0 %203
        %207 = vset.pattern.permute.xlu0 0
        %208 = vperm.xlu0 %207, %v153
        %v209 = vpop.permute.xlu0 %208
        %212 = vset.pattern.permute.xlu0 0
        %213 = vperm.xlu0 %212, %v154
        %v214 = vpop.permute.xlu0 %213
        %217 = vset.pattern.permute.xlu0 0
        %218 = vperm.xlu0 %217, %v155
        %v219 = vpop.permute.xlu0 %218
        %222 = vset.pattern.permute.xlu0 0
        %223 = vperm.xlu0 %222, %v156
        %v224 = vpop.permute.xlu0 %223
        %227 = vset.pattern.permute.xlu0 0
        %228 = vperm.xlu0 %227, %v157
        %v229 = vpop.permute.xlu0 %228
        %232 = vset.pattern.permute.xlu0 0
        %233 = vperm.xlu0 %232, %v158
        %v234 = vpop.permute.xlu0 %233
        %237 = vset.pattern.permute.xlu0 0
        %238 = vperm.xlu0 %237, %v159
        %v239 = vpop.permute.xlu0 %238
        %242 = vset.pattern.permute.xlu0 0
        %243 = vperm.xlu0 %242, %v160
        %v244 = vpop.permute.xlu0 %243
        %247 = vset.pattern.permute.xlu0 0
        %248 = vperm.xlu0 %247, %v161
        %v249 = vpop.permute.xlu0 %248
        %252 = vset.pattern.permute.xlu0 0
        %253 = vperm.xlu0 %252, %v162
        %v254 = vpop.permute.xlu0 %253
        %257 = vset.pattern.permute.xlu0 0
        %258 = vperm.xlu0 %257, %v163
        %v259 = vpop.permute.xlu0 %258
        %262 = vset.pattern.permute.xlu0 0
        %263 = vperm.xlu0 %262, %v164
        %v264 = vpop.permute.xlu0 %263
        %v267 = vlaneseq
        %v268 = vshrl.u32 %v267, 7
        %v269 = vsub.s32 0, %v268
        %v270 = vrot.slane %v165, %v269
        %v272 = vmul.f32 %v169, %v270
        %v273 = vmul.f32 %v174, %v270
        %v274 = vmul.f32 %v179, %v270
        %v275 = vmul.f32 %v184, %v270
        %v276 = vmul.f32 %v189, %v270
        %v277 = vmul.f32 %v194, %v270
        %v278 = vmul.f32 %v199, %v270
        %v279 = vmul.f32 %v204, %v270
        %v280 = vmul.f32 %v209, %v270
        %v281 = vmul.f32 %v214, %v270
        %v282 = vmul.f32 %v219, %v270
        %v283 = vmul.f32 %v224, %v270
        %v284 = vmul.f32 %v229, %v270
        %v285 = vmul.f32 %v234, %v270
        %v286 = vmul.f32 %v239, %v270
        %v287 = vmul.f32 %v244, %v270
        %v288 = vmul.f32 %v249, %v270
        %v289 = vmul.f32 %v254, %v270
        %v290 = vmul.f32 %v259, %v270
        %v291 = vmul.f32 %v264, %v270
        %v292 = vand.u32 2147483647, %v272
        %vm293 = vcmp.le.f32.partialorder %v292, 0.7853982
        %vm294 = vcmp.lt.s32.totalorder %v272, 0
        %v295 = vand.u32 %v272, 2139095040
        %v296 = vshrl.u32 %v295, 23
        %v297 = vsub.s32 %v296, 127
        %v298 = vand.u32 2147483647, %v272
        %v299 = vand.u32 %v298, 8388607
        %v300 = vor.u32 %v299, 8388608
        %v301 = vsub.s32 0, %v300
        %v302 = vadd.s32 %v297, 1
        %vm303 = vcmp.gt.s32.totalorder %v302, 0
        %v304 = vsel %vm303, %v302, 0
        %v305 = vshrl.u32 %v304, 5
        %v306 = vand.u32 %v304, 31
        %v307 = vsub.s32 32, %v306
        %v308 = vshrl.u32 683565275, %v307
        %v309 = vshll.u32 683565275, %v306
        %v310 = vshrl.u32 2475754826, %v307
        %v311 = vor.u32 %v309, %v310
        %v312 = vshll.u32 2475754826, %v306
        %v313 = vshrl.u32 2131351028, %v307
        %v314 = vor.u32 %v312, %v313
        %v315 = vshll.u32 2131351028, %v306
        %v316 = vshrl.u32 2102212464, %v307
        %v317 = vor.u32 %v315, %v316
        %v318 = vshll.u32 2102212464, %v306
        %v319 = vshrl.u32 920167782, %v307
        %v320 = vor.u32 %v318, %v319
        %v321 = vshll.u32 920167782, %v306
        %v322 = vshrl.u32 1326507024, %v307
        %v323 = vor.u32 %v321, %v322
        %vm324 = vcmp.lt.s32.totalorder %v305, 1
        %vm325 = vcmp.lt.s32.totalorder %v305, 2
        %vm326 = vcmp.lt.s32.totalorder %v305, 3
        %vm327 = vcmp.lt.s32.totalorder %v305, 4
        %v328 = vsel %vm324, %v308, %v311
        %v329 = vsel %vm327, %v317, 2102212464
        %v330 = vsel %vm326, %v314, %v329
        %v331 = vsel %vm325, %v328, %v330
        %v332 = vsel %vm324, %v311, %v314
        %v333 = vsel %vm327, %v320, 920167782
        %v334 = vsel %vm326, %v317, %v333
        %v335 = vsel %vm325, %v332, %v334
        %v336 = vsel %vm324, %v314, %v317
        %v337 = vsel %vm327, %v323, 1326507024
        %v338 = vsel %vm326, %v320, %v337
        %v339 = vsel %vm325, %v336, %v338
        %v340 = vshll.u32 %v300, 8
        %v341 = vmul.u32.u64.compose %v340, %v339
        %v342 = vextract.low.u32 %v341
        %v343 = vextract.high.u32 %v341
        %v344 = vmul.u32.u64.compose %v340, %v335
        %v345 = vextract.low.u32 %v344
        %v346 = vextract.high.u32 %v344
        %v347 = vmul.u32 %v340, %v331
        %v348 = vadd.s32 %v343, %v345
        %vm349 = vc.u32 %v343, %v345
        %v350 = vadd.s32 %v346, 1
        %v351 = vsel %vm349, %v350, %v346
        %v352 = vadd.s32 %v347, %v351
        %v353 = vadd.s32 %v352, 536870912
        %v354 = vshrl.u32 %v353, 30
        %v355 = vshll.u32 %v354, 30
        %v356 = vsub.s32 %v352, %v355
        %vm357 = vcmp.lt.s32.totalorder %v356, 0
        %v358 = vsub.s32 0, %v356
        %v359 = vsel %vm357, %v358, %v356
        %v360 = vclz %v359
        %v361 = vsub.s32 %v360, 2
        %vm362 = vcmp.gt.s32.totalorder 0, %v361
        %v363 = vsel %vm362, 0, %v361
        %v364 = vsub.s32 32, %v363
        %v365 = vshll.u32 %v356, %v363
        %v366 = vshrl.u32 %v348, %v364
        %v367 = vor.u32 %v365, %v366
        %v368 = vsub.s32 4294967266, %v363
        %v369 = vadd.s32 %v368, 127
        %v370 = vshll.u32 %v369, 23
        %v371 = vor.u32 4788187, %v370
        %v372 = vand.u32 2147483647, %v371
        %v374 = vcvt.s32.f32 %v367
        %v375 = vmul.f32 %v374, %v372
        %v376 = vxor.u32 %v375, 2147483648
        %v377 = vsel %vm294, %v376, %v375
        %v378 = vsub.s32 4, %v354
        %v379 = vsel %vm294, %v378, %v354
        %v380 = vsel %vm293, %v272, %v377
        %v381 = vsel %vm293, 0, %v379
        %v382 = vcosq.f32.pop %v380
        %v383 = vsinq.f32.pop %v380
        %vm384 = vweird.f32 %v272
        %v385 = vadd.s32 %v381, 3
        %v386 = vand.u32 %v385, 3
        %vm387 = vcmp.lt.s32.totalorder %v386, 2
        %vm388 = vcmp.eq.s32.totalorder %v386, 0
        %v389 = vxor.u32 %v383, 2147483648
        %v390 = vsel %vm388, %v382, %v389
        %vm391 = vcmp.eq.s32.totalorder %v386, 2
        %v392 = vxor.u32 %v382, 2147483648
        %v393 = vsel %vm391, %v392, %v383
        %v394 = vsel %vm387, %v390, %v393
        %v395 = vsel %vm384, nan, %v394
        %v396 = vand.u32 2147483647, %v273
        %vm397 = vcmp.le.f32.partialorder %v396, 0.7853982
        %vm398 = vcmp.lt.s32.totalorder %v273, 0
        %v399 = vand.u32 %v273, 2139095040
        %v400 = vshrl.u32 %v399, 23
        %v401 = vsub.s32 %v400, 127
        %v402 = vand.u32 2147483647, %v273
        %v403 = vand.u32 %v402, 8388607
        %v404 = vor.u32 %v403, 8388608
        %v405 = vsub.s32 0, %v404
        %v406 = vadd.s32 %v401, 1
        %vm407 = vcmp.gt.s32.totalorder %v406, 0
        %v408 = vsel %vm407, %v406, 0
        %v409 = vshrl.u32 %v408, 5
        %v410 = vand.u32 %v408, 31
        %v411 = vsub.s32 32, %v410
        %v412 = vshrl.u32 683565275, %v411
        %v413 = vshll.u32 683565275, %v410
        %v414 = vshrl.u32 2475754826, %v411
        %v415 = vor.u32 %v413, %v414
        %v416 = vshll.u32 2475754826, %v410
        %v417 = vshrl.u32 2131351028, %v411
        %v418 = vor.u32 %v416, %v417
        %v419 = vshll.u32 2131351028, %v410
        %v420 = vshrl.u32 2102212464, %v411
        %v421 = vor.u32 %v419, %v420
        %v422 = vshll.u32 2102212464, %v410
        %v423 = vshrl.u32 920167782, %v411
        %v424 = vor.u32 %v422, %v423
        %v425 = vshll.u32 920167782, %v410
        %v426 = vshrl.u32 1326507024, %v411
        %v427 = vor.u32 %v425, %v426
        %vm428 = vcmp.lt.s32.totalorder %v409, 1
        %vm429 = vcmp.lt.s32.totalorder %v409, 2
        %vm430 = vcmp.lt.s32.totalorder %v409, 3
        %vm431 = vcmp.lt.s32.totalorder %v409, 4
        %v432 = vsel %vm428, %v412, %v415
        %v433 = vsel %vm431, %v421, 2102212464
        %v434 = vsel %vm430, %v418, %v433
        %v435 = vsel %vm429, %v432, %v434
        %v436 = vsel %vm428, %v415, %v418
        %v437 = vsel %vm431, %v424, 920167782
        %v438 = vsel %vm430, %v421, %v437
        %v439 = vsel %vm429, %v436, %v438
        %v440 = vsel %vm428, %v418, %v421
        %v441 = vsel %vm431, %v427, 1326507024
        %v442 = vsel %vm430, %v424, %v441
        %v443 = vsel %vm429, %v440, %v442
        %v444 = vshll.u32 %v404, 8
        %v445 = vmul.u32.u64.compose %v444, %v443
        %v446 = vextract.low.u32 %v445
        %v447 = vextract.high.u32 %v445
        %v448 = vmul.u32.u64.compose %v444, %v439
        %v449 = vextract.low.u32 %v448
        %v450 = vextract.high.u32 %v448
        %v451 = vmul.u32 %v444, %v435
        %v452 = vadd.s32 %v447, %v449
        %vm453 = vc.u32 %v447, %v449
        %v454 = vadd.s32 %v450, 1
        %v455 = vsel %vm453, %v454, %v450
        %v456 = vadd.s32 %v451, %v455
        %v457 = vadd.s32 %v456, 536870912
        %v458 = vshrl.u32 %v457, 30
        %v459 = vshll.u32 %v458, 30
        %v460 = vsub.s32 %v456, %v459
        %vm461 = vcmp.lt.s32.totalorder %v460, 0
        %v462 = vsub.s32 0, %v460
        %v463 = vsel %vm461, %v462, %v460
        %v464 = vclz %v463
        %v465 = vsub.s32 %v464, 2
        %vm466 = vcmp.gt.s32.totalorder 0, %v465
        %v467 = vsel %vm466, 0, %v465
        %v468 = vsub.s32 32, %v467
        %v469 = vshll.u32 %v460, %v467
        %v470 = vshrl.u32 %v452, %v468
        %v471 = vor.u32 %v469, %v470
        %v472 = vsub.s32 4294967266, %v467
        %v473 = vadd.s32 %v472, 127
        %v474 = vshll.u32 %v473, 23
        %v475 = vor.u32 4788187, %v474
        %v476 = vand.u32 2147483647, %v475
        %v478 = vcvt.s32.f32 %v471
        %v479 = vmul.f32 %v478, %v476
        %v480 = vxor.u32 %v479, 2147483648
        %v481 = vsel %vm398, %v480, %v479
        %v482 = vsub.s32 4, %v458
        %v483 = vsel %vm398, %v482, %v458
        %v484 = vsel %vm397, %v273, %v481
        %v485 = vsel %vm397, 0, %v483
        %v486 = vcosq.f32.pop %v484
        %v487 = vsinq.f32.pop %v484
        %vm488 = vweird.f32 %v273
        %v489 = vadd.s32 %v485, 3
        %v490 = vand.u32 %v489, 3
        %vm491 = vcmp.lt.s32.totalorder %v490, 2
        %vm492 = vcmp.eq.s32.totalorder %v490, 0
        %v493 = vxor.u32 %v487, 2147483648
        %v494 = vsel %vm492, %v486, %v493
        %vm495 = vcmp.eq.s32.totalorder %v490, 2
        %v496 = vxor.u32 %v486, 2147483648
        %v497 = vsel %vm495, %v496, %v487
        %v498 = vsel %vm491, %v494, %v497
        %v499 = vsel %vm488, nan, %v498
        %v500 = vand.u32 2147483647, %v274
        %vm501 = vcmp.le.f32.partialorder %v500, 0.7853982
        %vm502 = vcmp.lt.s32.totalorder %v274, 0
        %v503 = vand.u32 %v274, 2139095040
        %v504 = vshrl.u32 %v503, 23
        %v505 = vsub.s32 %v504, 127
        %v506 = vand.u32 2147483647, %v274
        %v507 = vand.u32 %v506, 8388607
        %v508 = vor.u32 %v507, 8388608
        %v509 = vsub.s32 0, %v508
        %v510 = vadd.s32 %v505, 1
        %vm511 = vcmp.gt.s32.totalorder %v510, 0
        %v512 = vsel %vm511, %v510, 0
        %v513 = vshrl.u32 %v512, 5
        %v514 = vand.u32 %v512, 31
        %v515 = vsub.s32 32, %v514
        %v516 = vshrl.u32 683565275, %v515
        %v517 = vshll.u32 683565275, %v514
        %v518 = vshrl.u32 2475754826, %v515
        %v519 = vor.u32 %v517, %v518
        %v520 = vshll.u32 2475754826, %v514
        %v521 = vshrl.u32 2131351028, %v515
        %v522 = vor.u32 %v520, %v521
        %v523 = vshll.u32 2131351028, %v514
        %v524 = vshrl.u32 2102212464, %v515
        %v525 = vor.u32 %v523, %v524
        %v526 = vshll.u32 2102212464, %v514
        %v527 = vshrl.u32 920167782, %v515
        %v528 = vor.u32 %v526, %v527
        %v529 = vshll.u32 920167782, %v514
        %v530 = vshrl.u32 1326507024, %v515
        %v531 = vor.u32 %v529, %v530
        %vm532 = vcmp.lt.s32.totalorder %v513, 1
        %vm533 = vcmp.lt.s32.totalorder %v513, 2
        %vm534 = vcmp.lt.s32.totalorder %v513, 3
        %vm535 = vcmp.lt.s32.totalorder %v513, 4
        %v536 = vsel %vm532, %v516, %v519
        %v537 = vsel %vm535, %v525, 2102212464
        %v538 = vsel %vm534, %v522, %v537
        %v539 = vsel %vm533, %v536, %v538
        %v540 = vsel %vm532, %v519, %v522
        %v541 = vsel %vm535, %v528, 920167782
        %v542 = vsel %vm534, %v525, %v541
        %v543 = vsel %vm533, %v540, %v542
        %v544 = vsel %vm532, %v522, %v525
        %v545 = vsel %vm535, %v531, 1326507024
        %v546 = vsel %vm534, %v528, %v545
        %v547 = vsel %vm533, %v544, %v546
        %v548 = vshll.u32 %v508, 8
        %v549 = vmul.u32.u64.compose %v548, %v547
        %v550 = vextract.low.u32 %v549
        %v551 = vextract.high.u32 %v549
        %v552 = vmul.u32.u64.compose %v548, %v543
        %v553 = vextract.low.u32 %v552
        %v554 = vextract.high.u32 %v552
        %v555 = vmul.u32 %v548, %v539
        %v556 = vadd.s32 %v551, %v553
        %vm557 = vc.u32 %v551, %v553
        %v558 = vadd.s32 %v554, 1
        %v559 = vsel %vm557, %v558, %v554
        %v560 = vadd.s32 %v555, %v559
        %v561 = vadd.s32 %v560, 536870912
        %v562 = vshrl.u32 %v561, 30
        %v563 = vshll.u32 %v562, 30
        %v564 = vsub.s32 %v560, %v563
        %vm565 = vcmp.lt.s32.totalorder %v564, 0
        %v566 = vsub.s32 0, %v564
        %v567 = vsel %vm565, %v566, %v564
        %v568 = vclz %v567
        %v569 = vsub.s32 %v568, 2
        %vm570 = vcmp.gt.s32.totalorder 0, %v569
        %v571 = vsel %vm570, 0, %v569
        %v572 = vsub.s32 32, %v571
        %v573 = vshll.u32 %v564, %v571
        %v574 = vshrl.u32 %v556, %v572
        %v575 = vor.u32 %v573, %v574
        %v576 = vsub.s32 4294967266, %v571
        %v577 = vadd.s32 %v576, 127
        %v578 = vshll.u32 %v577, 23
        %v579 = vor.u32 4788187, %v578
        %v580 = vand.u32 2147483647, %v579
        %v582 = vcvt.s32.f32 %v575
        %v583 = vmul.f32 %v582, %v580
        %v584 = vxor.u32 %v583, 2147483648
        %v585 = vsel %vm502, %v584, %v583
        %v586 = vsub.s32 4, %v562
        %v587 = vsel %vm502, %v586, %v562
        %v588 = vsel %vm501, %v274, %v585
        %v589 = vsel %vm501, 0, %v587
        %v590 = vcosq.f32.pop %v588
        %v591 = vsinq.f32.pop %v588
        %vm592 = vweird.f32 %v274
        %v593 = vadd.s32 %v589, 3
        %v594 = vand.u32 %v593, 3
        %vm595 = vcmp.lt.s32.totalorder %v594, 2
        %vm596 = vcmp.eq.s32.totalorder %v594, 0
        %v597 = vxor.u32 %v591, 2147483648
        %v598 = vsel %vm596, %v590, %v597
        %vm599 = vcmp.eq.s32.totalorder %v594, 2
        %v600 = vxor.u32 %v590, 2147483648
        %v601 = vsel %vm599, %v600, %v591
        %v602 = vsel %vm595, %v598, %v601
        %v603 = vsel %vm592, nan, %v602
        %v604 = vand.u32 2147483647, %v275
        %vm605 = vcmp.le.f32.partialorder %v604, 0.7853982
        %vm606 = vcmp.lt.s32.totalorder %v275, 0
        %v607 = vand.u32 %v275, 2139095040
        %v608 = vshrl.u32 %v607, 23
        %v609 = vsub.s32 %v608, 127
        %v610 = vand.u32 2147483647, %v275
        %v611 = vand.u32 %v610, 8388607
        %v612 = vor.u32 %v611, 8388608
        %v613 = vsub.s32 0, %v612
        %v614 = vadd.s32 %v609, 1
        %vm615 = vcmp.gt.s32.totalorder %v614, 0
        %v616 = vsel %vm615, %v614, 0
        %v617 = vshrl.u32 %v616, 5
        %v618 = vand.u32 %v616, 31
        %v619 = vsub.s32 32, %v618
        %v620 = vshrl.u32 683565275, %v619
        %v621 = vshll.u32 683565275, %v618
        %v622 = vshrl.u32 2475754826, %v619
        %v623 = vor.u32 %v621, %v622
        %v624 = vshll.u32 2475754826, %v618
        %v625 = vshrl.u32 2131351028, %v619
        %v626 = vor.u32 %v624, %v625
        %v627 = vshll.u32 2131351028, %v618
        %v628 = vshrl.u32 2102212464, %v619
        %v629 = vor.u32 %v627, %v628
        %v630 = vshll.u32 2102212464, %v618
        %v631 = vshrl.u32 920167782, %v619
        %v632 = vor.u32 %v630, %v631
        %v633 = vshll.u32 920167782, %v618
        %v634 = vshrl.u32 1326507024, %v619
        %v635 = vor.u32 %v633, %v634
        %vm636 = vcmp.lt.s32.totalorder %v617, 1
        %vm637 = vcmp.lt.s32.totalorder %v617, 2
        %vm638 = vcmp.lt.s32.totalorder %v617, 3
        %vm639 = vcmp.lt.s32.totalorder %v617, 4
        %v640 = vsel %vm636, %v620, %v623
        %v641 = vsel %vm639, %v629, 2102212464
        %v642 = vsel %vm638, %v626, %v641
        %v643 = vsel %vm637, %v640, %v642
        %v644 = vsel %vm636, %v623, %v626
        %v645 = vsel %vm639, %v632, 920167782
        %v646 = vsel %vm638, %v629, %v645
        %v647 = vsel %vm637, %v644, %v646
        %v648 = vsel %vm636, %v626, %v629
        %v649 = vsel %vm639, %v635, 1326507024
        %v650 = vsel %vm638, %v632, %v649
        %v651 = vsel %vm637, %v648, %v650
        %v652 = vshll.u32 %v612, 8
        %v653 = vmul.u32.u64.compose %v652, %v651
        %v654 = vextract.low.u32 %v653
        %v655 = vextract.high.u32 %v653
        %v656 = vmul.u32.u64.compose %v652, %v647
        %v657 = vextract.low.u32 %v656
        %v658 = vextract.high.u32 %v656
        %v659 = vmul.u32 %v652, %v643
        %v660 = vadd.s32 %v655, %v657
        %vm661 = vc.u32 %v655, %v657
        %v662 = vadd.s32 %v658, 1
        %v663 = vsel %vm661, %v662, %v658
        %v664 = vadd.s32 %v659, %v663
        %v665 = vadd.s32 %v664, 536870912
        %v666 = vshrl.u32 %v665, 30
        %v667 = vshll.u32 %v666, 30
        %v668 = vsub.s32 %v664, %v667
        %vm669 = vcmp.lt.s32.totalorder %v668, 0
        %v670 = vsub.s32 0, %v668
        %v671 = vsel %vm669, %v670, %v668
        %v672 = vclz %v671
        %v673 = vsub.s32 %v672, 2
        %vm674 = vcmp.gt.s32.totalorder 0, %v673
        %v675 = vsel %vm674, 0, %v673
        %v676 = vsub.s32 32, %v675
        %v677 = vshll.u32 %v668, %v675
        %v678 = vshrl.u32 %v660, %v676
        %v679 = vor.u32 %v677, %v678
        %v680 = vsub.s32 4294967266, %v675
        %v681 = vadd.s32 %v680, 127
        %v682 = vshll.u32 %v681, 23
        %v683 = vor.u32 4788187, %v682
        %v684 = vand.u32 2147483647, %v683
        %v686 = vcvt.s32.f32 %v679
        %v687 = vmul.f32 %v686, %v684
        %v688 = vxor.u32 %v687, 2147483648
        %v689 = vsel %vm606, %v688, %v687
        %v690 = vsub.s32 4, %v666
        %v691 = vsel %vm606, %v690, %v666
        %v692 = vsel %vm605, %v275, %v689
        %v693 = vsel %vm605, 0, %v691
        %v694 = vcosq.f32.pop %v692
        %v695 = vsinq.f32.pop %v692
        %vm696 = vweird.f32 %v275
        %v697 = vadd.s32 %v693, 3
        %v698 = vand.u32 %v697, 3
        %vm699 = vcmp.lt.s32.totalorder %v698, 2
        %vm700 = vcmp.eq.s32.totalorder %v698, 0
        %v701 = vxor.u32 %v695, 2147483648
        %v702 = vsel %vm700, %v694, %v701
        %vm703 = vcmp.eq.s32.totalorder %v698, 2
        %v704 = vxor.u32 %v694, 2147483648
        %v705 = vsel %vm703, %v704, %v695
        %v706 = vsel %vm699, %v702, %v705
        %v707 = vsel %vm696, nan, %v706
        %v708 = vand.u32 2147483647, %v276
        %vm709 = vcmp.le.f32.partialorder %v708, 0.7853982
        %vm710 = vcmp.lt.s32.totalorder %v276, 0
        %v711 = vand.u32 %v276, 2139095040
        %v712 = vshrl.u32 %v711, 23
        %v713 = vsub.s32 %v712, 127
        %v714 = vand.u32 2147483647, %v276
        %v715 = vand.u32 %v714, 8388607
        %v716 = vor.u32 %v715, 8388608
        %v717 = vsub.s32 0, %v716
        %v718 = vadd.s32 %v713, 1
        %vm719 = vcmp.gt.s32.totalorder %v718, 0
        %v720 = vsel %vm719, %v718, 0
        %v721 = vshrl.u32 %v720, 5
        %v722 = vand.u32 %v720, 31
        %v723 = vsub.s32 32, %v722
        %v724 = vshrl.u32 683565275, %v723
        %v725 = vshll.u32 683565275, %v722
        %v726 = vshrl.u32 2475754826, %v723
        %v727 = vor.u32 %v725, %v726
        %v728 = vshll.u32 2475754826, %v722
        %v729 = vshrl.u32 2131351028, %v723
        %v730 = vor.u32 %v728, %v729
        %v731 = vshll.u32 2131351028, %v722
        %v732 = vshrl.u32 2102212464, %v723
        %v733 = vor.u32 %v731, %v732
        %v734 = vshll.u32 2102212464, %v722
        %v735 = vshrl.u32 920167782, %v723
        %v736 = vor.u32 %v734, %v735
        %v737 = vshll.u32 920167782, %v722
        %v738 = vshrl.u32 1326507024, %v723
        %v739 = vor.u32 %v737, %v738
        %vm740 = vcmp.lt.s32.totalorder %v721, 1
        %vm741 = vcmp.lt.s32.totalorder %v721, 2
        %vm742 = vcmp.lt.s32.totalorder %v721, 3
        %vm743 = vcmp.lt.s32.totalorder %v721, 4
        %v744 = vsel %vm740, %v724, %v727
        %v745 = vsel %vm743, %v733, 2102212464
        %v746 = vsel %vm742, %v730, %v745
        %v747 = vsel %vm741, %v744, %v746
        %v748 = vsel %vm740, %v727, %v730
        %v749 = vsel %vm743, %v736, 920167782
        %v750 = vsel %vm742, %v733, %v749
        %v751 = vsel %vm741, %v748, %v750
        %v752 = vsel %vm740, %v730, %v733
        %v753 = vsel %vm743, %v739, 1326507024
        %v754 = vsel %vm742, %v736, %v753
        %v755 = vsel %vm741, %v752, %v754
        %v756 = vshll.u32 %v716, 8
        %v757 = vmul.u32.u64.compose %v756, %v755
        %v758 = vextract.low.u32 %v757
        %v759 = vextract.high.u32 %v757
        %v760 = vmul.u32.u64.compose %v756, %v751
        %v761 = vextract.low.u32 %v760
        %v762 = vextract.high.u32 %v760
        %v763 = vmul.u32 %v756, %v747
        %v764 = vadd.s32 %v759, %v761
        %vm765 = vc.u32 %v759, %v761
        %v766 = vadd.s32 %v762, 1
        %v767 = vsel %vm765, %v766, %v762
        %v768 = vadd.s32 %v763, %v767
        %v769 = vadd.s32 %v768, 536870912
        %v770 = vshrl.u32 %v769, 30
        %v771 = vshll.u32 %v770, 30
        %v772 = vsub.s32 %v768, %v771
        %vm773 = vcmp.lt.s32.totalorder %v772, 0
        %v774 = vsub.s32 0, %v772
        %v775 = vsel %vm773, %v774, %v772
        %v776 = vclz %v775
        %v777 = vsub.s32 %v776, 2
        %vm778 = vcmp.gt.s32.totalorder 0, %v777
        %v779 = vsel %vm778, 0, %v777
        %v780 = vsub.s32 32, %v779
        %v781 = vshll.u32 %v772, %v779
        %v782 = vshrl.u32 %v764, %v780
        %v783 = vor.u32 %v781, %v782
        %v784 = vsub.s32 4294967266, %v779
        %v785 = vadd.s32 %v784, 127
        %v786 = vshll.u32 %v785, 23
        %v787 = vor.u32 4788187, %v786
        %v788 = vand.u32 2147483647, %v787
        %v790 = vcvt.s32.f32 %v783
        %v791 = vmul.f32 %v790, %v788
        %v792 = vxor.u32 %v791, 2147483648
        %v793 = vsel %vm710, %v792, %v791
        %v794 = vsub.s32 4, %v770
        %v795 = vsel %vm710, %v794, %v770
        %v796 = vsel %vm709, %v276, %v793
        %v797 = vsel %vm709, 0, %v795
        %v798 = vcosq.f32.pop %v796
        %v799 = vsinq.f32.pop %v796
        %vm800 = vweird.f32 %v276
        %v801 = vadd.s32 %v797, 3
        %v802 = vand.u32 %v801, 3
        %vm803 = vcmp.lt.s32.totalorder %v802, 2
        %vm804 = vcmp.eq.s32.totalorder %v802, 0
        %v805 = vxor.u32 %v799, 2147483648
        %v806 = vsel %vm804, %v798, %v805
        %vm807 = vcmp.eq.s32.totalorder %v802, 2
        %v808 = vxor.u32 %v798, 2147483648
        %v809 = vsel %vm807, %v808, %v799
        %v810 = vsel %vm803, %v806, %v809
        %v811 = vsel %vm800, nan, %v810
        %v812 = vand.u32 2147483647, %v277
        %vm813 = vcmp.le.f32.partialorder %v812, 0.7853982
        %vm814 = vcmp.lt.s32.totalorder %v277, 0
        %v815 = vand.u32 %v277, 2139095040
        %v816 = vshrl.u32 %v815, 23
        %v817 = vsub.s32 %v816, 127
        %v818 = vand.u32 2147483647, %v277
        %v819 = vand.u32 %v818, 8388607
        %v820 = vor.u32 %v819, 8388608
        %v821 = vsub.s32 0, %v820
        %v822 = vadd.s32 %v817, 1
        %vm823 = vcmp.gt.s32.totalorder %v822, 0
        %v824 = vsel %vm823, %v822, 0
        %v825 = vshrl.u32 %v824, 5
        %v826 = vand.u32 %v824, 31
        %v827 = vsub.s32 32, %v826
        %v828 = vshrl.u32 683565275, %v827
        %v829 = vshll.u32 683565275, %v826
        %v830 = vshrl.u32 2475754826, %v827
        %v831 = vor.u32 %v829, %v830
        %v832 = vshll.u32 2475754826, %v826
        %v833 = vshrl.u32 2131351028, %v827
        %v834 = vor.u32 %v832, %v833
        %v835 = vshll.u32 2131351028, %v826
        %v836 = vshrl.u32 2102212464, %v827
        %v837 = vor.u32 %v835, %v836
        %v838 = vshll.u32 2102212464, %v826
        %v839 = vshrl.u32 920167782, %v827
        %v840 = vor.u32 %v838, %v839
        %v841 = vshll.u32 920167782, %v826
        %v842 = vshrl.u32 1326507024, %v827
        %v843 = vor.u32 %v841, %v842
        %vm844 = vcmp.lt.s32.totalorder %v825, 1
        %vm845 = vcmp.lt.s32.totalorder %v825, 2
        %vm846 = vcmp.lt.s32.totalorder %v825, 3
        %vm847 = vcmp.lt.s32.totalorder %v825, 4
        %v848 = vsel %vm844, %v828, %v831
        %v849 = vsel %vm847, %v837, 2102212464
        %v850 = vsel %vm846, %v834, %v849
        %v851 = vsel %vm845, %v848, %v850
        %v852 = vsel %vm844, %v831, %v834
        %v853 = vsel %vm847, %v840, 920167782
        %v854 = vsel %vm846, %v837, %v853
        %v855 = vsel %vm845, %v852, %v854
        %v856 = vsel %vm844, %v834, %v837
        %v857 = vsel %vm847, %v843, 1326507024
        %v858 = vsel %vm846, %v840, %v857
        %v859 = vsel %vm845, %v856, %v858
        %v860 = vshll.u32 %v820, 8
        %v861 = vmul.u32.u64.compose %v860, %v859
        %v862 = vextract.low.u32 %v861
        %v863 = vextract.high.u32 %v861
        %v864 = vmul.u32.u64.compose %v860, %v855
        %v865 = vextract.low.u32 %v864
        %v866 = vextract.high.u32 %v864
        %v867 = vmul.u32 %v860, %v851
        %v868 = vadd.s32 %v863, %v865
        %vm869 = vc.u32 %v863, %v865
        %v870 = vadd.s32 %v866, 1
        %v871 = vsel %vm869, %v870, %v866
        %v872 = vadd.s32 %v867, %v871
        %v873 = vadd.s32 %v872, 536870912
        %v874 = vshrl.u32 %v873, 30
        %v875 = vshll.u32 %v874, 30
        %v876 = vsub.s32 %v872, %v875
        %vm877 = vcmp.lt.s32.totalorder %v876, 0
        %v878 = vsub.s32 0, %v876
        %v879 = vsel %vm877, %v878, %v876
        %v880 = vclz %v879
        %v881 = vsub.s32 %v880, 2
        %vm882 = vcmp.gt.s32.totalorder 0, %v881
        %v883 = vsel %vm882, 0, %v881
        %v884 = vsub.s32 32, %v883
        %v885 = vshll.u32 %v876, %v883
        %v886 = vshrl.u32 %v868, %v884
        %v887 = vor.u32 %v885, %v886
        %v888 = vsub.s32 4294967266, %v883
        %v889 = vadd.s32 %v888, 127
        %v890 = vshll.u32 %v889, 23
        %v891 = vor.u32 4788187, %v890
        %v892 = vand.u32 2147483647, %v891
        %v894 = vcvt.s32.f32 %v887
        %v895 = vmul.f32 %v894, %v892
        %v896 = vxor.u32 %v895, 2147483648
        %v897 = vsel %vm814, %v896, %v895
        %v898 = vsub.s32 4, %v874
        %v899 = vsel %vm814, %v898, %v874
        %v900 = vsel %vm813, %v277, %v897
        %v901 = vsel %vm813, 0, %v899
        %v902 = vcosq.f32.pop %v900
        %v903 = vsinq.f32.pop %v900
        %vm904 = vweird.f32 %v277
        %v905 = vadd.s32 %v901, 3
        %v906 = vand.u32 %v905, 3
        %vm907 = vcmp.lt.s32.totalorder %v906, 2
        %vm908 = vcmp.eq.s32.totalorder %v906, 0
        %v909 = vxor.u32 %v903, 2147483648
        %v910 = vsel %vm908, %v902, %v909
        %vm911 = vcmp.eq.s32.totalorder %v906, 2
        %v912 = vxor.u32 %v902, 2147483648
        %v913 = vsel %vm911, %v912, %v903
        %v914 = vsel %vm907, %v910, %v913
        %v915 = vsel %vm904, nan, %v914
        %v916 = vand.u32 2147483647, %v278
        %vm917 = vcmp.le.f32.partialorder %v916, 0.7853982
        %vm918 = vcmp.lt.s32.totalorder %v278, 0
        %v919 = vand.u32 %v278, 2139095040
        %v920 = vshrl.u32 %v919, 23
        %v921 = vsub.s32 %v920, 127
        %v922 = vand.u32 2147483647, %v278
        %v923 = vand.u32 %v922, 8388607
        %v924 = vor.u32 %v923, 8388608
        %v925 = vsub.s32 0, %v924
        %v926 = vadd.s32 %v921, 1
        %vm927 = vcmp.gt.s32.totalorder %v926, 0
        %v928 = vsel %vm927, %v926, 0
        %v929 = vshrl.u32 %v928, 5
        %v930 = vand.u32 %v928, 31
        %v931 = vsub.s32 32, %v930
        %v932 = vshrl.u32 683565275, %v931
        %v933 = vshll.u32 683565275, %v930
        %v934 = vshrl.u32 2475754826, %v931
        %v935 = vor.u32 %v933, %v934
        %v936 = vshll.u32 2475754826, %v930
        %v937 = vshrl.u32 2131351028, %v931
        %v938 = vor.u32 %v936, %v937
        %v939 = vshll.u32 2131351028, %v930
        %v940 = vshrl.u32 2102212464, %v931
        %v941 = vor.u32 %v939, %v940
        %v942 = vshll.u32 2102212464, %v930
        %v943 = vshrl.u32 920167782, %v931
        %v944 = vor.u32 %v942, %v943
        %v945 = vshll.u32 920167782, %v930
        %v946 = vshrl.u32 1326507024, %v931
        %v947 = vor.u32 %v945, %v946
        %vm948 = vcmp.lt.s32.totalorder %v929, 1
        %vm949 = vcmp.lt.s32.totalorder %v929, 2
        %vm950 = vcmp.lt.s32.totalorder %v929, 3
        %vm951 = vcmp.lt.s32.totalorder %v929, 4
        %v952 = vsel %vm948, %v932, %v935
        %v953 = vsel %vm951, %v941, 2102212464
        %v954 = vsel %vm950, %v938, %v953
        %v955 = vsel %vm949, %v952, %v954
        %v956 = vsel %vm948, %v935, %v938
        %v957 = vsel %vm951, %v944, 920167782
        %v958 = vsel %vm950, %v941, %v957
        %v959 = vsel %vm949, %v956, %v958
        %v960 = vsel %vm948, %v938, %v941
        %v961 = vsel %vm951, %v947, 1326507024
        %v962 = vsel %vm950, %v944, %v961
        %v963 = vsel %vm949, %v960, %v962
        %v964 = vshll.u32 %v924, 8
        %v965 = vmul.u32.u64.compose %v964, %v963
        %v966 = vextract.low.u32 %v965
        %v967 = vextract.high.u32 %v965
        %v968 = vmul.u32.u64.compose %v964, %v959
        %v969 = vextract.low.u32 %v968
        %v970 = vextract.high.u32 %v968
        %v971 = vmul.u32 %v964, %v955
        %v972 = vadd.s32 %v967, %v969
        %vm973 = vc.u32 %v967, %v969
        %v974 = vadd.s32 %v970, 1
        %v975 = vsel %vm973, %v974, %v970
        %v976 = vadd.s32 %v971, %v975
        %v977 = vadd.s32 %v976, 536870912
        %v978 = vshrl.u32 %v977, 30
        %v979 = vshll.u32 %v978, 30
        %v980 = vsub.s32 %v976, %v979
        %vm981 = vcmp.lt.s32.totalorder %v980, 0
        %v982 = vsub.s32 0, %v980
        %v983 = vsel %vm981, %v982, %v980
        %v984 = vclz %v983
        %v985 = vsub.s32 %v984, 2
        %vm986 = vcmp.gt.s32.totalorder 0, %v985
        %v987 = vsel %vm986, 0, %v985
        %v988 = vsub.s32 32, %v987
        %v989 = vshll.u32 %v980, %v987
        %v990 = vshrl.u32 %v972, %v988
        %v991 = vor.u32 %v989, %v990
        %v992 = vsub.s32 4294967266, %v987
        %v993 = vadd.s32 %v992, 127
        %v994 = vshll.u32 %v993, 23
        %v995 = vor.u32 4788187, %v994
        %v996 = vand.u32 2147483647, %v995
        %v998 = vcvt.s32.f32 %v991
        %v999 = vmul.f32 %v998, %v996
        %v1000 = vxor.u32 %v999, 2147483648
        %v1001 = vsel %vm918, %v1000, %v999
        %v1002 = vsub.s32 4, %v978
        %v1003 = vsel %vm918, %v1002, %v978
        %v1004 = vsel %vm917, %v278, %v1001
        %v1005 = vsel %vm917, 0, %v1003
        %v1006 = vcosq.f32.pop %v1004
        %v1007 = vsinq.f32.pop %v1004
        %vm1008 = vweird.f32 %v278
        %v1009 = vadd.s32 %v1005, 3
        %v1010 = vand.u32 %v1009, 3
        %vm1011 = vcmp.lt.s32.totalorder %v1010, 2
        %vm1012 = vcmp.eq.s32.totalorder %v1010, 0
        %v1013 = vxor.u32 %v1007, 2147483648
        %v1014 = vsel %vm1012, %v1006, %v1013
        %vm1015 = vcmp.eq.s32.totalorder %v1010, 2
        %v1016 = vxor.u32 %v1006, 2147483648
        %v1017 = vsel %vm1015, %v1016, %v1007
        %v1018 = vsel %vm1011, %v1014, %v1017
        %v1019 = vsel %vm1008, nan, %v1018
        %v1020 = vand.u32 2147483647, %v279
        %vm1021 = vcmp.le.f32.partialorder %v1020, 0.7853982
        %vm1022 = vcmp.lt.s32.totalorder %v279, 0
        %v1023 = vand.u32 %v279, 2139095040
        %v1024 = vshrl.u32 %v1023, 23
        %v1025 = vsub.s32 %v1024, 127
        %v1026 = vand.u32 2147483647, %v279
        %v1027 = vand.u32 %v1026, 8388607
        %v1028 = vor.u32 %v1027, 8388608
        %v1029 = vsub.s32 0, %v1028
        %v1030 = vadd.s32 %v1025, 1
        %vm1031 = vcmp.gt.s32.totalorder %v1030, 0
        %v1032 = vsel %vm1031, %v1030, 0
        %v1033 = vshrl.u32 %v1032, 5
        %v1034 = vand.u32 %v1032, 31
        %v1035 = vsub.s32 32, %v1034
        %v1036 = vshrl.u32 683565275, %v1035
        %v1037 = vshll.u32 683565275, %v1034
        %v1038 = vshrl.u32 2475754826, %v1035
        %v1039 = vor.u32 %v1037, %v1038
        %v1040 = vshll.u32 2475754826, %v1034
        %v1041 = vshrl.u32 2131351028, %v1035
        %v1042 = vor.u32 %v1040, %v1041
        %v1043 = vshll.u32 2131351028, %v1034
        %v1044 = vshrl.u32 2102212464, %v1035
        %v1045 = vor.u32 %v1043, %v1044
        %v1046 = vshll.u32 2102212464, %v1034
        %v1047 = vshrl.u32 920167782, %v1035
        %v1048 = vor.u32 %v1046, %v1047
        %v1049 = vshll.u32 920167782, %v1034
        %v1050 = vshrl.u32 1326507024, %v1035
        %v1051 = vor.u32 %v1049, %v1050
        %vm1052 = vcmp.lt.s32.totalorder %v1033, 1
        %vm1053 = vcmp.lt.s32.totalorder %v1033, 2
        %vm1054 = vcmp.lt.s32.totalorder %v1033, 3
        %vm1055 = vcmp.lt.s32.totalorder %v1033, 4
        %v1056 = vsel %vm1052, %v1036, %v1039
        %v1057 = vsel %vm1055, %v1045, 2102212464
        %v1058 = vsel %vm1054, %v1042, %v1057
        %v1059 = vsel %vm1053, %v1056, %v1058
        %v1060 = vsel %vm1052, %v1039, %v1042
        %v1061 = vsel %vm1055, %v1048, 920167782
        %v1062 = vsel %vm1054, %v1045, %v1061
        %v1063 = vsel %vm1053, %v1060, %v1062
        %v1064 = vsel %vm1052, %v1042, %v1045
        %v1065 = vsel %vm1055, %v1051, 1326507024
        %v1066 = vsel %vm1054, %v1048, %v1065
        %v1067 = vsel %vm1053, %v1064, %v1066
        %v1068 = vshll.u32 %v1028, 8
        %v1069 = vmul.u32.u64.compose %v1068, %v1067
        %v1070 = vextract.low.u32 %v1069
        %v1071 = vextract.high.u32 %v1069
        %v1072 = vmul.u32.u64.compose %v1068, %v1063
        %v1073 = vextract.low.u32 %v1072
        %v1074 = vextract.high.u32 %v1072
        %v1075 = vmul.u32 %v1068, %v1059
        %v1076 = vadd.s32 %v1071, %v1073
        %vm1077 = vc.u32 %v1071, %v1073
        %v1078 = vadd.s32 %v1074, 1
        %v1079 = vsel %vm1077, %v1078, %v1074
        %v1080 = vadd.s32 %v1075, %v1079
        %v1081 = vadd.s32 %v1080, 536870912
        %v1082 = vshrl.u32 %v1081, 30
        %v1083 = vshll.u32 %v1082, 30
        %v1084 = vsub.s32 %v1080, %v1083
        %vm1085 = vcmp.lt.s32.totalorder %v1084, 0
        %v1086 = vsub.s32 0, %v1084
        %v1087 = vsel %vm1085, %v1086, %v1084
        %v1088 = vclz %v1087
        %v1089 = vsub.s32 %v1088, 2
        %vm1090 = vcmp.gt.s32.totalorder 0, %v1089
        %v1091 = vsel %vm1090, 0, %v1089
        %v1092 = vsub.s32 32, %v1091
        %v1093 = vshll.u32 %v1084, %v1091
        %v1094 = vshrl.u32 %v1076, %v1092
        %v1095 = vor.u32 %v1093, %v1094
        %v1096 = vsub.s32 4294967266, %v1091
        %v1097 = vadd.s32 %v1096, 127
        %v1098 = vshll.u32 %v1097, 23
        %v1099 = vor.u32 4788187, %v1098
        %v1100 = vand.u32 2147483647, %v1099
        %v1102 = vcvt.s32.f32 %v1095
        %v1103 = vmul.f32 %v1102, %v1100
        %v1104 = vxor.u32 %v1103, 2147483648
        %v1105 = vsel %vm1022, %v1104, %v1103
        %v1106 = vsub.s32 4, %v1082
        %v1107 = vsel %vm1022, %v1106, %v1082
        %v1108 = vsel %vm1021, %v279, %v1105
        %v1109 = vsel %vm1021, 0, %v1107
        %v1110 = vcosq.f32.pop %v1108
        %v1111 = vsinq.f32.pop %v1108
        %vm1112 = vweird.f32 %v279
        %v1113 = vadd.s32 %v1109, 3
        %v1114 = vand.u32 %v1113, 3
        %vm1115 = vcmp.lt.s32.totalorder %v1114, 2
        %vm1116 = vcmp.eq.s32.totalorder %v1114, 0
        %v1117 = vxor.u32 %v1111, 2147483648
        %v1118 = vsel %vm1116, %v1110, %v1117
        %vm1119 = vcmp.eq.s32.totalorder %v1114, 2
        %v1120 = vxor.u32 %v1110, 2147483648
        %v1121 = vsel %vm1119, %v1120, %v1111
        %v1122 = vsel %vm1115, %v1118, %v1121
        %v1123 = vsel %vm1112, nan, %v1122
        %v1124 = vand.u32 2147483647, %v280
        %vm1125 = vcmp.le.f32.partialorder %v1124, 0.7853982
        %vm1126 = vcmp.lt.s32.totalorder %v280, 0
        %v1127 = vand.u32 %v280, 2139095040
        %v1128 = vshrl.u32 %v1127, 23
        %v1129 = vsub.s32 %v1128, 127
        %v1130 = vand.u32 2147483647, %v280
        %v1131 = vand.u32 %v1130, 8388607
        %v1132 = vor.u32 %v1131, 8388608
        %v1133 = vsub.s32 0, %v1132
        %v1134 = vadd.s32 %v1129, 1
        %vm1135 = vcmp.gt.s32.totalorder %v1134, 0
        %v1136 = vsel %vm1135, %v1134, 0
        %v1137 = vshrl.u32 %v1136, 5
        %v1138 = vand.u32 %v1136, 31
        %v1139 = vsub.s32 32, %v1138
        %v1140 = vshrl.u32 683565275, %v1139
        %v1141 = vshll.u32 683565275, %v1138
        %v1142 = vshrl.u32 2475754826, %v1139
        %v1143 = vor.u32 %v1141, %v1142
        %v1144 = vshll.u32 2475754826, %v1138
        %v1145 = vshrl.u32 2131351028, %v1139
        %v1146 = vor.u32 %v1144, %v1145
        %v1147 = vshll.u32 2131351028, %v1138
        %v1148 = vshrl.u32 2102212464, %v1139
        %v1149 = vor.u32 %v1147, %v1148
        %v1150 = vshll.u32 2102212464, %v1138
        %v1151 = vshrl.u32 920167782, %v1139
        %v1152 = vor.u32 %v1150, %v1151
        %v1153 = vshll.u32 920167782, %v1138
        %v1154 = vshrl.u32 1326507024, %v1139
        %v1155 = vor.u32 %v1153, %v1154
        %vm1156 = vcmp.lt.s32.totalorder %v1137, 1
        %vm1157 = vcmp.lt.s32.totalorder %v1137, 2
        %vm1158 = vcmp.lt.s32.totalorder %v1137, 3
        %vm1159 = vcmp.lt.s32.totalorder %v1137, 4
        %v1160 = vsel %vm1156, %v1140, %v1143
        %v1161 = vsel %vm1159, %v1149, 2102212464
        %v1162 = vsel %vm1158, %v1146, %v1161
        %v1163 = vsel %vm1157, %v1160, %v1162
        %v1164 = vsel %vm1156, %v1143, %v1146
        %v1165 = vsel %vm1159, %v1152, 920167782
        %v1166 = vsel %vm1158, %v1149, %v1165
        %v1167 = vsel %vm1157, %v1164, %v1166
        %v1168 = vsel %vm1156, %v1146, %v1149
        %v1169 = vsel %vm1159, %v1155, 1326507024
        %v1170 = vsel %vm1158, %v1152, %v1169
        %v1171 = vsel %vm1157, %v1168, %v1170
        %v1172 = vshll.u32 %v1132, 8
        %v1173 = vmul.u32.u64.compose %v1172, %v1171
        %v1174 = vextract.low.u32 %v1173
        %v1175 = vextract.high.u32 %v1173
        %v1176 = vmul.u32.u64.compose %v1172, %v1167
        %v1177 = vextract.low.u32 %v1176
        %v1178 = vextract.high.u32 %v1176
        %v1179 = vmul.u32 %v1172, %v1163
        %v1180 = vadd.s32 %v1175, %v1177
        %vm1181 = vc.u32 %v1175, %v1177
        %v1182 = vadd.s32 %v1178, 1
        %v1183 = vsel %vm1181, %v1182, %v1178
        %v1184 = vadd.s32 %v1179, %v1183
        %v1185 = vadd.s32 %v1184, 536870912
        %v1186 = vshrl.u32 %v1185, 30
        %v1187 = vshll.u32 %v1186, 30
        %v1188 = vsub.s32 %v1184, %v1187
        %vm1189 = vcmp.lt.s32.totalorder %v1188, 0
        %v1190 = vsub.s32 0, %v1188
        %v1191 = vsel %vm1189, %v1190, %v1188
        %v1192 = vclz %v1191
        %v1193 = vsub.s32 %v1192, 2
        %vm1194 = vcmp.gt.s32.totalorder 0, %v1193
        %v1195 = vsel %vm1194, 0, %v1193
        %v1196 = vsub.s32 32, %v1195
        %v1197 = vshll.u32 %v1188, %v1195
        %v1198 = vshrl.u32 %v1180, %v1196
        %v1199 = vor.u32 %v1197, %v1198
        %v1200 = vsub.s32 4294967266, %v1195
        %v1201 = vadd.s32 %v1200, 127
        %v1202 = vshll.u32 %v1201, 23
        %v1203 = vor.u32 4788187, %v1202
        %v1204 = vand.u32 2147483647, %v1203
        %v1206 = vcvt.s32.f32 %v1199
        %v1207 = vmul.f32 %v1206, %v1204
        %v1208 = vxor.u32 %v1207, 2147483648
        %v1209 = vsel %vm1126, %v1208, %v1207
        %v1210 = vsub.s32 4, %v1186
        %v1211 = vsel %vm1126, %v1210, %v1186
        %v1212 = vsel %vm1125, %v280, %v1209
        %v1213 = vsel %vm1125, 0, %v1211
        %v1214 = vcosq.f32.pop %v1212
        %v1215 = vsinq.f32.pop %v1212
        %vm1216 = vweird.f32 %v280
        %v1217 = vadd.s32 %v1213, 3
        %v1218 = vand.u32 %v1217, 3
        %vm1219 = vcmp.lt.s32.totalorder %v1218, 2
        %vm1220 = vcmp.eq.s32.totalorder %v1218, 0
        %v1221 = vxor.u32 %v1215, 2147483648
        %v1222 = vsel %vm1220, %v1214, %v1221
        %vm1223 = vcmp.eq.s32.totalorder %v1218, 2
        %v1224 = vxor.u32 %v1214, 2147483648
        %v1225 = vsel %vm1223, %v1224, %v1215
        %v1226 = vsel %vm1219, %v1222, %v1225
        %v1227 = vsel %vm1216, nan, %v1226
        %v1228 = vand.u32 2147483647, %v281
        %vm1229 = vcmp.le.f32.partialorder %v1228, 0.7853982
        %vm1230 = vcmp.lt.s32.totalorder %v281, 0
        %v1231 = vand.u32 %v281, 2139095040
        %v1232 = vshrl.u32 %v1231, 23
        %v1233 = vsub.s32 %v1232, 127
        %v1234 = vand.u32 2147483647, %v281
        %v1235 = vand.u32 %v1234, 8388607
        %v1236 = vor.u32 %v1235, 8388608
        %v1237 = vsub.s32 0, %v1236
        %v1238 = vadd.s32 %v1233, 1
        %vm1239 = vcmp.gt.s32.totalorder %v1238, 0
        %v1240 = vsel %vm1239, %v1238, 0
        %v1241 = vshrl.u32 %v1240, 5
        %v1242 = vand.u32 %v1240, 31
        %v1243 = vsub.s32 32, %v1242
        %v1244 = vshrl.u32 683565275, %v1243
        %v1245 = vshll.u32 683565275, %v1242
        %v1246 = vshrl.u32 2475754826, %v1243
        %v1247 = vor.u32 %v1245, %v1246
        %v1248 = vshll.u32 2475754826, %v1242
        %v1249 = vshrl.u32 2131351028, %v1243
        %v1250 = vor.u32 %v1248, %v1249
        %v1251 = vshll.u32 2131351028, %v1242
        %v1252 = vshrl.u32 2102212464, %v1243
        %v1253 = vor.u32 %v1251, %v1252
        %v1254 = vshll.u32 2102212464, %v1242
        %v1255 = vshrl.u32 920167782, %v1243
        %v1256 = vor.u32 %v1254, %v1255
        %v1257 = vshll.u32 920167782, %v1242
        %v1258 = vshrl.u32 1326507024, %v1243
        %v1259 = vor.u32 %v1257, %v1258
        %vm1260 = vcmp.lt.s32.totalorder %v1241, 1
        %vm1261 = vcmp.lt.s32.totalorder %v1241, 2
        %vm1262 = vcmp.lt.s32.totalorder %v1241, 3
        %vm1263 = vcmp.lt.s32.totalorder %v1241, 4
        %v1264 = vsel %vm1260, %v1244, %v1247
        %v1265 = vsel %vm1263, %v1253, 2102212464
        %v1266 = vsel %vm1262, %v1250, %v1265
        %v1267 = vsel %vm1261, %v1264, %v1266
        %v1268 = vsel %vm1260, %v1247, %v1250
        %v1269 = vsel %vm1263, %v1256, 920167782
        %v1270 = vsel %vm1262, %v1253, %v1269
        %v1271 = vsel %vm1261, %v1268, %v1270
        %v1272 = vsel %vm1260, %v1250, %v1253
        %v1273 = vsel %vm1263, %v1259, 1326507024
        %v1274 = vsel %vm1262, %v1256, %v1273
        %v1275 = vsel %vm1261, %v1272, %v1274
        %v1276 = vshll.u32 %v1236, 8
        %v1277 = vmul.u32.u64.compose %v1276, %v1275
        %v1278 = vextract.low.u32 %v1277
        %v1279 = vextract.high.u32 %v1277
        %v1280 = vmul.u32.u64.compose %v1276, %v1271
        %v1281 = vextract.low.u32 %v1280
        %v1282 = vextract.high.u32 %v1280
        %v1283 = vmul.u32 %v1276, %v1267
        %v1284 = vadd.s32 %v1279, %v1281
        %vm1285 = vc.u32 %v1279, %v1281
        %v1286 = vadd.s32 %v1282, 1
        %v1287 = vsel %vm1285, %v1286, %v1282
        %v1288 = vadd.s32 %v1283, %v1287
        %v1289 = vadd.s32 %v1288, 536870912
        %v1290 = vshrl.u32 %v1289, 30
        %v1291 = vshll.u32 %v1290, 30
        %v1292 = vsub.s32 %v1288, %v1291
        %vm1293 = vcmp.lt.s32.totalorder %v1292, 0
        %v1294 = vsub.s32 0, %v1292
        %v1295 = vsel %vm1293, %v1294, %v1292
        %v1296 = vclz %v1295
        %v1297 = vsub.s32 %v1296, 2
        %vm1298 = vcmp.gt.s32.totalorder 0, %v1297
        %v1299 = vsel %vm1298, 0, %v1297
        %v1300 = vsub.s32 32, %v1299
        %v1301 = vshll.u32 %v1292, %v1299
        %v1302 = vshrl.u32 %v1284, %v1300
        %v1303 = vor.u32 %v1301, %v1302
        %v1304 = vsub.s32 4294967266, %v1299
        %v1305 = vadd.s32 %v1304, 127
        %v1306 = vshll.u32 %v1305, 23
        %v1307 = vor.u32 4788187, %v1306
        %v1308 = vand.u32 2147483647, %v1307
        %v1310 = vcvt.s32.f32 %v1303
        %v1311 = vmul.f32 %v1310, %v1308
        %v1312 = vxor.u32 %v1311, 2147483648
        %v1313 = vsel %vm1230, %v1312, %v1311
        %v1314 = vsub.s32 4, %v1290
        %v1315 = vsel %vm1230, %v1314, %v1290
        %v1316 = vsel %vm1229, %v281, %v1313
        %v1317 = vsel %vm1229, 0, %v1315
        %v1318 = vcosq.f32.pop %v1316
        %v1319 = vsinq.f32.pop %v1316
        %vm1320 = vweird.f32 %v281
        %v1321 = vadd.s32 %v1317, 3
        %v1322 = vand.u32 %v1321, 3
        %vm1323 = vcmp.lt.s32.totalorder %v1322, 2
        %vm1324 = vcmp.eq.s32.totalorder %v1322, 0
        %v1325 = vxor.u32 %v1319, 2147483648
        %v1326 = vsel %vm1324, %v1318, %v1325
        %vm1327 = vcmp.eq.s32.totalorder %v1322, 2
        %v1328 = vxor.u32 %v1318, 2147483648
        %v1329 = vsel %vm1327, %v1328, %v1319
        %v1330 = vsel %vm1323, %v1326, %v1329
        %v1331 = vsel %vm1320, nan, %v1330
        %v1332 = vand.u32 2147483647, %v282
        %vm1333 = vcmp.le.f32.partialorder %v1332, 0.7853982
        %vm1334 = vcmp.lt.s32.totalorder %v282, 0
        %v1335 = vand.u32 %v282, 2139095040
        %v1336 = vshrl.u32 %v1335, 23
        %v1337 = vsub.s32 %v1336, 127
        %v1338 = vand.u32 2147483647, %v282
        %v1339 = vand.u32 %v1338, 8388607
        %v1340 = vor.u32 %v1339, 8388608
        %v1341 = vsub.s32 0, %v1340
        %v1342 = vadd.s32 %v1337, 1
        %vm1343 = vcmp.gt.s32.totalorder %v1342, 0
        %v1344 = vsel %vm1343, %v1342, 0
        %v1345 = vshrl.u32 %v1344, 5
        %v1346 = vand.u32 %v1344, 31
        %v1347 = vsub.s32 32, %v1346
        %v1348 = vshrl.u32 683565275, %v1347
        %v1349 = vshll.u32 683565275, %v1346
        %v1350 = vshrl.u32 2475754826, %v1347
        %v1351 = vor.u32 %v1349, %v1350
        %v1352 = vshll.u32 2475754826, %v1346
        %v1353 = vshrl.u32 2131351028, %v1347
        %v1354 = vor.u32 %v1352, %v1353
        %v1355 = vshll.u32 2131351028, %v1346
        %v1356 = vshrl.u32 2102212464, %v1347
        %v1357 = vor.u32 %v1355, %v1356
        %v1358 = vshll.u32 2102212464, %v1346
        %v1359 = vshrl.u32 920167782, %v1347
        %v1360 = vor.u32 %v1358, %v1359
        %v1361 = vshll.u32 920167782, %v1346
        %v1362 = vshrl.u32 1326507024, %v1347
        %v1363 = vor.u32 %v1361, %v1362
        %vm1364 = vcmp.lt.s32.totalorder %v1345, 1
        %vm1365 = vcmp.lt.s32.totalorder %v1345, 2
        %vm1366 = vcmp.lt.s32.totalorder %v1345, 3
        %vm1367 = vcmp.lt.s32.totalorder %v1345, 4
        %v1368 = vsel %vm1364, %v1348, %v1351
        %v1369 = vsel %vm1367, %v1357, 2102212464
        %v1370 = vsel %vm1366, %v1354, %v1369
        %v1371 = vsel %vm1365, %v1368, %v1370
        %v1372 = vsel %vm1364, %v1351, %v1354
        %v1373 = vsel %vm1367, %v1360, 920167782
        %v1374 = vsel %vm1366, %v1357, %v1373
        %v1375 = vsel %vm1365, %v1372, %v1374
        %v1376 = vsel %vm1364, %v1354, %v1357
        %v1377 = vsel %vm1367, %v1363, 1326507024
        %v1378 = vsel %vm1366, %v1360, %v1377
        %v1379 = vsel %vm1365, %v1376, %v1378
        %v1380 = vshll.u32 %v1340, 8
        %v1381 = vmul.u32.u64.compose %v1380, %v1379
        %v1382 = vextract.low.u32 %v1381
        %v1383 = vextract.high.u32 %v1381
        %v1384 = vmul.u32.u64.compose %v1380, %v1375
        %v1385 = vextract.low.u32 %v1384
        %v1386 = vextract.high.u32 %v1384
        %v1387 = vmul.u32 %v1380, %v1371
        %v1388 = vadd.s32 %v1383, %v1385
        %vm1389 = vc.u32 %v1383, %v1385
        %v1390 = vadd.s32 %v1386, 1
        %v1391 = vsel %vm1389, %v1390, %v1386
        %v1392 = vadd.s32 %v1387, %v1391
        %v1393 = vadd.s32 %v1392, 536870912
        %v1394 = vshrl.u32 %v1393, 30
        %v1395 = vshll.u32 %v1394, 30
        %v1396 = vsub.s32 %v1392, %v1395
        %vm1397 = vcmp.lt.s32.totalorder %v1396, 0
        %v1398 = vsub.s32 0, %v1396
        %v1399 = vsel %vm1397, %v1398, %v1396
        %v1400 = vclz %v1399
        %v1401 = vsub.s32 %v1400, 2
        %vm1402 = vcmp.gt.s32.totalorder 0, %v1401
        %v1403 = vsel %vm1402, 0, %v1401
        %v1404 = vsub.s32 32, %v1403
        %v1405 = vshll.u32 %v1396, %v1403
        %v1406 = vshrl.u32 %v1388, %v1404
        %v1407 = vor.u32 %v1405, %v1406
        %v1408 = vsub.s32 4294967266, %v1403
        %v1409 = vadd.s32 %v1408, 127
        %v1410 = vshll.u32 %v1409, 23
        %v1411 = vor.u32 4788187, %v1410
        %v1412 = vand.u32 2147483647, %v1411
        %v1414 = vcvt.s32.f32 %v1407
        %v1415 = vmul.f32 %v1414, %v1412
        %v1416 = vxor.u32 %v1415, 2147483648
        %v1417 = vsel %vm1334, %v1416, %v1415
        %v1418 = vsub.s32 4, %v1394
        %v1419 = vsel %vm1334, %v1418, %v1394
        %v1420 = vsel %vm1333, %v282, %v1417
        %v1421 = vsel %vm1333, 0, %v1419
        %v1422 = vcosq.f32.pop %v1420
        %v1423 = vsinq.f32.pop %v1420
        %vm1424 = vweird.f32 %v282
        %v1425 = vadd.s32 %v1421, 3
        %v1426 = vand.u32 %v1425, 3
        %vm1427 = vcmp.lt.s32.totalorder %v1426, 2
        %vm1428 = vcmp.eq.s32.totalorder %v1426, 0
        %v1429 = vxor.u32 %v1423, 2147483648
        %v1430 = vsel %vm1428, %v1422, %v1429
        %vm1431 = vcmp.eq.s32.totalorder %v1426, 2
        %v1432 = vxor.u32 %v1422, 2147483648
        %v1433 = vsel %vm1431, %v1432, %v1423
        %v1434 = vsel %vm1427, %v1430, %v1433
        %v1435 = vsel %vm1424, nan, %v1434
        %v1436 = vand.u32 2147483647, %v283
        %vm1437 = vcmp.le.f32.partialorder %v1436, 0.7853982
        %vm1438 = vcmp.lt.s32.totalorder %v283, 0
        %v1439 = vand.u32 %v283, 2139095040
        %v1440 = vshrl.u32 %v1439, 23
        %v1441 = vsub.s32 %v1440, 127
        %v1442 = vand.u32 2147483647, %v283
        %v1443 = vand.u32 %v1442, 8388607
        %v1444 = vor.u32 %v1443, 8388608
        %v1445 = vsub.s32 0, %v1444
        %v1446 = vadd.s32 %v1441, 1
        %vm1447 = vcmp.gt.s32.totalorder %v1446, 0
        %v1448 = vsel %vm1447, %v1446, 0
        %v1449 = vshrl.u32 %v1448, 5
        %v1450 = vand.u32 %v1448, 31
        %v1451 = vsub.s32 32, %v1450
        %v1452 = vshrl.u32 683565275, %v1451
        %v1453 = vshll.u32 683565275, %v1450
        %v1454 = vshrl.u32 2475754826, %v1451
        %v1455 = vor.u32 %v1453, %v1454
        %v1456 = vshll.u32 2475754826, %v1450
        %v1457 = vshrl.u32 2131351028, %v1451
        %v1458 = vor.u32 %v1456, %v1457
        %v1459 = vshll.u32 2131351028, %v1450
        %v1460 = vshrl.u32 2102212464, %v1451
        %v1461 = vor.u32 %v1459, %v1460
        %v1462 = vshll.u32 2102212464, %v1450
        %v1463 = vshrl.u32 920167782, %v1451
        %v1464 = vor.u32 %v1462, %v1463
        %v1465 = vshll.u32 920167782, %v1450
        %v1466 = vshrl.u32 1326507024, %v1451
        %v1467 = vor.u32 %v1465, %v1466
        %vm1468 = vcmp.lt.s32.totalorder %v1449, 1
        %vm1469 = vcmp.lt.s32.totalorder %v1449, 2
        %vm1470 = vcmp.lt.s32.totalorder %v1449, 3
        %vm1471 = vcmp.lt.s32.totalorder %v1449, 4
        %v1472 = vsel %vm1468, %v1452, %v1455
        %v1473 = vsel %vm1471, %v1461, 2102212464
        %v1474 = vsel %vm1470, %v1458, %v1473
        %v1475 = vsel %vm1469, %v1472, %v1474
        %v1476 = vsel %vm1468, %v1455, %v1458
        %v1477 = vsel %vm1471, %v1464, 920167782
        %v1478 = vsel %vm1470, %v1461, %v1477
        %v1479 = vsel %vm1469, %v1476, %v1478
        %v1480 = vsel %vm1468, %v1458, %v1461
        %v1481 = vsel %vm1471, %v1467, 1326507024
        %v1482 = vsel %vm1470, %v1464, %v1481
        %v1483 = vsel %vm1469, %v1480, %v1482
        %v1484 = vshll.u32 %v1444, 8
        %v1485 = vmul.u32.u64.compose %v1484, %v1483
        %v1486 = vextract.low.u32 %v1485
        %v1487 = vextract.high.u32 %v1485
        %v1488 = vmul.u32.u64.compose %v1484, %v1479
        %v1489 = vextract.low.u32 %v1488
        %v1490 = vextract.high.u32 %v1488
        %v1491 = vmul.u32 %v1484, %v1475
        %v1492 = vadd.s32 %v1487, %v1489
        %vm1493 = vc.u32 %v1487, %v1489
        %v1494 = vadd.s32 %v1490, 1
        %v1495 = vsel %vm1493, %v1494, %v1490
        %v1496 = vadd.s32 %v1491, %v1495
        %v1497 = vadd.s32 %v1496, 536870912
        %v1498 = vshrl.u32 %v1497, 30
        %v1499 = vshll.u32 %v1498, 30
        %v1500 = vsub.s32 %v1496, %v1499
        %vm1501 = vcmp.lt.s32.totalorder %v1500, 0
        %v1502 = vsub.s32 0, %v1500
        %v1503 = vsel %vm1501, %v1502, %v1500
        %v1504 = vclz %v1503
        %v1505 = vsub.s32 %v1504, 2
        %vm1506 = vcmp.gt.s32.totalorder 0, %v1505
        %v1507 = vsel %vm1506, 0, %v1505
        %v1508 = vsub.s32 32, %v1507
        %v1509 = vshll.u32 %v1500, %v1507
        %v1510 = vshrl.u32 %v1492, %v1508
        %v1511 = vor.u32 %v1509, %v1510
        %v1512 = vsub.s32 4294967266, %v1507
        %v1513 = vadd.s32 %v1512, 127
        %v1514 = vshll.u32 %v1513, 23
        %v1515 = vor.u32 4788187, %v1514
        %v1516 = vand.u32 2147483647, %v1515
        %v1518 = vcvt.s32.f32 %v1511
        %v1519 = vmul.f32 %v1518, %v1516
        %v1520 = vxor.u32 %v1519, 2147483648
        %v1521 = vsel %vm1438, %v1520, %v1519
        %v1522 = vsub.s32 4, %v1498
        %v1523 = vsel %vm1438, %v1522, %v1498
        %v1524 = vsel %vm1437, %v283, %v1521
        %v1525 = vsel %vm1437, 0, %v1523
        %v1526 = vcosq.f32.pop %v1524
        %v1527 = vsinq.f32.pop %v1524
        %vm1528 = vweird.f32 %v283
        %v1529 = vadd.s32 %v1525, 3
        %v1530 = vand.u32 %v1529, 3
        %vm1531 = vcmp.lt.s32.totalorder %v1530, 2
        %vm1532 = vcmp.eq.s32.totalorder %v1530, 0
        %v1533 = vxor.u32 %v1527, 2147483648
        %v1534 = vsel %vm1532, %v1526, %v1533
        %vm1535 = vcmp.eq.s32.totalorder %v1530, 2
        %v1536 = vxor.u32 %v1526, 2147483648
        %v1537 = vsel %vm1535, %v1536, %v1527
        %v1538 = vsel %vm1531, %v1534, %v1537
        %v1539 = vsel %vm1528, nan, %v1538
        %v1540 = vand.u32 2147483647, %v284
        %vm1541 = vcmp.le.f32.partialorder %v1540, 0.7853982
        %vm1542 = vcmp.lt.s32.totalorder %v284, 0
        %v1543 = vand.u32 %v284, 2139095040
        %v1544 = vshrl.u32 %v1543, 23
        %v1545 = vsub.s32 %v1544, 127
        %v1546 = vand.u32 2147483647, %v284
        %v1547 = vand.u32 %v1546, 8388607
        %v1548 = vor.u32 %v1547, 8388608
        %v1549 = vsub.s32 0, %v1548
        %v1550 = vadd.s32 %v1545, 1
        %vm1551 = vcmp.gt.s32.totalorder %v1550, 0
        %v1552 = vsel %vm1551, %v1550, 0
        %v1553 = vshrl.u32 %v1552, 5
        %v1554 = vand.u32 %v1552, 31
        %v1555 = vsub.s32 32, %v1554
        %v1556 = vshrl.u32 683565275, %v1555
        %v1557 = vshll.u32 683565275, %v1554
        %v1558 = vshrl.u32 2475754826, %v1555
        %v1559 = vor.u32 %v1557, %v1558
        %v1560 = vshll.u32 2475754826, %v1554
        %v1561 = vshrl.u32 2131351028, %v1555
        %v1562 = vor.u32 %v1560, %v1561
        %v1563 = vshll.u32 2131351028, %v1554
        %v1564 = vshrl.u32 2102212464, %v1555
        %v1565 = vor.u32 %v1563, %v1564
        %v1566 = vshll.u32 2102212464, %v1554
        %v1567 = vshrl.u32 920167782, %v1555
        %v1568 = vor.u32 %v1566, %v1567
        %v1569 = vshll.u32 920167782, %v1554
        %v1570 = vshrl.u32 1326507024, %v1555
        %v1571 = vor.u32 %v1569, %v1570
        %vm1572 = vcmp.lt.s32.totalorder %v1553, 1
        %vm1573 = vcmp.lt.s32.totalorder %v1553, 2
        %vm1574 = vcmp.lt.s32.totalorder %v1553, 3
        %vm1575 = vcmp.lt.s32.totalorder %v1553, 4
        %v1576 = vsel %vm1572, %v1556, %v1559
        %v1577 = vsel %vm1575, %v1565, 2102212464
        %v1578 = vsel %vm1574, %v1562, %v1577
        %v1579 = vsel %vm1573, %v1576, %v1578
        %v1580 = vsel %vm1572, %v1559, %v1562
        %v1581 = vsel %vm1575, %v1568, 920167782
        %v1582 = vsel %vm1574, %v1565, %v1581
        %v1583 = vsel %vm1573, %v1580, %v1582
        %v1584 = vsel %vm1572, %v1562, %v1565
        %v1585 = vsel %vm1575, %v1571, 1326507024
        %v1586 = vsel %vm1574, %v1568, %v1585
        %v1587 = vsel %vm1573, %v1584, %v1586
        %v1588 = vshll.u32 %v1548, 8
        %v1589 = vmul.u32.u64.compose %v1588, %v1587
        %v1590 = vextract.low.u32 %v1589
        %v1591 = vextract.high.u32 %v1589
        %v1592 = vmul.u32.u64.compose %v1588, %v1583
        %v1593 = vextract.low.u32 %v1592
        %v1594 = vextract.high.u32 %v1592
        %v1595 = vmul.u32 %v1588, %v1579
        %v1596 = vadd.s32 %v1591, %v1593
        %vm1597 = vc.u32 %v1591, %v1593
        %v1598 = vadd.s32 %v1594, 1
        %v1599 = vsel %vm1597, %v1598, %v1594
        %v1600 = vadd.s32 %v1595, %v1599
        %v1601 = vadd.s32 %v1600, 536870912
        %v1602 = vshrl.u32 %v1601, 30
        %v1603 = vshll.u32 %v1602, 30
        %v1604 = vsub.s32 %v1600, %v1603
        %vm1605 = vcmp.lt.s32.totalorder %v1604, 0
        %v1606 = vsub.s32 0, %v1604
        %v1607 = vsel %vm1605, %v1606, %v1604
        %v1608 = vclz %v1607
        %v1609 = vsub.s32 %v1608, 2
        %vm1610 = vcmp.gt.s32.totalorder 0, %v1609
        %v1611 = vsel %vm1610, 0, %v1609
        %v1612 = vsub.s32 32, %v1611
        %v1613 = vshll.u32 %v1604, %v1611
        %v1614 = vshrl.u32 %v1596, %v1612
        %v1615 = vor.u32 %v1613, %v1614
        %v1616 = vsub.s32 4294967266, %v1611
        %v1617 = vadd.s32 %v1616, 127
        %v1618 = vshll.u32 %v1617, 23
        %v1619 = vor.u32 4788187, %v1618
        %v1620 = vand.u32 2147483647, %v1619
        %v1622 = vcvt.s32.f32 %v1615
        %v1623 = vmul.f32 %v1622, %v1620
        %v1624 = vxor.u32 %v1623, 2147483648
        %v1625 = vsel %vm1542, %v1624, %v1623
        %v1626 = vsub.s32 4, %v1602
        %v1627 = vsel %vm1542, %v1626, %v1602
        %v1628 = vsel %vm1541, %v284, %v1625
        %v1629 = vsel %vm1541, 0, %v1627
        %v1630 = vcosq.f32.pop %v1628
        %v1631 = vsinq.f32.pop %v1628
        %vm1632 = vweird.f32 %v284
        %v1633 = vadd.s32 %v1629, 3
        %v1634 = vand.u32 %v1633, 3
        %vm1635 = vcmp.lt.s32.totalorder %v1634, 2
        %vm1636 = vcmp.eq.s32.totalorder %v1634, 0
        %v1637 = vxor.u32 %v1631, 2147483648
        %v1638 = vsel %vm1636, %v1630, %v1637
        %vm1639 = vcmp.eq.s32.totalorder %v1634, 2
        %v1640 = vxor.u32 %v1630, 2147483648
        %v1641 = vsel %vm1639, %v1640, %v1631
        %v1642 = vsel %vm1635, %v1638, %v1641
        %v1643 = vsel %vm1632, nan, %v1642
        %v1644 = vand.u32 2147483647, %v285
        %vm1645 = vcmp.le.f32.partialorder %v1644, 0.7853982
        %vm1646 = vcmp.lt.s32.totalorder %v285, 0
        %v1647 = vand.u32 %v285, 2139095040
        %v1648 = vshrl.u32 %v1647, 23
        %v1649 = vsub.s32 %v1648, 127
        %v1650 = vand.u32 2147483647, %v285
        %v1651 = vand.u32 %v1650, 8388607
        %v1652 = vor.u32 %v1651, 8388608
        %v1653 = vsub.s32 0, %v1652
        %v1654 = vadd.s32 %v1649, 1
        %vm1655 = vcmp.gt.s32.totalorder %v1654, 0
        %v1656 = vsel %vm1655, %v1654, 0
        %v1657 = vshrl.u32 %v1656, 5
        %v1658 = vand.u32 %v1656, 31
        %v1659 = vsub.s32 32, %v1658
        %v1660 = vshrl.u32 683565275, %v1659
        %v1661 = vshll.u32 683565275, %v1658
        %v1662 = vshrl.u32 2475754826, %v1659
        %v1663 = vor.u32 %v1661, %v1662
        %v1664 = vshll.u32 2475754826, %v1658
        %v1665 = vshrl.u32 2131351028, %v1659
        %v1666 = vor.u32 %v1664, %v1665
        %v1667 = vshll.u32 2131351028, %v1658
        %v1668 = vshrl.u32 2102212464, %v1659
        %v1669 = vor.u32 %v1667, %v1668
        %v1670 = vshll.u32 2102212464, %v1658
        %v1671 = vshrl.u32 920167782, %v1659
        %v1672 = vor.u32 %v1670, %v1671
        %v1673 = vshll.u32 920167782, %v1658
        %v1674 = vshrl.u32 1326507024, %v1659
        %v1675 = vor.u32 %v1673, %v1674
        %vm1676 = vcmp.lt.s32.totalorder %v1657, 1
        %vm1677 = vcmp.lt.s32.totalorder %v1657, 2
        %vm1678 = vcmp.lt.s32.totalorder %v1657, 3
        %vm1679 = vcmp.lt.s32.totalorder %v1657, 4
        %v1680 = vsel %vm1676, %v1660, %v1663
        %v1681 = vsel %vm1679, %v1669, 2102212464
        %v1682 = vsel %vm1678, %v1666, %v1681
        %v1683 = vsel %vm1677, %v1680, %v1682
        %v1684 = vsel %vm1676, %v1663, %v1666
        %v1685 = vsel %vm1679, %v1672, 920167782
        %v1686 = vsel %vm1678, %v1669, %v1685
        %v1687 = vsel %vm1677, %v1684, %v1686
        %v1688 = vsel %vm1676, %v1666, %v1669
        %v1689 = vsel %vm1679, %v1675, 1326507024
        %v1690 = vsel %vm1678, %v1672, %v1689
        %v1691 = vsel %vm1677, %v1688, %v1690
        %v1692 = vshll.u32 %v1652, 8
        %v1693 = vmul.u32.u64.compose %v1692, %v1691
        %v1694 = vextract.low.u32 %v1693
        %v1695 = vextract.high.u32 %v1693
        %v1696 = vmul.u32.u64.compose %v1692, %v1687
        %v1697 = vextract.low.u32 %v1696
        %v1698 = vextract.high.u32 %v1696
        %v1699 = vmul.u32 %v1692, %v1683
        %v1700 = vadd.s32 %v1695, %v1697
        %vm1701 = vc.u32 %v1695, %v1697
        %v1702 = vadd.s32 %v1698, 1
        %v1703 = vsel %vm1701, %v1702, %v1698
        %v1704 = vadd.s32 %v1699, %v1703
        %v1705 = vadd.s32 %v1704, 536870912
        %v1706 = vshrl.u32 %v1705, 30
        %v1707 = vshll.u32 %v1706, 30
        %v1708 = vsub.s32 %v1704, %v1707
        %vm1709 = vcmp.lt.s32.totalorder %v1708, 0
        %v1710 = vsub.s32 0, %v1708
        %v1711 = vsel %vm1709, %v1710, %v1708
        %v1712 = vclz %v1711
        %v1713 = vsub.s32 %v1712, 2
        %vm1714 = vcmp.gt.s32.totalorder 0, %v1713
        %v1715 = vsel %vm1714, 0, %v1713
        %v1716 = vsub.s32 32, %v1715
        %v1717 = vshll.u32 %v1708, %v1715
        %v1718 = vshrl.u32 %v1700, %v1716
        %v1719 = vor.u32 %v1717, %v1718
        %v1720 = vsub.s32 4294967266, %v1715
        %v1721 = vadd.s32 %v1720, 127
        %v1722 = vshll.u32 %v1721, 23
        %v1723 = vor.u32 4788187, %v1722
        %v1724 = vand.u32 2147483647, %v1723
        %v1726 = vcvt.s32.f32 %v1719
        %v1727 = vmul.f32 %v1726, %v1724
        %v1728 = vxor.u32 %v1727, 2147483648
        %v1729 = vsel %vm1646, %v1728, %v1727
        %v1730 = vsub.s32 4, %v1706
        %v1731 = vsel %vm1646, %v1730, %v1706
        %v1732 = vsel %vm1645, %v285, %v1729
        %v1733 = vsel %vm1645, 0, %v1731
        %v1734 = vcosq.f32.pop %v1732
        %v1735 = vsinq.f32.pop %v1732
        %vm1736 = vweird.f32 %v285
        %v1737 = vadd.s32 %v1733, 3
        %v1738 = vand.u32 %v1737, 3
        %vm1739 = vcmp.lt.s32.totalorder %v1738, 2
        %vm1740 = vcmp.eq.s32.totalorder %v1738, 0
        %v1741 = vxor.u32 %v1735, 2147483648
        %v1742 = vsel %vm1740, %v1734, %v1741
        %vm1743 = vcmp.eq.s32.totalorder %v1738, 2
        %v1744 = vxor.u32 %v1734, 2147483648
        %v1745 = vsel %vm1743, %v1744, %v1735
        %v1746 = vsel %vm1739, %v1742, %v1745
        %v1747 = vsel %vm1736, nan, %v1746
        %v1748 = vand.u32 2147483647, %v286
        %vm1749 = vcmp.le.f32.partialorder %v1748, 0.7853982
        %vm1750 = vcmp.lt.s32.totalorder %v286, 0
        %v1751 = vand.u32 %v286, 2139095040
        %v1752 = vshrl.u32 %v1751, 23
        %v1753 = vsub.s32 %v1752, 127
        %v1754 = vand.u32 2147483647, %v286
        %v1755 = vand.u32 %v1754, 8388607
        %v1756 = vor.u32 %v1755, 8388608
        %v1757 = vsub.s32 0, %v1756
        %v1758 = vadd.s32 %v1753, 1
        %vm1759 = vcmp.gt.s32.totalorder %v1758, 0
        %v1760 = vsel %vm1759, %v1758, 0
        %v1761 = vshrl.u32 %v1760, 5
        %v1762 = vand.u32 %v1760, 31
        %v1763 = vsub.s32 32, %v1762
        %v1764 = vshrl.u32 683565275, %v1763
        %v1765 = vshll.u32 683565275, %v1762
        %v1766 = vshrl.u32 2475754826, %v1763
        %v1767 = vor.u32 %v1765, %v1766
        %v1768 = vshll.u32 2475754826, %v1762
        %v1769 = vshrl.u32 2131351028, %v1763
        %v1770 = vor.u32 %v1768, %v1769
        %v1771 = vshll.u32 2131351028, %v1762
        %v1772 = vshrl.u32 2102212464, %v1763
        %v1773 = vor.u32 %v1771, %v1772
        %v1774 = vshll.u32 2102212464, %v1762
        %v1775 = vshrl.u32 920167782, %v1763
        %v1776 = vor.u32 %v1774, %v1775
        %v1777 = vshll.u32 920167782, %v1762
        %v1778 = vshrl.u32 1326507024, %v1763
        %v1779 = vor.u32 %v1777, %v1778
        %vm1780 = vcmp.lt.s32.totalorder %v1761, 1
        %vm1781 = vcmp.lt.s32.totalorder %v1761, 2
        %vm1782 = vcmp.lt.s32.totalorder %v1761, 3
        %vm1783 = vcmp.lt.s32.totalorder %v1761, 4
        %v1784 = vsel %vm1780, %v1764, %v1767
        %v1785 = vsel %vm1783, %v1773, 2102212464
        %v1786 = vsel %vm1782, %v1770, %v1785
        %v1787 = vsel %vm1781, %v1784, %v1786
        %v1788 = vsel %vm1780, %v1767, %v1770
        %v1789 = vsel %vm1783, %v1776, 920167782
        %v1790 = vsel %vm1782, %v1773, %v1789
        %v1791 = vsel %vm1781, %v1788, %v1790
        %v1792 = vsel %vm1780, %v1770, %v1773
        %v1793 = vsel %vm1783, %v1779, 1326507024
        %v1794 = vsel %vm1782, %v1776, %v1793
        %v1795 = vsel %vm1781, %v1792, %v1794
        %v1796 = vshll.u32 %v1756, 8
        %v1797 = vmul.u32.u64.compose %v1796, %v1795
        %v1798 = vextract.low.u32 %v1797
        %v1799 = vextract.high.u32 %v1797
        %v1800 = vmul.u32.u64.compose %v1796, %v1791
        %v1801 = vextract.low.u32 %v1800
        %v1802 = vextract.high.u32 %v1800
        %v1803 = vmul.u32 %v1796, %v1787
        %v1804 = vadd.s32 %v1799, %v1801
        %vm1805 = vc.u32 %v1799, %v1801
        %v1806 = vadd.s32 %v1802, 1
        %v1807 = vsel %vm1805, %v1806, %v1802
        %v1808 = vadd.s32 %v1803, %v1807
        %v1809 = vadd.s32 %v1808, 536870912
        %v1810 = vshrl.u32 %v1809, 30
        %v1811 = vshll.u32 %v1810, 30
        %v1812 = vsub.s32 %v1808, %v1811
        %vm1813 = vcmp.lt.s32.totalorder %v1812, 0
        %v1814 = vsub.s32 0, %v1812
        %v1815 = vsel %vm1813, %v1814, %v1812
        %v1816 = vclz %v1815
        %v1817 = vsub.s32 %v1816, 2
        %vm1818 = vcmp.gt.s32.totalorder 0, %v1817
        %v1819 = vsel %vm1818, 0, %v1817
        %v1820 = vsub.s32 32, %v1819
        %v1821 = vshll.u32 %v1812, %v1819
        %v1822 = vshrl.u32 %v1804, %v1820
        %v1823 = vor.u32 %v1821, %v1822
        %v1824 = vsub.s32 4294967266, %v1819
        %v1825 = vadd.s32 %v1824, 127
        %v1826 = vshll.u32 %v1825, 23
        %v1827 = vor.u32 4788187, %v1826
        %v1828 = vand.u32 2147483647, %v1827
        %v1830 = vcvt.s32.f32 %v1823
        %v1831 = vmul.f32 %v1830, %v1828
        %v1832 = vxor.u32 %v1831, 2147483648
        %v1833 = vsel %vm1750, %v1832, %v1831
        %v1834 = vsub.s32 4, %v1810
        %v1835 = vsel %vm1750, %v1834, %v1810
        %v1836 = vsel %vm1749, %v286, %v1833
        %v1837 = vsel %vm1749, 0, %v1835
        %v1838 = vcosq.f32.pop %v1836
        %v1839 = vsinq.f32.pop %v1836
        %vm1840 = vweird.f32 %v286
        %v1841 = vadd.s32 %v1837, 3
        %v1842 = vand.u32 %v1841, 3
        %vm1843 = vcmp.lt.s32.totalorder %v1842, 2
        %vm1844 = vcmp.eq.s32.totalorder %v1842, 0
        %v1845 = vxor.u32 %v1839, 2147483648
        %v1846 = vsel %vm1844, %v1838, %v1845
        %vm1847 = vcmp.eq.s32.totalorder %v1842, 2
        %v1848 = vxor.u32 %v1838, 2147483648
        %v1849 = vsel %vm1847, %v1848, %v1839
        %v1850 = vsel %vm1843, %v1846, %v1849
        %v1851 = vsel %vm1840, nan, %v1850
        %v1852 = vand.u32 2147483647, %v287
        %vm1853 = vcmp.le.f32.partialorder %v1852, 0.7853982
        %vm1854 = vcmp.lt.s32.totalorder %v287, 0
        %v1855 = vand.u32 %v287, 2139095040
        %v1856 = vshrl.u32 %v1855, 23
        %v1857 = vsub.s32 %v1856, 127
        %v1858 = vand.u32 2147483647, %v287
        %v1859 = vand.u32 %v1858, 8388607
        %v1860 = vor.u32 %v1859, 8388608
        %v1861 = vsub.s32 0, %v1860
        %v1862 = vadd.s32 %v1857, 1
        %vm1863 = vcmp.gt.s32.totalorder %v1862, 0
        %v1864 = vsel %vm1863, %v1862, 0
        %v1865 = vshrl.u32 %v1864, 5
        %v1866 = vand.u32 %v1864, 31
        %v1867 = vsub.s32 32, %v1866
        %v1868 = vshrl.u32 683565275, %v1867
        %v1869 = vshll.u32 683565275, %v1866
        %v1870 = vshrl.u32 2475754826, %v1867
        %v1871 = vor.u32 %v1869, %v1870
        %v1872 = vshll.u32 2475754826, %v1866
        %v1873 = vshrl.u32 2131351028, %v1867
        %v1874 = vor.u32 %v1872, %v1873
        %v1875 = vshll.u32 2131351028, %v1866
        %v1876 = vshrl.u32 2102212464, %v1867
        %v1877 = vor.u32 %v1875, %v1876
        %v1878 = vshll.u32 2102212464, %v1866
        %v1879 = vshrl.u32 920167782, %v1867
        %v1880 = vor.u32 %v1878, %v1879
        %v1881 = vshll.u32 920167782, %v1866
        %v1882 = vshrl.u32 1326507024, %v1867
        %v1883 = vor.u32 %v1881, %v1882
        %vm1884 = vcmp.lt.s32.totalorder %v1865, 1
        %vm1885 = vcmp.lt.s32.totalorder %v1865, 2
        %vm1886 = vcmp.lt.s32.totalorder %v1865, 3
        %vm1887 = vcmp.lt.s32.totalorder %v1865, 4
        %v1888 = vsel %vm1884, %v1868, %v1871
        %v1889 = vsel %vm1887, %v1877, 2102212464
        %v1890 = vsel %vm1886, %v1874, %v1889
        %v1891 = vsel %vm1885, %v1888, %v1890
        %v1892 = vsel %vm1884, %v1871, %v1874
        %v1893 = vsel %vm1887, %v1880, 920167782
        %v1894 = vsel %vm1886, %v1877, %v1893
        %v1895 = vsel %vm1885, %v1892, %v1894
        %v1896 = vsel %vm1884, %v1874, %v1877
        %v1897 = vsel %vm1887, %v1883, 1326507024
        %v1898 = vsel %vm1886, %v1880, %v1897
        %v1899 = vsel %vm1885, %v1896, %v1898
        %v1900 = vshll.u32 %v1860, 8
        %v1901 = vmul.u32.u64.compose %v1900, %v1899
        %v1902 = vextract.low.u32 %v1901
        %v1903 = vextract.high.u32 %v1901
        %v1904 = vmul.u32.u64.compose %v1900, %v1895
        %v1905 = vextract.low.u32 %v1904
        %v1906 = vextract.high.u32 %v1904
        %v1907 = vmul.u32 %v1900, %v1891
        %v1908 = vadd.s32 %v1903, %v1905
        %vm1909 = vc.u32 %v1903, %v1905
        %v1910 = vadd.s32 %v1906, 1
        %v1911 = vsel %vm1909, %v1910, %v1906
        %v1912 = vadd.s32 %v1907, %v1911
        %v1913 = vadd.s32 %v1912, 536870912
        %v1914 = vshrl.u32 %v1913, 30
        %v1915 = vshll.u32 %v1914, 30
        %v1916 = vsub.s32 %v1912, %v1915
        %vm1917 = vcmp.lt.s32.totalorder %v1916, 0
        %v1918 = vsub.s32 0, %v1916
        %v1919 = vsel %vm1917, %v1918, %v1916
        %v1920 = vclz %v1919
        %v1921 = vsub.s32 %v1920, 2
        %vm1922 = vcmp.gt.s32.totalorder 0, %v1921
        %v1923 = vsel %vm1922, 0, %v1921
        %v1924 = vsub.s32 32, %v1923
        %v1925 = vshll.u32 %v1916, %v1923
        %v1926 = vshrl.u32 %v1908, %v1924
        %v1927 = vor.u32 %v1925, %v1926
        %v1928 = vsub.s32 4294967266, %v1923
        %v1929 = vadd.s32 %v1928, 127
        %v1930 = vshll.u32 %v1929, 23
        %v1931 = vor.u32 4788187, %v1930
        %v1932 = vand.u32 2147483647, %v1931
        %v1934 = vcvt.s32.f32 %v1927
        %v1935 = vmul.f32 %v1934, %v1932
        %v1936 = vxor.u32 %v1935, 2147483648
        %v1937 = vsel %vm1854, %v1936, %v1935
        %v1938 = vsub.s32 4, %v1914
        %v1939 = vsel %vm1854, %v1938, %v1914
        %v1940 = vsel %vm1853, %v287, %v1937
        %v1941 = vsel %vm1853, 0, %v1939
        %v1942 = vcosq.f32.pop %v1940
        %v1943 = vsinq.f32.pop %v1940
        %vm1944 = vweird.f32 %v287
        %v1945 = vadd.s32 %v1941, 3
        %v1946 = vand.u32 %v1945, 3
        %vm1947 = vcmp.lt.s32.totalorder %v1946, 2
        %vm1948 = vcmp.eq.s32.totalorder %v1946, 0
        %v1949 = vxor.u32 %v1943, 2147483648
        %v1950 = vsel %vm1948, %v1942, %v1949
        %vm1951 = vcmp.eq.s32.totalorder %v1946, 2
        %v1952 = vxor.u32 %v1942, 2147483648
        %v1953 = vsel %vm1951, %v1952, %v1943
        %v1954 = vsel %vm1947, %v1950, %v1953
        %v1955 = vsel %vm1944, nan, %v1954
        %v1956 = vand.u32 2147483647, %v288
        %vm1957 = vcmp.le.f32.partialorder %v1956, 0.7853982
        %vm1958 = vcmp.lt.s32.totalorder %v288, 0
        %v1959 = vand.u32 %v288, 2139095040
        %v1960 = vshrl.u32 %v1959, 23
        %v1961 = vsub.s32 %v1960, 127
        %v1962 = vand.u32 2147483647, %v288
        %v1963 = vand.u32 %v1962, 8388607
        %v1964 = vor.u32 %v1963, 8388608
        %v1965 = vsub.s32 0, %v1964
        %v1966 = vadd.s32 %v1961, 1
        %vm1967 = vcmp.gt.s32.totalorder %v1966, 0
        %v1968 = vsel %vm1967, %v1966, 0
        %v1969 = vshrl.u32 %v1968, 5
        %v1970 = vand.u32 %v1968, 31
        %v1971 = vsub.s32 32, %v1970
        %v1972 = vshrl.u32 683565275, %v1971
        %v1973 = vshll.u32 683565275, %v1970
        %v1974 = vshrl.u32 2475754826, %v1971
        %v1975 = vor.u32 %v1973, %v1974
        %v1976 = vshll.u32 2475754826, %v1970
        %v1977 = vshrl.u32 2131351028, %v1971
        %v1978 = vor.u32 %v1976, %v1977
        %v1979 = vshll.u32 2131351028, %v1970
        %v1980 = vshrl.u32 2102212464, %v1971
        %v1981 = vor.u32 %v1979, %v1980
        %v1982 = vshll.u32 2102212464, %v1970
        %v1983 = vshrl.u32 920167782, %v1971
        %v1984 = vor.u32 %v1982, %v1983
        %v1985 = vshll.u32 920167782, %v1970
        %v1986 = vshrl.u32 1326507024, %v1971
        %v1987 = vor.u32 %v1985, %v1986
        %vm1988 = vcmp.lt.s32.totalorder %v1969, 1
        %vm1989 = vcmp.lt.s32.totalorder %v1969, 2
        %vm1990 = vcmp.lt.s32.totalorder %v1969, 3
        %vm1991 = vcmp.lt.s32.totalorder %v1969, 4
        %v1992 = vsel %vm1988, %v1972, %v1975
        %v1993 = vsel %vm1991, %v1981, 2102212464
        %v1994 = vsel %vm1990, %v1978, %v1993
        %v1995 = vsel %vm1989, %v1992, %v1994
        %v1996 = vsel %vm1988, %v1975, %v1978
        %v1997 = vsel %vm1991, %v1984, 920167782
        %v1998 = vsel %vm1990, %v1981, %v1997
        %v1999 = vsel %vm1989, %v1996, %v1998
        %v2000 = vsel %vm1988, %v1978, %v1981
        %v2001 = vsel %vm1991, %v1987, 1326507024
        %v2002 = vsel %vm1990, %v1984, %v2001
        %v2003 = vsel %vm1989, %v2000, %v2002
        %v2004 = vshll.u32 %v1964, 8
        %v2005 = vmul.u32.u64.compose %v2004, %v2003
        %v2006 = vextract.low.u32 %v2005
        %v2007 = vextract.high.u32 %v2005
        %v2008 = vmul.u32.u64.compose %v2004, %v1999
        %v2009 = vextract.low.u32 %v2008
        %v2010 = vextract.high.u32 %v2008
        %v2011 = vmul.u32 %v2004, %v1995
        %v2012 = vadd.s32 %v2007, %v2009
        %vm2013 = vc.u32 %v2007, %v2009
        %v2014 = vadd.s32 %v2010, 1
        %v2015 = vsel %vm2013, %v2014, %v2010
        %v2016 = vadd.s32 %v2011, %v2015
        %v2017 = vadd.s32 %v2016, 536870912
        %v2018 = vshrl.u32 %v2017, 30
        %v2019 = vshll.u32 %v2018, 30
        %v2020 = vsub.s32 %v2016, %v2019
        %vm2021 = vcmp.lt.s32.totalorder %v2020, 0
        %v2022 = vsub.s32 0, %v2020
        %v2023 = vsel %vm2021, %v2022, %v2020
        %v2024 = vclz %v2023
        %v2025 = vsub.s32 %v2024, 2
        %vm2026 = vcmp.gt.s32.totalorder 0, %v2025
        %v2027 = vsel %vm2026, 0, %v2025
        %v2028 = vsub.s32 32, %v2027
        %v2029 = vshll.u32 %v2020, %v2027
        %v2030 = vshrl.u32 %v2012, %v2028
        %v2031 = vor.u32 %v2029, %v2030
        %v2032 = vsub.s32 4294967266, %v2027
        %v2033 = vadd.s32 %v2032, 127
        %v2034 = vshll.u32 %v2033, 23
        %v2035 = vor.u32 4788187, %v2034
        %v2036 = vand.u32 2147483647, %v2035
        %v2038 = vcvt.s32.f32 %v2031
        %v2039 = vmul.f32 %v2038, %v2036
        %v2040 = vxor.u32 %v2039, 2147483648
        %v2041 = vsel %vm1958, %v2040, %v2039
        %v2042 = vsub.s32 4, %v2018
        %v2043 = vsel %vm1958, %v2042, %v2018
        %v2044 = vsel %vm1957, %v288, %v2041
        %v2045 = vsel %vm1957, 0, %v2043
        %v2046 = vcosq.f32.pop %v2044
        %v2047 = vsinq.f32.pop %v2044
        %vm2048 = vweird.f32 %v288
        %v2049 = vadd.s32 %v2045, 3
        %v2050 = vand.u32 %v2049, 3
        %vm2051 = vcmp.lt.s32.totalorder %v2050, 2
        %vm2052 = vcmp.eq.s32.totalorder %v2050, 0
        %v2053 = vxor.u32 %v2047, 2147483648
        %v2054 = vsel %vm2052, %v2046, %v2053
        %vm2055 = vcmp.eq.s32.totalorder %v2050, 2
        %v2056 = vxor.u32 %v2046, 2147483648
        %v2057 = vsel %vm2055, %v2056, %v2047
        %v2058 = vsel %vm2051, %v2054, %v2057
        %v2059 = vsel %vm2048, nan, %v2058
        %v2060 = vand.u32 2147483647, %v289
        %vm2061 = vcmp.le.f32.partialorder %v2060, 0.7853982
        %vm2062 = vcmp.lt.s32.totalorder %v289, 0
        %v2063 = vand.u32 %v289, 2139095040
        %v2064 = vshrl.u32 %v2063, 23
        %v2065 = vsub.s32 %v2064, 127
        %v2066 = vand.u32 2147483647, %v289
        %v2067 = vand.u32 %v2066, 8388607
        %v2068 = vor.u32 %v2067, 8388608
        %v2069 = vsub.s32 0, %v2068
        %v2070 = vadd.s32 %v2065, 1
        %vm2071 = vcmp.gt.s32.totalorder %v2070, 0
        %v2072 = vsel %vm2071, %v2070, 0
        %v2073 = vshrl.u32 %v2072, 5
        %v2074 = vand.u32 %v2072, 31
        %v2075 = vsub.s32 32, %v2074
        %v2076 = vshrl.u32 683565275, %v2075
        %v2077 = vshll.u32 683565275, %v2074
        %v2078 = vshrl.u32 2475754826, %v2075
        %v2079 = vor.u32 %v2077, %v2078
        %v2080 = vshll.u32 2475754826, %v2074
        %v2081 = vshrl.u32 2131351028, %v2075
        %v2082 = vor.u32 %v2080, %v2081
        %v2083 = vshll.u32 2131351028, %v2074
        %v2084 = vshrl.u32 2102212464, %v2075
        %v2085 = vor.u32 %v2083, %v2084
        %v2086 = vshll.u32 2102212464, %v2074
        %v2087 = vshrl.u32 920167782, %v2075
        %v2088 = vor.u32 %v2086, %v2087
        %v2089 = vshll.u32 920167782, %v2074
        %v2090 = vshrl.u32 1326507024, %v2075
        %v2091 = vor.u32 %v2089, %v2090
        %vm2092 = vcmp.lt.s32.totalorder %v2073, 1
        %vm2093 = vcmp.lt.s32.totalorder %v2073, 2
        %vm2094 = vcmp.lt.s32.totalorder %v2073, 3
        %vm2095 = vcmp.lt.s32.totalorder %v2073, 4
        %v2096 = vsel %vm2092, %v2076, %v2079
        %v2097 = vsel %vm2095, %v2085, 2102212464
        %v2098 = vsel %vm2094, %v2082, %v2097
        %v2099 = vsel %vm2093, %v2096, %v2098
        %v2100 = vsel %vm2092, %v2079, %v2082
        %v2101 = vsel %vm2095, %v2088, 920167782
        %v2102 = vsel %vm2094, %v2085, %v2101
        %v2103 = vsel %vm2093, %v2100, %v2102
        %v2104 = vsel %vm2092, %v2082, %v2085
        %v2105 = vsel %vm2095, %v2091, 1326507024
        %v2106 = vsel %vm2094, %v2088, %v2105
        %v2107 = vsel %vm2093, %v2104, %v2106
        %v2108 = vshll.u32 %v2068, 8
        %v2109 = vmul.u32.u64.compose %v2108, %v2107
        %v2110 = vextract.low.u32 %v2109
        %v2111 = vextract.high.u32 %v2109
        %v2112 = vmul.u32.u64.compose %v2108, %v2103
        %v2113 = vextract.low.u32 %v2112
        %v2114 = vextract.high.u32 %v2112
        %v2115 = vmul.u32 %v2108, %v2099
        %v2116 = vadd.s32 %v2111, %v2113
        %vm2117 = vc.u32 %v2111, %v2113
        %v2118 = vadd.s32 %v2114, 1
        %v2119 = vsel %vm2117, %v2118, %v2114
        %v2120 = vadd.s32 %v2115, %v2119
        %v2121 = vadd.s32 %v2120, 536870912
        %v2122 = vshrl.u32 %v2121, 30
        %v2123 = vshll.u32 %v2122, 30
        %v2124 = vsub.s32 %v2120, %v2123
        %vm2125 = vcmp.lt.s32.totalorder %v2124, 0
        %v2126 = vsub.s32 0, %v2124
        %v2127 = vsel %vm2125, %v2126, %v2124
        %v2128 = vclz %v2127
        %v2129 = vsub.s32 %v2128, 2
        %vm2130 = vcmp.gt.s32.totalorder 0, %v2129
        %v2131 = vsel %vm2130, 0, %v2129
        %v2132 = vsub.s32 32, %v2131
        %v2133 = vshll.u32 %v2124, %v2131
        %v2134 = vshrl.u32 %v2116, %v2132
        %v2135 = vor.u32 %v2133, %v2134
        %v2136 = vsub.s32 4294967266, %v2131
        %v2137 = vadd.s32 %v2136, 127
        %v2138 = vshll.u32 %v2137, 23
        %v2139 = vor.u32 4788187, %v2138
        %v2140 = vand.u32 2147483647, %v2139
        %v2142 = vcvt.s32.f32 %v2135
        %v2143 = vmul.f32 %v2142, %v2140
        %v2144 = vxor.u32 %v2143, 2147483648
        %v2145 = vsel %vm2062, %v2144, %v2143
        %v2146 = vsub.s32 4, %v2122
        %v2147 = vsel %vm2062, %v2146, %v2122
        %v2148 = vsel %vm2061, %v289, %v2145
        %v2149 = vsel %vm2061, 0, %v2147
        %v2150 = vcosq.f32.pop %v2148
        %v2151 = vsinq.f32.pop %v2148
        %vm2152 = vweird.f32 %v289
        %v2153 = vadd.s32 %v2149, 3
        %v2154 = vand.u32 %v2153, 3
        %vm2155 = vcmp.lt.s32.totalorder %v2154, 2
        %vm2156 = vcmp.eq.s32.totalorder %v2154, 0
        %v2157 = vxor.u32 %v2151, 2147483648
        %v2158 = vsel %vm2156, %v2150, %v2157
        %vm2159 = vcmp.eq.s32.totalorder %v2154, 2
        %v2160 = vxor.u32 %v2150, 2147483648
        %v2161 = vsel %vm2159, %v2160, %v2151
        %v2162 = vsel %vm2155, %v2158, %v2161
        %v2163 = vsel %vm2152, nan, %v2162
        %v2164 = vand.u32 2147483647, %v290
        %vm2165 = vcmp.le.f32.partialorder %v2164, 0.7853982
        %vm2166 = vcmp.lt.s32.totalorder %v290, 0
        %v2167 = vand.u32 %v290, 2139095040
        %v2168 = vshrl.u32 %v2167, 23
        %v2169 = vsub.s32 %v2168, 127
        %v2170 = vand.u32 2147483647, %v290
        %v2171 = vand.u32 %v2170, 8388607
        %v2172 = vor.u32 %v2171, 8388608
        %v2173 = vsub.s32 0, %v2172
        %v2174 = vadd.s32 %v2169, 1
        %vm2175 = vcmp.gt.s32.totalorder %v2174, 0
        %v2176 = vsel %vm2175, %v2174, 0
        %v2177 = vshrl.u32 %v2176, 5
        %v2178 = vand.u32 %v2176, 31
        %v2179 = vsub.s32 32, %v2178
        %v2180 = vshrl.u32 683565275, %v2179
        %v2181 = vshll.u32 683565275, %v2178
        %v2182 = vshrl.u32 2475754826, %v2179
        %v2183 = vor.u32 %v2181, %v2182
        %v2184 = vshll.u32 2475754826, %v2178
        %v2185 = vshrl.u32 2131351028, %v2179
        %v2186 = vor.u32 %v2184, %v2185
        %v2187 = vshll.u32 2131351028, %v2178
        %v2188 = vshrl.u32 2102212464, %v2179
        %v2189 = vor.u32 %v2187, %v2188
        %v2190 = vshll.u32 2102212464, %v2178
        %v2191 = vshrl.u32 920167782, %v2179
        %v2192 = vor.u32 %v2190, %v2191
        %v2193 = vshll.u32 920167782, %v2178
        %v2194 = vshrl.u32 1326507024, %v2179
        %v2195 = vor.u32 %v2193, %v2194
        %vm2196 = vcmp.lt.s32.totalorder %v2177, 1
        %vm2197 = vcmp.lt.s32.totalorder %v2177, 2
        %vm2198 = vcmp.lt.s32.totalorder %v2177, 3
        %vm2199 = vcmp.lt.s32.totalorder %v2177, 4
        %v2200 = vsel %vm2196, %v2180, %v2183
        %v2201 = vsel %vm2199, %v2189, 2102212464
        %v2202 = vsel %vm2198, %v2186, %v2201
        %v2203 = vsel %vm2197, %v2200, %v2202
        %v2204 = vsel %vm2196, %v2183, %v2186
        %v2205 = vsel %vm2199, %v2192, 920167782
        %v2206 = vsel %vm2198, %v2189, %v2205
        %v2207 = vsel %vm2197, %v2204, %v2206
        %v2208 = vsel %vm2196, %v2186, %v2189
        %v2209 = vsel %vm2199, %v2195, 1326507024
        %v2210 = vsel %vm2198, %v2192, %v2209
        %v2211 = vsel %vm2197, %v2208, %v2210
        %v2212 = vshll.u32 %v2172, 8
        %v2213 = vmul.u32.u64.compose %v2212, %v2211
        %v2214 = vextract.low.u32 %v2213
        %v2215 = vextract.high.u32 %v2213
        %v2216 = vmul.u32.u64.compose %v2212, %v2207
        %v2217 = vextract.low.u32 %v2216
        %v2218 = vextract.high.u32 %v2216
        %v2219 = vmul.u32 %v2212, %v2203
        %v2220 = vadd.s32 %v2215, %v2217
        %vm2221 = vc.u32 %v2215, %v2217
        %v2222 = vadd.s32 %v2218, 1
        %v2223 = vsel %vm2221, %v2222, %v2218
        %v2224 = vadd.s32 %v2219, %v2223
        %v2225 = vadd.s32 %v2224, 536870912
        %v2226 = vshrl.u32 %v2225, 30
        %v2227 = vshll.u32 %v2226, 30
        %v2228 = vsub.s32 %v2224, %v2227
        %vm2229 = vcmp.lt.s32.totalorder %v2228, 0
        %v2230 = vsub.s32 0, %v2228
        %v2231 = vsel %vm2229, %v2230, %v2228
        %v2232 = vclz %v2231
        %v2233 = vsub.s32 %v2232, 2
        %vm2234 = vcmp.gt.s32.totalorder 0, %v2233
        %v2235 = vsel %vm2234, 0, %v2233
        %v2236 = vsub.s32 32, %v2235
        %v2237 = vshll.u32 %v2228, %v2235
        %v2238 = vshrl.u32 %v2220, %v2236
        %v2239 = vor.u32 %v2237, %v2238
        %v2240 = vsub.s32 4294967266, %v2235
        %v2241 = vadd.s32 %v2240, 127
        %v2242 = vshll.u32 %v2241, 23
        %v2243 = vor.u32 4788187, %v2242
        %v2244 = vand.u32 2147483647, %v2243
        %v2246 = vcvt.s32.f32 %v2239
        %v2247 = vmul.f32 %v2246, %v2244
        %v2248 = vxor.u32 %v2247, 2147483648
        %v2249 = vsel %vm2166, %v2248, %v2247
        %v2250 = vsub.s32 4, %v2226
        %v2251 = vsel %vm2166, %v2250, %v2226
        %v2252 = vsel %vm2165, %v290, %v2249
        %v2253 = vsel %vm2165, 0, %v2251
        %v2254 = vcosq.f32.pop %v2252
        %v2255 = vsinq.f32.pop %v2252
        %vm2256 = vweird.f32 %v290
        %v2257 = vadd.s32 %v2253, 3
        %v2258 = vand.u32 %v2257, 3
        %vm2259 = vcmp.lt.s32.totalorder %v2258, 2
        %vm2260 = vcmp.eq.s32.totalorder %v2258, 0
        %v2261 = vxor.u32 %v2255, 2147483648
        %v2262 = vsel %vm2260, %v2254, %v2261
        %vm2263 = vcmp.eq.s32.totalorder %v2258, 2
        %v2264 = vxor.u32 %v2254, 2147483648
        %v2265 = vsel %vm2263, %v2264, %v2255
        %v2266 = vsel %vm2259, %v2262, %v2265
        %v2267 = vsel %vm2256, nan, %v2266
        %v2268 = vand.u32 2147483647, %v291
        %vm2269 = vcmp.le.f32.partialorder %v2268, 0.7853982
        %vm2270 = vcmp.lt.s32.totalorder %v291, 0
        %v2271 = vand.u32 %v291, 2139095040
        %v2272 = vshrl.u32 %v2271, 23
        %v2273 = vsub.s32 %v2272, 127
        %v2274 = vand.u32 2147483647, %v291
        %v2275 = vand.u32 %v2274, 8388607
        %v2276 = vor.u32 %v2275, 8388608
        %v2277 = vsub.s32 0, %v2276
        %v2278 = vadd.s32 %v2273, 1
        %vm2279 = vcmp.gt.s32.totalorder %v2278, 0
        %v2280 = vsel %vm2279, %v2278, 0
        %v2281 = vshrl.u32 %v2280, 5
        %v2282 = vand.u32 %v2280, 31
        %v2283 = vsub.s32 32, %v2282
        %v2284 = vshrl.u32 683565275, %v2283
        %v2285 = vshll.u32 683565275, %v2282
        %v2286 = vshrl.u32 2475754826, %v2283
        %v2287 = vor.u32 %v2285, %v2286
        %v2288 = vshll.u32 2475754826, %v2282
        %v2289 = vshrl.u32 2131351028, %v2283
        %v2290 = vor.u32 %v2288, %v2289
        %v2291 = vshll.u32 2131351028, %v2282
        %v2292 = vshrl.u32 2102212464, %v2283
        %v2293 = vor.u32 %v2291, %v2292
        %v2294 = vshll.u32 2102212464, %v2282
        %v2295 = vshrl.u32 920167782, %v2283
        %v2296 = vor.u32 %v2294, %v2295
        %v2297 = vshll.u32 920167782, %v2282
        %v2298 = vshrl.u32 1326507024, %v2283
        %v2299 = vor.u32 %v2297, %v2298
        %vm2300 = vcmp.lt.s32.totalorder %v2281, 1
        %vm2301 = vcmp.lt.s32.totalorder %v2281, 2
        %vm2302 = vcmp.lt.s32.totalorder %v2281, 3
        %vm2303 = vcmp.lt.s32.totalorder %v2281, 4
        %v2304 = vsel %vm2300, %v2284, %v2287
        %v2305 = vsel %vm2303, %v2293, 2102212464
        %v2306 = vsel %vm2302, %v2290, %v2305
        %v2307 = vsel %vm2301, %v2304, %v2306
        %v2308 = vsel %vm2300, %v2287, %v2290
        %v2309 = vsel %vm2303, %v2296, 920167782
        %v2310 = vsel %vm2302, %v2293, %v2309
        %v2311 = vsel %vm2301, %v2308, %v2310
        %v2312 = vsel %vm2300, %v2290, %v2293
        %v2313 = vsel %vm2303, %v2299, 1326507024
        %v2314 = vsel %vm2302, %v2296, %v2313
        %v2315 = vsel %vm2301, %v2312, %v2314
        %v2316 = vshll.u32 %v2276, 8
        %v2317 = vmul.u32.u64.compose %v2316, %v2315
        %v2318 = vextract.low.u32 %v2317
        %v2319 = vextract.high.u32 %v2317
        %v2320 = vmul.u32.u64.compose %v2316, %v2311
        %v2321 = vextract.low.u32 %v2320
        %v2322 = vextract.high.u32 %v2320
        %v2323 = vmul.u32 %v2316, %v2307
        %v2324 = vadd.s32 %v2319, %v2321
        %vm2325 = vc.u32 %v2319, %v2321
        %v2326 = vadd.s32 %v2322, 1
        %v2327 = vsel %vm2325, %v2326, %v2322
        %v2328 = vadd.s32 %v2323, %v2327
        %v2329 = vadd.s32 %v2328, 536870912
        %v2330 = vshrl.u32 %v2329, 30
        %v2331 = vshll.u32 %v2330, 30
        %v2332 = vsub.s32 %v2328, %v2331
        %vm2333 = vcmp.lt.s32.totalorder %v2332, 0
        %v2334 = vsub.s32 0, %v2332
        %v2335 = vsel %vm2333, %v2334, %v2332
        %v2336 = vclz %v2335
        %v2337 = vsub.s32 %v2336, 2
        %vm2338 = vcmp.gt.s32.totalorder 0, %v2337
        %v2339 = vsel %vm2338, 0, %v2337
        %v2340 = vsub.s32 32, %v2339
        %v2341 = vshll.u32 %v2332, %v2339
        %v2342 = vshrl.u32 %v2324, %v2340
        %v2343 = vor.u32 %v2341, %v2342
        %v2344 = vsub.s32 4294967266, %v2339
        %v2345 = vadd.s32 %v2344, 127
        %v2346 = vshll.u32 %v2345, 23
        %v2347 = vor.u32 4788187, %v2346
        %v2348 = vand.u32 2147483647, %v2347
        %v2350 = vcvt.s32.f32 %v2343
        %v2351 = vmul.f32 %v2350, %v2348
        %v2352 = vxor.u32 %v2351, 2147483648
        %v2353 = vsel %vm2270, %v2352, %v2351
        %v2354 = vsub.s32 4, %v2330
        %v2355 = vsel %vm2270, %v2354, %v2330
        %v2356 = vsel %vm2269, %v291, %v2353
        %v2357 = vsel %vm2269, 0, %v2355
        %v2358 = vcosq.f32.pop %v2356
        %v2359 = vsinq.f32.pop %v2356
        %vm2360 = vweird.f32 %v291
        %v2361 = vadd.s32 %v2357, 3
        %v2362 = vand.u32 %v2361, 3
        %vm2363 = vcmp.lt.s32.totalorder %v2362, 2
        %vm2364 = vcmp.eq.s32.totalorder %v2362, 0
        %v2365 = vxor.u32 %v2359, 2147483648
        %v2366 = vsel %vm2364, %v2358, %v2365
        %vm2367 = vcmp.eq.s32.totalorder %v2362, 2
        %v2368 = vxor.u32 %v2358, 2147483648
        %v2369 = vsel %vm2367, %v2368, %v2359
        %v2370 = vsel %vm2363, %v2366, %v2369
        %v2371 = vsel %vm2360, nan, %v2370
        %2372 = vst [vmem:[%s137] sm:$0xff] %v395
        %2373 = vst [vmem:[%s137 + $0x10] sm:$0xff] %v499
        %2374 = vst [vmem:[%s137 + $0x20] sm:$0xff] %v603
        %2375 = vst [vmem:[%s137 + $0x30] sm:$0xff] %v707
        %2376 = vst [vmem:[%s137 + $0x40] sm:$0xff] %v811
        %2377 = vst [vmem:[%s137 + $0x50] sm:$0xff] %v915
        %2378 = vst [vmem:[%s137 + $0x60] sm:$0xff] %v1019
        %2379 = vst [vmem:[%s137 + $0x70] sm:$0xff] %v1123
        %2380 = vst [vmem:[%s137 + $0x80] sm:$0xff] %v1227
        %2381 = vst [vmem:[%s137 + $0x90] sm:$0xff] %v1331
        %2382 = vst [vmem:[%s137 + $0xa0] sm:$0xff] %v1435
        %2383 = vst [vmem:[%s137 + $0xb0] sm:$0xff] %v1539
        %2384 = vst [vmem:[%s137 + $0xc0] sm:$0xff] %v1643
        %2385 = vst [vmem:[%s137 + $0xd0] sm:$0xff] %v1747
        %2386 = vst [vmem:[%s137 + $0xe0] sm:$0xff] %v1851
        %2387 = vst [vmem:[%s137 + $0xf0] sm:$0xff] %v1955
        %2388 = vst [vmem:[%s137 + $0x100] sm:$0xff] %v2059
        %2389 = vst [vmem:[%s137 + $0x110] sm:$0xff] %v2163
        %2390 = vst [vmem:[%s137 + $0x120] sm:$0xff] %v2267
        %2391 = vst [vmem:[%s137 + $0x130] sm:$0xff] %v2371
        %v2392 = vand.u32 2147483647, %v272
        %vm2393 = vcmp.le.f32.partialorder %v2392, 0.7853982
        %vm2394 = vcmp.lt.s32.totalorder %v272, 0
        %v2395 = vand.u32 %v272, 2139095040
        %v2396 = vshrl.u32 %v2395, 23
        %v2397 = vsub.s32 %v2396, 127
        %v2398 = vand.u32 2147483647, %v272
        %v2399 = vand.u32 %v2398, 8388607
        %v2400 = vor.u32 %v2399, 8388608
        %v2401 = vsub.s32 0, %v2400
        %v2402 = vadd.s32 %v2397, 1
        %vm2403 = vcmp.gt.s32.totalorder %v2402, 0
        %v2404 = vsel %vm2403, %v2402, 0
        %v2405 = vshrl.u32 %v2404, 5
        %v2406 = vand.u32 %v2404, 31
        %v2407 = vsub.s32 32, %v2406
        %v2408 = vshrl.u32 683565275, %v2407
        %v2409 = vshll.u32 683565275, %v2406
        %v2410 = vshrl.u32 2475754826, %v2407
        %v2411 = vor.u32 %v2409, %v2410
        %v2412 = vshll.u32 2475754826, %v2406
        %v2413 = vshrl.u32 2131351028, %v2407
        %v2414 = vor.u32 %v2412, %v2413
        %v2415 = vshll.u32 2131351028, %v2406
        %v2416 = vshrl.u32 2102212464, %v2407
        %v2417 = vor.u32 %v2415, %v2416
        %v2418 = vshll.u32 2102212464, %v2406
        %v2419 = vshrl.u32 920167782, %v2407
        %v2420 = vor.u32 %v2418, %v2419
        %v2421 = vshll.u32 920167782, %v2406
        %v2422 = vshrl.u32 1326507024, %v2407
        %v2423 = vor.u32 %v2421, %v2422
        %vm2424 = vcmp.lt.s32.totalorder %v2405, 1
        %vm2425 = vcmp.lt.s32.totalorder %v2405, 2
        %vm2426 = vcmp.lt.s32.totalorder %v2405, 3
        %vm2427 = vcmp.lt.s32.totalorder %v2405, 4
        %v2428 = vsel %vm2424, %v2408, %v2411
        %v2429 = vsel %vm2427, %v2417, 2102212464
        %v2430 = vsel %vm2426, %v2414, %v2429
        %v2431 = vsel %vm2425, %v2428, %v2430
        %v2432 = vsel %vm2424, %v2411, %v2414
        %v2433 = vsel %vm2427, %v2420, 920167782
        %v2434 = vsel %vm2426, %v2417, %v2433
        %v2435 = vsel %vm2425, %v2432, %v2434
        %v2436 = vsel %vm2424, %v2414, %v2417
        %v2437 = vsel %vm2427, %v2423, 1326507024
        %v2438 = vsel %vm2426, %v2420, %v2437
        %v2439 = vsel %vm2425, %v2436, %v2438
        %v2440 = vshll.u32 %v2400, 8
        %v2441 = vmul.u32.u64.compose %v2440, %v2439
        %v2442 = vextract.low.u32 %v2441
        %v2443 = vextract.high.u32 %v2441
        %v2444 = vmul.u32.u64.compose %v2440, %v2435
        %v2445 = vextract.low.u32 %v2444
        %v2446 = vextract.high.u32 %v2444
        %v2447 = vmul.u32 %v2440, %v2431
        %v2448 = vadd.s32 %v2443, %v2445
        %vm2449 = vc.u32 %v2443, %v2445
        %v2450 = vadd.s32 %v2446, 1
        %v2451 = vsel %vm2449, %v2450, %v2446
        %v2452 = vadd.s32 %v2447, %v2451
        %v2453 = vadd.s32 %v2452, 536870912
        %v2454 = vshrl.u32 %v2453, 30
        %v2455 = vshll.u32 %v2454, 30
        %v2456 = vsub.s32 %v2452, %v2455
        %vm2457 = vcmp.lt.s32.totalorder %v2456, 0
        %v2458 = vsub.s32 0, %v2456
        %v2459 = vsel %vm2457, %v2458, %v2456
        %v2460 = vclz %v2459
        %v2461 = vsub.s32 %v2460, 2
        %vm2462 = vcmp.gt.s32.totalorder 0, %v2461
        %v2463 = vsel %vm2462, 0, %v2461
        %v2464 = vsub.s32 32, %v2463
        %v2465 = vshll.u32 %v2456, %v2463
        %v2466 = vshrl.u32 %v2448, %v2464
        %v2467 = vor.u32 %v2465, %v2466
        %v2468 = vsub.s32 4294967266, %v2463
        %v2469 = vadd.s32 %v2468, 127
        %v2470 = vshll.u32 %v2469, 23
        %v2471 = vor.u32 4788187, %v2470
        %v2472 = vand.u32 2147483647, %v2471
        %v2474 = vcvt.s32.f32 %v2467
        %v2475 = vmul.f32 %v2474, %v2472
        %v2476 = vxor.u32 %v2475, 2147483648
        %v2477 = vsel %vm2394, %v2476, %v2475
        %v2478 = vsub.s32 4, %v2454
        %v2479 = vsel %vm2394, %v2478, %v2454
        %v2480 = vsel %vm2393, %v272, %v2477
        %v2481 = vsel %vm2393, 0, %v2479
        %v2482 = vcosq.f32.pop %v2480
        %v2483 = vsinq.f32.pop %v2480
        %vm2484 = vweird.f32 %v272
        %v2485 = vand.u32 %v2481, 3
        %vm2486 = vcmp.lt.s32.totalorder %v2485, 2
        %vm2487 = vcmp.eq.s32.totalorder %v2485, 0
        %v2488 = vxor.u32 %v2483, 2147483648
        %v2489 = vsel %vm2487, %v2482, %v2488
        %vm2490 = vcmp.eq.s32.totalorder %v2485, 2
        %v2491 = vxor.u32 %v2482, 2147483648
        %v2492 = vsel %vm2490, %v2491, %v2483
        %v2493 = vsel %vm2486, %v2489, %v2492
        %v2494 = vsel %vm2484, nan, %v2493
        %v2495 = vand.u32 2147483647, %v273
        %vm2496 = vcmp.le.f32.partialorder %v2495, 0.7853982
        %vm2497 = vcmp.lt.s32.totalorder %v273, 0
        %v2498 = vand.u32 %v273, 2139095040
        %v2499 = vshrl.u32 %v2498, 23
        %v2500 = vsub.s32 %v2499, 127
        %v2501 = vand.u32 2147483647, %v273
        %v2502 = vand.u32 %v2501, 8388607
        %v2503 = vor.u32 %v2502, 8388608
        %v2504 = vsub.s32 0, %v2503
        %v2505 = vadd.s32 %v2500, 1
        %vm2506 = vcmp.gt.s32.totalorder %v2505, 0
        %v2507 = vsel %vm2506, %v2505, 0
        %v2508 = vshrl.u32 %v2507, 5
        %v2509 = vand.u32 %v2507, 31
        %v2510 = vsub.s32 32, %v2509
        %v2511 = vshrl.u32 683565275, %v2510
        %v2512 = vshll.u32 683565275, %v2509
        %v2513 = vshrl.u32 2475754826, %v2510
        %v2514 = vor.u32 %v2512, %v2513
        %v2515 = vshll.u32 2475754826, %v2509
        %v2516 = vshrl.u32 2131351028, %v2510
        %v2517 = vor.u32 %v2515, %v2516
        %v2518 = vshll.u32 2131351028, %v2509
        %v2519 = vshrl.u32 2102212464, %v2510
        %v2520 = vor.u32 %v2518, %v2519
        %v2521 = vshll.u32 2102212464, %v2509
        %v2522 = vshrl.u32 920167782, %v2510
        %v2523 = vor.u32 %v2521, %v2522
        %v2524 = vshll.u32 920167782, %v2509
        %v2525 = vshrl.u32 1326507024, %v2510
        %v2526 = vor.u32 %v2524, %v2525
        %vm2527 = vcmp.lt.s32.totalorder %v2508, 1
        %vm2528 = vcmp.lt.s32.totalorder %v2508, 2
        %vm2529 = vcmp.lt.s32.totalorder %v2508, 3
        %vm2530 = vcmp.lt.s32.totalorder %v2508, 4
        %v2531 = vsel %vm2527, %v2511, %v2514
        %v2532 = vsel %vm2530, %v2520, 2102212464
        %v2533 = vsel %vm2529, %v2517, %v2532
        %v2534 = vsel %vm2528, %v2531, %v2533
        %v2535 = vsel %vm2527, %v2514, %v2517
        %v2536 = vsel %vm2530, %v2523, 920167782
        %v2537 = vsel %vm2529, %v2520, %v2536
        %v2538 = vsel %vm2528, %v2535, %v2537
        %v2539 = vsel %vm2527, %v2517, %v2520
        %v2540 = vsel %vm2530, %v2526, 1326507024
        %v2541 = vsel %vm2529, %v2523, %v2540
        %v2542 = vsel %vm2528, %v2539, %v2541
        %v2543 = vshll.u32 %v2503, 8
        %v2544 = vmul.u32.u64.compose %v2543, %v2542
        %v2545 = vextract.low.u32 %v2544
        %v2546 = vextract.high.u32 %v2544
        %v2547 = vmul.u32.u64.compose %v2543, %v2538
        %v2548 = vextract.low.u32 %v2547
        %v2549 = vextract.high.u32 %v2547
        %v2550 = vmul.u32 %v2543, %v2534
        %v2551 = vadd.s32 %v2546, %v2548
        %vm2552 = vc.u32 %v2546, %v2548
        %v2553 = vadd.s32 %v2549, 1
        %v2554 = vsel %vm2552, %v2553, %v2549
        %v2555 = vadd.s32 %v2550, %v2554
        %v2556 = vadd.s32 %v2555, 536870912
        %v2557 = vshrl.u32 %v2556, 30
        %v2558 = vshll.u32 %v2557, 30
        %v2559 = vsub.s32 %v2555, %v2558
        %vm2560 = vcmp.lt.s32.totalorder %v2559, 0
        %v2561 = vsub.s32 0, %v2559
        %v2562 = vsel %vm2560, %v2561, %v2559
        %v2563 = vclz %v2562
        %v2564 = vsub.s32 %v2563, 2
        %vm2565 = vcmp.gt.s32.totalorder 0, %v2564
        %v2566 = vsel %vm2565, 0, %v2564
        %v2567 = vsub.s32 32, %v2566
        %v2568 = vshll.u32 %v2559, %v2566
        %v2569 = vshrl.u32 %v2551, %v2567
        %v2570 = vor.u32 %v2568, %v2569
        %v2571 = vsub.s32 4294967266, %v2566
        %v2572 = vadd.s32 %v2571, 127
        %v2573 = vshll.u32 %v2572, 23
        %v2574 = vor.u32 4788187, %v2573
        %v2575 = vand.u32 2147483647, %v2574
        %v2577 = vcvt.s32.f32 %v2570
        %v2578 = vmul.f32 %v2577, %v2575
        %v2579 = vxor.u32 %v2578, 2147483648
        %v2580 = vsel %vm2497, %v2579, %v2578
        %v2581 = vsub.s32 4, %v2557
        %v2582 = vsel %vm2497, %v2581, %v2557
        %v2583 = vsel %vm2496, %v273, %v2580
        %v2584 = vsel %vm2496, 0, %v2582
        %v2585 = vcosq.f32.pop %v2583
        %v2586 = vsinq.f32.pop %v2583
        %vm2587 = vweird.f32 %v273
        %v2588 = vand.u32 %v2584, 3
        %vm2589 = vcmp.lt.s32.totalorder %v2588, 2
        %vm2590 = vcmp.eq.s32.totalorder %v2588, 0
        %v2591 = vxor.u32 %v2586, 2147483648
        %v2592 = vsel %vm2590, %v2585, %v2591
        %vm2593 = vcmp.eq.s32.totalorder %v2588, 2
        %v2594 = vxor.u32 %v2585, 2147483648
        %v2595 = vsel %vm2593, %v2594, %v2586
        %v2596 = vsel %vm2589, %v2592, %v2595
        %v2597 = vsel %vm2587, nan, %v2596
        %v2598 = vand.u32 2147483647, %v274
        %vm2599 = vcmp.le.f32.partialorder %v2598, 0.7853982
        %vm2600 = vcmp.lt.s32.totalorder %v274, 0
        %v2601 = vand.u32 %v274, 2139095040
        %v2602 = vshrl.u32 %v2601, 23
        %v2603 = vsub.s32 %v2602, 127
        %v2604 = vand.u32 2147483647, %v274
        %v2605 = vand.u32 %v2604, 8388607
        %v2606 = vor.u32 %v2605, 8388608
        %v2607 = vsub.s32 0, %v2606
        %v2608 = vadd.s32 %v2603, 1
        %vm2609 = vcmp.gt.s32.totalorder %v2608, 0
        %v2610 = vsel %vm2609, %v2608, 0
        %v2611 = vshrl.u32 %v2610, 5
        %v2612 = vand.u32 %v2610, 31
        %v2613 = vsub.s32 32, %v2612
        %v2614 = vshrl.u32 683565275, %v2613
        %v2615 = vshll.u32 683565275, %v2612
        %v2616 = vshrl.u32 2475754826, %v2613
        %v2617 = vor.u32 %v2615, %v2616
        %v2618 = vshll.u32 2475754826, %v2612
        %v2619 = vshrl.u32 2131351028, %v2613
        %v2620 = vor.u32 %v2618, %v2619
        %v2621 = vshll.u32 2131351028, %v2612
        %v2622 = vshrl.u32 2102212464, %v2613
        %v2623 = vor.u32 %v2621, %v2622
        %v2624 = vshll.u32 2102212464, %v2612
        %v2625 = vshrl.u32 920167782, %v2613
        %v2626 = vor.u32 %v2624, %v2625
        %v2627 = vshll.u32 920167782, %v2612
        %v2628 = vshrl.u32 1326507024, %v2613
        %v2629 = vor.u32 %v2627, %v2628
        %vm2630 = vcmp.lt.s32.totalorder %v2611, 1
        %vm2631 = vcmp.lt.s32.totalorder %v2611, 2
        %vm2632 = vcmp.lt.s32.totalorder %v2611, 3
        %vm2633 = vcmp.lt.s32.totalorder %v2611, 4
        %v2634 = vsel %vm2630, %v2614, %v2617
        %v2635 = vsel %vm2633, %v2623, 2102212464
        %v2636 = vsel %vm2632, %v2620, %v2635
        %v2637 = vsel %vm2631, %v2634, %v2636
        %v2638 = vsel %vm2630, %v2617, %v2620
        %v2639 = vsel %vm2633, %v2626, 920167782
        %v2640 = vsel %vm2632, %v2623, %v2639
        %v2641 = vsel %vm2631, %v2638, %v2640
        %v2642 = vsel %vm2630, %v2620, %v2623
        %v2643 = vsel %vm2633, %v2629, 1326507024
        %v2644 = vsel %vm2632, %v2626, %v2643
        %v2645 = vsel %vm2631, %v2642, %v2644
        %v2646 = vshll.u32 %v2606, 8
        %v2647 = vmul.u32.u64.compose %v2646, %v2645
        %v2648 = vextract.low.u32 %v2647
        %v2649 = vextract.high.u32 %v2647
        %v2650 = vmul.u32.u64.compose %v2646, %v2641
        %v2651 = vextract.low.u32 %v2650
        %v2652 = vextract.high.u32 %v2650
        %v2653 = vmul.u32 %v2646, %v2637
        %v2654 = vadd.s32 %v2649, %v2651
        %vm2655 = vc.u32 %v2649, %v2651
        %v2656 = vadd.s32 %v2652, 1
        %v2657 = vsel %vm2655, %v2656, %v2652
        %v2658 = vadd.s32 %v2653, %v2657
        %v2659 = vadd.s32 %v2658, 536870912
        %v2660 = vshrl.u32 %v2659, 30
        %v2661 = vshll.u32 %v2660, 30
        %v2662 = vsub.s32 %v2658, %v2661
        %vm2663 = vcmp.lt.s32.totalorder %v2662, 0
        %v2664 = vsub.s32 0, %v2662
        %v2665 = vsel %vm2663, %v2664, %v2662
        %v2666 = vclz %v2665
        %v2667 = vsub.s32 %v2666, 2
        %vm2668 = vcmp.gt.s32.totalorder 0, %v2667
        %v2669 = vsel %vm2668, 0, %v2667
        %v2670 = vsub.s32 32, %v2669
        %v2671 = vshll.u32 %v2662, %v2669
        %v2672 = vshrl.u32 %v2654, %v2670
        %v2673 = vor.u32 %v2671, %v2672
        %v2674 = vsub.s32 4294967266, %v2669
        %v2675 = vadd.s32 %v2674, 127
        %v2676 = vshll.u32 %v2675, 23
        %v2677 = vor.u32 4788187, %v2676
        %v2678 = vand.u32 2147483647, %v2677
        %v2680 = vcvt.s32.f32 %v2673
        %v2681 = vmul.f32 %v2680, %v2678
        %v2682 = vxor.u32 %v2681, 2147483648
        %v2683 = vsel %vm2600, %v2682, %v2681
        %v2684 = vsub.s32 4, %v2660
        %v2685 = vsel %vm2600, %v2684, %v2660
        %v2686 = vsel %vm2599, %v274, %v2683
        %v2687 = vsel %vm2599, 0, %v2685
        %v2688 = vcosq.f32.pop %v2686
        %v2689 = vsinq.f32.pop %v2686
        %vm2690 = vweird.f32 %v274
        %v2691 = vand.u32 %v2687, 3
        %vm2692 = vcmp.lt.s32.totalorder %v2691, 2
        %vm2693 = vcmp.eq.s32.totalorder %v2691, 0
        %v2694 = vxor.u32 %v2689, 2147483648
        %v2695 = vsel %vm2693, %v2688, %v2694
        %vm2696 = vcmp.eq.s32.totalorder %v2691, 2
        %v2697 = vxor.u32 %v2688, 2147483648
        %v2698 = vsel %vm2696, %v2697, %v2689
        %v2699 = vsel %vm2692, %v2695, %v2698
        %v2700 = vsel %vm2690, nan, %v2699
        %v2701 = vand.u32 2147483647, %v275
        %vm2702 = vcmp.le.f32.partialorder %v2701, 0.7853982
        %vm2703 = vcmp.lt.s32.totalorder %v275, 0
        %v2704 = vand.u32 %v275, 2139095040
        %v2705 = vshrl.u32 %v2704, 23
        %v2706 = vsub.s32 %v2705, 127
        %v2707 = vand.u32 2147483647, %v275
        %v2708 = vand.u32 %v2707, 8388607
        %v2709 = vor.u32 %v2708, 8388608
        %v2710 = vsub.s32 0, %v2709
        %v2711 = vadd.s32 %v2706, 1
        %vm2712 = vcmp.gt.s32.totalorder %v2711, 0
        %v2713 = vsel %vm2712, %v2711, 0
        %v2714 = vshrl.u32 %v2713, 5
        %v2715 = vand.u32 %v2713, 31
        %v2716 = vsub.s32 32, %v2715
        %v2717 = vshrl.u32 683565275, %v2716
        %v2718 = vshll.u32 683565275, %v2715
        %v2719 = vshrl.u32 2475754826, %v2716
        %v2720 = vor.u32 %v2718, %v2719
        %v2721 = vshll.u32 2475754826, %v2715
        %v2722 = vshrl.u32 2131351028, %v2716
        %v2723 = vor.u32 %v2721, %v2722
        %v2724 = vshll.u32 2131351028, %v2715
        %v2725 = vshrl.u32 2102212464, %v2716
        %v2726 = vor.u32 %v2724, %v2725
        %v2727 = vshll.u32 2102212464, %v2715
        %v2728 = vshrl.u32 920167782, %v2716
        %v2729 = vor.u32 %v2727, %v2728
        %v2730 = vshll.u32 920167782, %v2715
        %v2731 = vshrl.u32 1326507024, %v2716
        %v2732 = vor.u32 %v2730, %v2731
        %vm2733 = vcmp.lt.s32.totalorder %v2714, 1
        %vm2734 = vcmp.lt.s32.totalorder %v2714, 2
        %vm2735 = vcmp.lt.s32.totalorder %v2714, 3
        %vm2736 = vcmp.lt.s32.totalorder %v2714, 4
        %v2737 = vsel %vm2733, %v2717, %v2720
        %v2738 = vsel %vm2736, %v2726, 2102212464
        %v2739 = vsel %vm2735, %v2723, %v2738
        %v2740 = vsel %vm2734, %v2737, %v2739
        %v2741 = vsel %vm2733, %v2720, %v2723
        %v2742 = vsel %vm2736, %v2729, 920167782
        %v2743 = vsel %vm2735, %v2726, %v2742
        %v2744 = vsel %vm2734, %v2741, %v2743
        %v2745 = vsel %vm2733, %v2723, %v2726
        %v2746 = vsel %vm2736, %v2732, 1326507024
        %v2747 = vsel %vm2735, %v2729, %v2746
        %v2748 = vsel %vm2734, %v2745, %v2747
        %v2749 = vshll.u32 %v2709, 8
        %v2750 = vmul.u32.u64.compose %v2749, %v2748
        %v2751 = vextract.low.u32 %v2750
        %v2752 = vextract.high.u32 %v2750
        %v2753 = vmul.u32.u64.compose %v2749, %v2744
        %v2754 = vextract.low.u32 %v2753
        %v2755 = vextract.high.u32 %v2753
        %v2756 = vmul.u32 %v2749, %v2740
        %v2757 = vadd.s32 %v2752, %v2754
        %vm2758 = vc.u32 %v2752, %v2754
        %v2759 = vadd.s32 %v2755, 1
        %v2760 = vsel %vm2758, %v2759, %v2755
        %v2761 = vadd.s32 %v2756, %v2760
        %v2762 = vadd.s32 %v2761, 536870912
        %v2763 = vshrl.u32 %v2762, 30
        %v2764 = vshll.u32 %v2763, 30
        %v2765 = vsub.s32 %v2761, %v2764
        %vm2766 = vcmp.lt.s32.totalorder %v2765, 0
        %v2767 = vsub.s32 0, %v2765
        %v2768 = vsel %vm2766, %v2767, %v2765
        %v2769 = vclz %v2768
        %v2770 = vsub.s32 %v2769, 2
        %vm2771 = vcmp.gt.s32.totalorder 0, %v2770
        %v2772 = vsel %vm2771, 0, %v2770
        %v2773 = vsub.s32 32, %v2772
        %v2774 = vshll.u32 %v2765, %v2772
        %v2775 = vshrl.u32 %v2757, %v2773
        %v2776 = vor.u32 %v2774, %v2775
        %v2777 = vsub.s32 4294967266, %v2772
        %v2778 = vadd.s32 %v2777, 127
        %v2779 = vshll.u32 %v2778, 23
        %v2780 = vor.u32 4788187, %v2779
        %v2781 = vand.u32 2147483647, %v2780
        %v2783 = vcvt.s32.f32 %v2776
        %v2784 = vmul.f32 %v2783, %v2781
        %v2785 = vxor.u32 %v2784, 2147483648
        %v2786 = vsel %vm2703, %v2785, %v2784
        %v2787 = vsub.s32 4, %v2763
        %v2788 = vsel %vm2703, %v2787, %v2763
        %v2789 = vsel %vm2702, %v275, %v2786
        %v2790 = vsel %vm2702, 0, %v2788
        %v2791 = vcosq.f32.pop %v2789
        %v2792 = vsinq.f32.pop %v2789
        %vm2793 = vweird.f32 %v275
        %v2794 = vand.u32 %v2790, 3
        %vm2795 = vcmp.lt.s32.totalorder %v2794, 2
        %vm2796 = vcmp.eq.s32.totalorder %v2794, 0
        %v2797 = vxor.u32 %v2792, 2147483648
        %v2798 = vsel %vm2796, %v2791, %v2797
        %vm2799 = vcmp.eq.s32.totalorder %v2794, 2
        %v2800 = vxor.u32 %v2791, 2147483648
        %v2801 = vsel %vm2799, %v2800, %v2792
        %v2802 = vsel %vm2795, %v2798, %v2801
        %v2803 = vsel %vm2793, nan, %v2802
        %v2804 = vand.u32 2147483647, %v276
        %vm2805 = vcmp.le.f32.partialorder %v2804, 0.7853982
        %vm2806 = vcmp.lt.s32.totalorder %v276, 0
        %v2807 = vand.u32 %v276, 2139095040
        %v2808 = vshrl.u32 %v2807, 23
        %v2809 = vsub.s32 %v2808, 127
        %v2810 = vand.u32 2147483647, %v276
        %v2811 = vand.u32 %v2810, 8388607
        %v2812 = vor.u32 %v2811, 8388608
        %v2813 = vsub.s32 0, %v2812
        %v2814 = vadd.s32 %v2809, 1
        %vm2815 = vcmp.gt.s32.totalorder %v2814, 0
        %v2816 = vsel %vm2815, %v2814, 0
        %v2817 = vshrl.u32 %v2816, 5
        %v2818 = vand.u32 %v2816, 31
        %v2819 = vsub.s32 32, %v2818
        %v2820 = vshrl.u32 683565275, %v2819
        %v2821 = vshll.u32 683565275, %v2818
        %v2822 = vshrl.u32 2475754826, %v2819
        %v2823 = vor.u32 %v2821, %v2822
        %v2824 = vshll.u32 2475754826, %v2818
        %v2825 = vshrl.u32 2131351028, %v2819
        %v2826 = vor.u32 %v2824, %v2825
        %v2827 = vshll.u32 2131351028, %v2818
        %v2828 = vshrl.u32 2102212464, %v2819
        %v2829 = vor.u32 %v2827, %v2828
        %v2830 = vshll.u32 2102212464, %v2818
        %v2831 = vshrl.u32 920167782, %v2819
        %v2832 = vor.u32 %v2830, %v2831
        %v2833 = vshll.u32 920167782, %v2818
        %v2834 = vshrl.u32 1326507024, %v2819
        %v2835 = vor.u32 %v2833, %v2834
        %vm2836 = vcmp.lt.s32.totalorder %v2817, 1
        %vm2837 = vcmp.lt.s32.totalorder %v2817, 2
        %vm2838 = vcmp.lt.s32.totalorder %v2817, 3
        %vm2839 = vcmp.lt.s32.totalorder %v2817, 4
        %v2840 = vsel %vm2836, %v2820, %v2823
        %v2841 = vsel %vm2839, %v2829, 2102212464
        %v2842 = vsel %vm2838, %v2826, %v2841
        %v2843 = vsel %vm2837, %v2840, %v2842
        %v2844 = vsel %vm2836, %v2823, %v2826
        %v2845 = vsel %vm2839, %v2832, 920167782
        %v2846 = vsel %vm2838, %v2829, %v2845
        %v2847 = vsel %vm2837, %v2844, %v2846
        %v2848 = vsel %vm2836, %v2826, %v2829
        %v2849 = vsel %vm2839, %v2835, 1326507024
        %v2850 = vsel %vm2838, %v2832, %v2849
        %v2851 = vsel %vm2837, %v2848, %v2850
        %v2852 = vshll.u32 %v2812, 8
        %v2853 = vmul.u32.u64.compose %v2852, %v2851
        %v2854 = vextract.low.u32 %v2853
        %v2855 = vextract.high.u32 %v2853
        %v2856 = vmul.u32.u64.compose %v2852, %v2847
        %v2857 = vextract.low.u32 %v2856
        %v2858 = vextract.high.u32 %v2856
        %v2859 = vmul.u32 %v2852, %v2843
        %v2860 = vadd.s32 %v2855, %v2857
        %vm2861 = vc.u32 %v2855, %v2857
        %v2862 = vadd.s32 %v2858, 1
        %v2863 = vsel %vm2861, %v2862, %v2858
        %v2864 = vadd.s32 %v2859, %v2863
        %v2865 = vadd.s32 %v2864, 536870912
        %v2866 = vshrl.u32 %v2865, 30
        %v2867 = vshll.u32 %v2866, 30
        %v2868 = vsub.s32 %v2864, %v2867
        %vm2869 = vcmp.lt.s32.totalorder %v2868, 0
        %v2870 = vsub.s32 0, %v2868
        %v2871 = vsel %vm2869, %v2870, %v2868
        %v2872 = vclz %v2871
        %v2873 = vsub.s32 %v2872, 2
        %vm2874 = vcmp.gt.s32.totalorder 0, %v2873
        %v2875 = vsel %vm2874, 0, %v2873
        %v2876 = vsub.s32 32, %v2875
        %v2877 = vshll.u32 %v2868, %v2875
        %v2878 = vshrl.u32 %v2860, %v2876
        %v2879 = vor.u32 %v2877, %v2878
        %v2880 = vsub.s32 4294967266, %v2875
        %v2881 = vadd.s32 %v2880, 127
        %v2882 = vshll.u32 %v2881, 23
        %v2883 = vor.u32 4788187, %v2882
        %v2884 = vand.u32 2147483647, %v2883
        %v2886 = vcvt.s32.f32 %v2879
        %v2887 = vmul.f32 %v2886, %v2884
        %v2888 = vxor.u32 %v2887, 2147483648
        %v2889 = vsel %vm2806, %v2888, %v2887
        %v2890 = vsub.s32 4, %v2866
        %v2891 = vsel %vm2806, %v2890, %v2866
        %v2892 = vsel %vm2805, %v276, %v2889
        %v2893 = vsel %vm2805, 0, %v2891
        %v2894 = vcosq.f32.pop %v2892
        %v2895 = vsinq.f32.pop %v2892
        %vm2896 = vweird.f32 %v276
        %v2897 = vand.u32 %v2893, 3
        %vm2898 = vcmp.lt.s32.totalorder %v2897, 2
        %vm2899 = vcmp.eq.s32.totalorder %v2897, 0
        %v2900 = vxor.u32 %v2895, 2147483648
        %v2901 = vsel %vm2899, %v2894, %v2900
        %vm2902 = vcmp.eq.s32.totalorder %v2897, 2
        %v2903 = vxor.u32 %v2894, 2147483648
        %v2904 = vsel %vm2902, %v2903, %v2895
        %v2905 = vsel %vm2898, %v2901, %v2904
        %v2906 = vsel %vm2896, nan, %v2905
        %v2907 = vand.u32 2147483647, %v277
        %vm2908 = vcmp.le.f32.partialorder %v2907, 0.7853982
        %vm2909 = vcmp.lt.s32.totalorder %v277, 0
        %v2910 = vand.u32 %v277, 2139095040
        %v2911 = vshrl.u32 %v2910, 23
        %v2912 = vsub.s32 %v2911, 127
        %v2913 = vand.u32 2147483647, %v277
        %v2914 = vand.u32 %v2913, 8388607
        %v2915 = vor.u32 %v2914, 8388608
        %v2916 = vsub.s32 0, %v2915
        %v2917 = vadd.s32 %v2912, 1
        %vm2918 = vcmp.gt.s32.totalorder %v2917, 0
        %v2919 = vsel %vm2918, %v2917, 0
        %v2920 = vshrl.u32 %v2919, 5
        %v2921 = vand.u32 %v2919, 31
        %v2922 = vsub.s32 32, %v2921
        %v2923 = vshrl.u32 683565275, %v2922
        %v2924 = vshll.u32 683565275, %v2921
        %v2925 = vshrl.u32 2475754826, %v2922
        %v2926 = vor.u32 %v2924, %v2925
        %v2927 = vshll.u32 2475754826, %v2921
        %v2928 = vshrl.u32 2131351028, %v2922
        %v2929 = vor.u32 %v2927, %v2928
        %v2930 = vshll.u32 2131351028, %v2921
        %v2931 = vshrl.u32 2102212464, %v2922
        %v2932 = vor.u32 %v2930, %v2931
        %v2933 = vshll.u32 2102212464, %v2921
        %v2934 = vshrl.u32 920167782, %v2922
        %v2935 = vor.u32 %v2933, %v2934
        %v2936 = vshll.u32 920167782, %v2921
        %v2937 = vshrl.u32 1326507024, %v2922
        %v2938 = vor.u32 %v2936, %v2937
        %vm2939 = vcmp.lt.s32.totalorder %v2920, 1
        %vm2940 = vcmp.lt.s32.totalorder %v2920, 2
        %vm2941 = vcmp.lt.s32.totalorder %v2920, 3
        %vm2942 = vcmp.lt.s32.totalorder %v2920, 4
        %v2943 = vsel %vm2939, %v2923, %v2926
        %v2944 = vsel %vm2942, %v2932, 2102212464
        %v2945 = vsel %vm2941, %v2929, %v2944
        %v2946 = vsel %vm2940, %v2943, %v2945
        %v2947 = vsel %vm2939, %v2926, %v2929
        %v2948 = vsel %vm2942, %v2935, 920167782
        %v2949 = vsel %vm2941, %v2932, %v2948
        %v2950 = vsel %vm2940, %v2947, %v2949
        %v2951 = vsel %vm2939, %v2929, %v2932
        %v2952 = vsel %vm2942, %v2938, 1326507024
        %v2953 = vsel %vm2941, %v2935, %v2952
        %v2954 = vsel %vm2940, %v2951, %v2953
        %v2955 = vshll.u32 %v2915, 8
        %v2956 = vmul.u32.u64.compose %v2955, %v2954
        %v2957 = vextract.low.u32 %v2956
        %v2958 = vextract.high.u32 %v2956
        %v2959 = vmul.u32.u64.compose %v2955, %v2950
        %v2960 = vextract.low.u32 %v2959
        %v2961 = vextract.high.u32 %v2959
        %v2962 = vmul.u32 %v2955, %v2946
        %v2963 = vadd.s32 %v2958, %v2960
        %vm2964 = vc.u32 %v2958, %v2960
        %v2965 = vadd.s32 %v2961, 1
        %v2966 = vsel %vm2964, %v2965, %v2961
        %v2967 = vadd.s32 %v2962, %v2966
        %v2968 = vadd.s32 %v2967, 536870912
        %v2969 = vshrl.u32 %v2968, 30
        %v2970 = vshll.u32 %v2969, 30
        %v2971 = vsub.s32 %v2967, %v2970
        %vm2972 = vcmp.lt.s32.totalorder %v2971, 0
        %v2973 = vsub.s32 0, %v2971
        %v2974 = vsel %vm2972, %v2973, %v2971
        %v2975 = vclz %v2974
        %v2976 = vsub.s32 %v2975, 2
        %vm2977 = vcmp.gt.s32.totalorder 0, %v2976
        %v2978 = vsel %vm2977, 0, %v2976
        %v2979 = vsub.s32 32, %v2978
        %v2980 = vshll.u32 %v2971, %v2978
        %v2981 = vshrl.u32 %v2963, %v2979
        %v2982 = vor.u32 %v2980, %v2981
        %v2983 = vsub.s32 4294967266, %v2978
        %v2984 = vadd.s32 %v2983, 127
        %v2985 = vshll.u32 %v2984, 23
        %v2986 = vor.u32 4788187, %v2985
        %v2987 = vand.u32 2147483647, %v2986
        %v2989 = vcvt.s32.f32 %v2982
        %v2990 = vmul.f32 %v2989, %v2987
        %v2991 = vxor.u32 %v2990, 2147483648
        %v2992 = vsel %vm2909, %v2991, %v2990
        %v2993 = vsub.s32 4, %v2969
        %v2994 = vsel %vm2909, %v2993, %v2969
        %v2995 = vsel %vm2908, %v277, %v2992
        %v2996 = vsel %vm2908, 0, %v2994
        %v2997 = vcosq.f32.pop %v2995
        %v2998 = vsinq.f32.pop %v2995
        %vm2999 = vweird.f32 %v277
        %v3000 = vand.u32 %v2996, 3
        %vm3001 = vcmp.lt.s32.totalorder %v3000, 2
        %vm3002 = vcmp.eq.s32.totalorder %v3000, 0
        %v3003 = vxor.u32 %v2998, 2147483648
        %v3004 = vsel %vm3002, %v2997, %v3003
        %vm3005 = vcmp.eq.s32.totalorder %v3000, 2
        %v3006 = vxor.u32 %v2997, 2147483648
        %v3007 = vsel %vm3005, %v3006, %v2998
        %v3008 = vsel %vm3001, %v3004, %v3007
        %v3009 = vsel %vm2999, nan, %v3008
        %v3010 = vand.u32 2147483647, %v278
        %vm3011 = vcmp.le.f32.partialorder %v3010, 0.7853982
        %vm3012 = vcmp.lt.s32.totalorder %v278, 0
        %v3013 = vand.u32 %v278, 2139095040
        %v3014 = vshrl.u32 %v3013, 23
        %v3015 = vsub.s32 %v3014, 127
        %v3016 = vand.u32 2147483647, %v278
        %v3017 = vand.u32 %v3016, 8388607
        %v3018 = vor.u32 %v3017, 8388608
        %v3019 = vsub.s32 0, %v3018
        %v3020 = vadd.s32 %v3015, 1
        %vm3021 = vcmp.gt.s32.totalorder %v3020, 0
        %v3022 = vsel %vm3021, %v3020, 0
        %v3023 = vshrl.u32 %v3022, 5
        %v3024 = vand.u32 %v3022, 31
        %v3025 = vsub.s32 32, %v3024
        %v3026 = vshrl.u32 683565275, %v3025
        %v3027 = vshll.u32 683565275, %v3024
        %v3028 = vshrl.u32 2475754826, %v3025
        %v3029 = vor.u32 %v3027, %v3028
        %v3030 = vshll.u32 2475754826, %v3024
        %v3031 = vshrl.u32 2131351028, %v3025
        %v3032 = vor.u32 %v3030, %v3031
        %v3033 = vshll.u32 2131351028, %v3024
        %v3034 = vshrl.u32 2102212464, %v3025
        %v3035 = vor.u32 %v3033, %v3034
        %v3036 = vshll.u32 2102212464, %v3024
        %v3037 = vshrl.u32 920167782, %v3025
        %v3038 = vor.u32 %v3036, %v3037
        %v3039 = vshll.u32 920167782, %v3024
        %v3040 = vshrl.u32 1326507024, %v3025
        %v3041 = vor.u32 %v3039, %v3040
        %vm3042 = vcmp.lt.s32.totalorder %v3023, 1
        %vm3043 = vcmp.lt.s32.totalorder %v3023, 2
        %vm3044 = vcmp.lt.s32.totalorder %v3023, 3
        %vm3045 = vcmp.lt.s32.totalorder %v3023, 4
        %v3046 = vsel %vm3042, %v3026, %v3029
        %v3047 = vsel %vm3045, %v3035, 2102212464
        %v3048 = vsel %vm3044, %v3032, %v3047
        %v3049 = vsel %vm3043, %v3046, %v3048
        %v3050 = vsel %vm3042, %v3029, %v3032
        %v3051 = vsel %vm3045, %v3038, 920167782
        %v3052 = vsel %vm3044, %v3035, %v3051
        %v3053 = vsel %vm3043, %v3050, %v3052
        %v3054 = vsel %vm3042, %v3032, %v3035
        %v3055 = vsel %vm3045, %v3041, 1326507024
        %v3056 = vsel %vm3044, %v3038, %v3055
        %v3057 = vsel %vm3043, %v3054, %v3056
        %v3058 = vshll.u32 %v3018, 8
        %v3059 = vmul.u32.u64.compose %v3058, %v3057
        %v3060 = vextract.low.u32 %v3059
        %v3061 = vextract.high.u32 %v3059
        %v3062 = vmul.u32.u64.compose %v3058, %v3053
        %v3063 = vextract.low.u32 %v3062
        %v3064 = vextract.high.u32 %v3062
        %v3065 = vmul.u32 %v3058, %v3049
        %v3066 = vadd.s32 %v3061, %v3063
        %vm3067 = vc.u32 %v3061, %v3063
        %v3068 = vadd.s32 %v3064, 1
        %v3069 = vsel %vm3067, %v3068, %v3064
        %v3070 = vadd.s32 %v3065, %v3069
        %v3071 = vadd.s32 %v3070, 536870912
        %v3072 = vshrl.u32 %v3071, 30
        %v3073 = vshll.u32 %v3072, 30
        %v3074 = vsub.s32 %v3070, %v3073
        %vm3075 = vcmp.lt.s32.totalorder %v3074, 0
        %v3076 = vsub.s32 0, %v3074
        %v3077 = vsel %vm3075, %v3076, %v3074
        %v3078 = vclz %v3077
        %v3079 = vsub.s32 %v3078, 2
        %vm3080 = vcmp.gt.s32.totalorder 0, %v3079
        %v3081 = vsel %vm3080, 0, %v3079
        %v3082 = vsub.s32 32, %v3081
        %v3083 = vshll.u32 %v3074, %v3081
        %v3084 = vshrl.u32 %v3066, %v3082
        %v3085 = vor.u32 %v3083, %v3084
        %v3086 = vsub.s32 4294967266, %v3081
        %v3087 = vadd.s32 %v3086, 127
        %v3088 = vshll.u32 %v3087, 23
        %v3089 = vor.u32 4788187, %v3088
        %v3090 = vand.u32 2147483647, %v3089
        %v3092 = vcvt.s32.f32 %v3085
        %v3093 = vmul.f32 %v3092, %v3090
        %v3094 = vxor.u32 %v3093, 2147483648
        %v3095 = vsel %vm3012, %v3094, %v3093
        %v3096 = vsub.s32 4, %v3072
        %v3097 = vsel %vm3012, %v3096, %v3072
        %v3098 = vsel %vm3011, %v278, %v3095
        %v3099 = vsel %vm3011, 0, %v3097
        %v3100 = vcosq.f32.pop %v3098
        %v3101 = vsinq.f32.pop %v3098
        %vm3102 = vweird.f32 %v278
        %v3103 = vand.u32 %v3099, 3
        %vm3104 = vcmp.lt.s32.totalorder %v3103, 2
        %vm3105 = vcmp.eq.s32.totalorder %v3103, 0
        %v3106 = vxor.u32 %v3101, 2147483648
        %v3107 = vsel %vm3105, %v3100, %v3106
        %vm3108 = vcmp.eq.s32.totalorder %v3103, 2
        %v3109 = vxor.u32 %v3100, 2147483648
        %v3110 = vsel %vm3108, %v3109, %v3101
        %v3111 = vsel %vm3104, %v3107, %v3110
        %v3112 = vsel %vm3102, nan, %v3111
        %v3113 = vand.u32 2147483647, %v279
        %vm3114 = vcmp.le.f32.partialorder %v3113, 0.7853982
        %vm3115 = vcmp.lt.s32.totalorder %v279, 0
        %v3116 = vand.u32 %v279, 2139095040
        %v3117 = vshrl.u32 %v3116, 23
        %v3118 = vsub.s32 %v3117, 127
        %v3119 = vand.u32 2147483647, %v279
        %v3120 = vand.u32 %v3119, 8388607
        %v3121 = vor.u32 %v3120, 8388608
        %v3122 = vsub.s32 0, %v3121
        %v3123 = vadd.s32 %v3118, 1
        %vm3124 = vcmp.gt.s32.totalorder %v3123, 0
        %v3125 = vsel %vm3124, %v3123, 0
        %v3126 = vshrl.u32 %v3125, 5
        %v3127 = vand.u32 %v3125, 31
        %v3128 = vsub.s32 32, %v3127
        %v3129 = vshrl.u32 683565275, %v3128
        %v3130 = vshll.u32 683565275, %v3127
        %v3131 = vshrl.u32 2475754826, %v3128
        %v3132 = vor.u32 %v3130, %v3131
        %v3133 = vshll.u32 2475754826, %v3127
        %v3134 = vshrl.u32 2131351028, %v3128
        %v3135 = vor.u32 %v3133, %v3134
        %v3136 = vshll.u32 2131351028, %v3127
        %v3137 = vshrl.u32 2102212464, %v3128
        %v3138 = vor.u32 %v3136, %v3137
        %v3139 = vshll.u32 2102212464, %v3127
        %v3140 = vshrl.u32 920167782, %v3128
        %v3141 = vor.u32 %v3139, %v3140
        %v3142 = vshll.u32 920167782, %v3127
        %v3143 = vshrl.u32 1326507024, %v3128
        %v3144 = vor.u32 %v3142, %v3143
        %vm3145 = vcmp.lt.s32.totalorder %v3126, 1
        %vm3146 = vcmp.lt.s32.totalorder %v3126, 2
        %vm3147 = vcmp.lt.s32.totalorder %v3126, 3
        %vm3148 = vcmp.lt.s32.totalorder %v3126, 4
        %v3149 = vsel %vm3145, %v3129, %v3132
        %v3150 = vsel %vm3148, %v3138, 2102212464
        %v3151 = vsel %vm3147, %v3135, %v3150
        %v3152 = vsel %vm3146, %v3149, %v3151
        %v3153 = vsel %vm3145, %v3132, %v3135
        %v3154 = vsel %vm3148, %v3141, 920167782
        %v3155 = vsel %vm3147, %v3138, %v3154
        %v3156 = vsel %vm3146, %v3153, %v3155
        %v3157 = vsel %vm3145, %v3135, %v3138
        %v3158 = vsel %vm3148, %v3144, 1326507024
        %v3159 = vsel %vm3147, %v3141, %v3158
        %v3160 = vsel %vm3146, %v3157, %v3159
        %v3161 = vshll.u32 %v3121, 8
        %v3162 = vmul.u32.u64.compose %v3161, %v3160
        %v3163 = vextract.low.u32 %v3162
        %v3164 = vextract.high.u32 %v3162
        %v3165 = vmul.u32.u64.compose %v3161, %v3156
        %v3166 = vextract.low.u32 %v3165
        %v3167 = vextract.high.u32 %v3165
        %v3168 = vmul.u32 %v3161, %v3152
        %v3169 = vadd.s32 %v3164, %v3166
        %vm3170 = vc.u32 %v3164, %v3166
        %v3171 = vadd.s32 %v3167, 1
        %v3172 = vsel %vm3170, %v3171, %v3167
        %v3173 = vadd.s32 %v3168, %v3172
        %v3174 = vadd.s32 %v3173, 536870912
        %v3175 = vshrl.u32 %v3174, 30
        %v3176 = vshll.u32 %v3175, 30
        %v3177 = vsub.s32 %v3173, %v3176
        %vm3178 = vcmp.lt.s32.totalorder %v3177, 0
        %v3179 = vsub.s32 0, %v3177
        %v3180 = vsel %vm3178, %v3179, %v3177
        %v3181 = vclz %v3180
        %v3182 = vsub.s32 %v3181, 2
        %vm3183 = vcmp.gt.s32.totalorder 0, %v3182
        %v3184 = vsel %vm3183, 0, %v3182
        %v3185 = vsub.s32 32, %v3184
        %v3186 = vshll.u32 %v3177, %v3184
        %v3187 = vshrl.u32 %v3169, %v3185
        %v3188 = vor.u32 %v3186, %v3187
        %v3189 = vsub.s32 4294967266, %v3184
        %v3190 = vadd.s32 %v3189, 127
        %v3191 = vshll.u32 %v3190, 23
        %v3192 = vor.u32 4788187, %v3191
        %v3193 = vand.u32 2147483647, %v3192
        %v3195 = vcvt.s32.f32 %v3188
        %v3196 = vmul.f32 %v3195, %v3193
        %v3197 = vxor.u32 %v3196, 2147483648
        %v3198 = vsel %vm3115, %v3197, %v3196
        %v3199 = vsub.s32 4, %v3175
        %v3200 = vsel %vm3115, %v3199, %v3175
        %v3201 = vsel %vm3114, %v279, %v3198
        %v3202 = vsel %vm3114, 0, %v3200
        %v3203 = vcosq.f32.pop %v3201
        %v3204 = vsinq.f32.pop %v3201
        %vm3205 = vweird.f32 %v279
        %v3206 = vand.u32 %v3202, 3
        %vm3207 = vcmp.lt.s32.totalorder %v3206, 2
        %vm3208 = vcmp.eq.s32.totalorder %v3206, 0
        %v3209 = vxor.u32 %v3204, 2147483648
        %v3210 = vsel %vm3208, %v3203, %v3209
        %vm3211 = vcmp.eq.s32.totalorder %v3206, 2
        %v3212 = vxor.u32 %v3203, 2147483648
        %v3213 = vsel %vm3211, %v3212, %v3204
        %v3214 = vsel %vm3207, %v3210, %v3213
        %v3215 = vsel %vm3205, nan, %v3214
        %v3216 = vand.u32 2147483647, %v280
        %vm3217 = vcmp.le.f32.partialorder %v3216, 0.7853982
        %vm3218 = vcmp.lt.s32.totalorder %v280, 0
        %v3219 = vand.u32 %v280, 2139095040
        %v3220 = vshrl.u32 %v3219, 23
        %v3221 = vsub.s32 %v3220, 127
        %v3222 = vand.u32 2147483647, %v280
        %v3223 = vand.u32 %v3222, 8388607
        %v3224 = vor.u32 %v3223, 8388608
        %v3225 = vsub.s32 0, %v3224
        %v3226 = vadd.s32 %v3221, 1
        %vm3227 = vcmp.gt.s32.totalorder %v3226, 0
        %v3228 = vsel %vm3227, %v3226, 0
        %v3229 = vshrl.u32 %v3228, 5
        %v3230 = vand.u32 %v3228, 31
        %v3231 = vsub.s32 32, %v3230
        %v3232 = vshrl.u32 683565275, %v3231
        %v3233 = vshll.u32 683565275, %v3230
        %v3234 = vshrl.u32 2475754826, %v3231
        %v3235 = vor.u32 %v3233, %v3234
        %v3236 = vshll.u32 2475754826, %v3230
        %v3237 = vshrl.u32 2131351028, %v3231
        %v3238 = vor.u32 %v3236, %v3237
        %v3239 = vshll.u32 2131351028, %v3230
        %v3240 = vshrl.u32 2102212464, %v3231
        %v3241 = vor.u32 %v3239, %v3240
        %v3242 = vshll.u32 2102212464, %v3230
        %v3243 = vshrl.u32 920167782, %v3231
        %v3244 = vor.u32 %v3242, %v3243
        %v3245 = vshll.u32 920167782, %v3230
        %v3246 = vshrl.u32 1326507024, %v3231
        %v3247 = vor.u32 %v3245, %v3246
        %vm3248 = vcmp.lt.s32.totalorder %v3229, 1
        %vm3249 = vcmp.lt.s32.totalorder %v3229, 2
        %vm3250 = vcmp.lt.s32.totalorder %v3229, 3
        %vm3251 = vcmp.lt.s32.totalorder %v3229, 4
        %v3252 = vsel %vm3248, %v3232, %v3235
        %v3253 = vsel %vm3251, %v3241, 2102212464
        %v3254 = vsel %vm3250, %v3238, %v3253
        %v3255 = vsel %vm3249, %v3252, %v3254
        %v3256 = vsel %vm3248, %v3235, %v3238
        %v3257 = vsel %vm3251, %v3244, 920167782
        %v3258 = vsel %vm3250, %v3241, %v3257
        %v3259 = vsel %vm3249, %v3256, %v3258
        %v3260 = vsel %vm3248, %v3238, %v3241
        %v3261 = vsel %vm3251, %v3247, 1326507024
        %v3262 = vsel %vm3250, %v3244, %v3261
        %v3263 = vsel %vm3249, %v3260, %v3262
        %v3264 = vshll.u32 %v3224, 8
        %v3265 = vmul.u32.u64.compose %v3264, %v3263
        %v3266 = vextract.low.u32 %v3265
        %v3267 = vextract.high.u32 %v3265
        %v3268 = vmul.u32.u64.compose %v3264, %v3259
        %v3269 = vextract.low.u32 %v3268
        %v3270 = vextract.high.u32 %v3268
        %v3271 = vmul.u32 %v3264, %v3255
        %v3272 = vadd.s32 %v3267, %v3269
        %vm3273 = vc.u32 %v3267, %v3269
        %v3274 = vadd.s32 %v3270, 1
        %v3275 = vsel %vm3273, %v3274, %v3270
        %v3276 = vadd.s32 %v3271, %v3275
        %v3277 = vadd.s32 %v3276, 536870912
        %v3278 = vshrl.u32 %v3277, 30
        %v3279 = vshll.u32 %v3278, 30
        %v3280 = vsub.s32 %v3276, %v3279
        %vm3281 = vcmp.lt.s32.totalorder %v3280, 0
        %v3282 = vsub.s32 0, %v3280
        %v3283 = vsel %vm3281, %v3282, %v3280
        %v3284 = vclz %v3283
        %v3285 = vsub.s32 %v3284, 2
        %vm3286 = vcmp.gt.s32.totalorder 0, %v3285
        %v3287 = vsel %vm3286, 0, %v3285
        %v3288 = vsub.s32 32, %v3287
        %v3289 = vshll.u32 %v3280, %v3287
        %v3290 = vshrl.u32 %v3272, %v3288
        %v3291 = vor.u32 %v3289, %v3290
        %v3292 = vsub.s32 4294967266, %v3287
        %v3293 = vadd.s32 %v3292, 127
        %v3294 = vshll.u32 %v3293, 23
        %v3295 = vor.u32 4788187, %v3294
        %v3296 = vand.u32 2147483647, %v3295
        %v3298 = vcvt.s32.f32 %v3291
        %v3299 = vmul.f32 %v3298, %v3296
        %v3300 = vxor.u32 %v3299, 2147483648
        %v3301 = vsel %vm3218, %v3300, %v3299
        %v3302 = vsub.s32 4, %v3278
        %v3303 = vsel %vm3218, %v3302, %v3278
        %v3304 = vsel %vm3217, %v280, %v3301
        %v3305 = vsel %vm3217, 0, %v3303
        %v3306 = vcosq.f32.pop %v3304
        %v3307 = vsinq.f32.pop %v3304
        %vm3308 = vweird.f32 %v280
        %v3309 = vand.u32 %v3305, 3
        %vm3310 = vcmp.lt.s32.totalorder %v3309, 2
        %vm3311 = vcmp.eq.s32.totalorder %v3309, 0
        %v3312 = vxor.u32 %v3307, 2147483648
        %v3313 = vsel %vm3311, %v3306, %v3312
        %vm3314 = vcmp.eq.s32.totalorder %v3309, 2
        %v3315 = vxor.u32 %v3306, 2147483648
        %v3316 = vsel %vm3314, %v3315, %v3307
        %v3317 = vsel %vm3310, %v3313, %v3316
        %v3318 = vsel %vm3308, nan, %v3317
        %v3319 = vand.u32 2147483647, %v281
        %vm3320 = vcmp.le.f32.partialorder %v3319, 0.7853982
        %vm3321 = vcmp.lt.s32.totalorder %v281, 0
        %v3322 = vand.u32 %v281, 2139095040
        %v3323 = vshrl.u32 %v3322, 23
        %v3324 = vsub.s32 %v3323, 127
        %v3325 = vand.u32 2147483647, %v281
        %v3326 = vand.u32 %v3325, 8388607
        %v3327 = vor.u32 %v3326, 8388608
        %v3328 = vsub.s32 0, %v3327
        %v3329 = vadd.s32 %v3324, 1
        %vm3330 = vcmp.gt.s32.totalorder %v3329, 0
        %v3331 = vsel %vm3330, %v3329, 0
        %v3332 = vshrl.u32 %v3331, 5
        %v3333 = vand.u32 %v3331, 31
        %v3334 = vsub.s32 32, %v3333
        %v3335 = vshrl.u32 683565275, %v3334
        %v3336 = vshll.u32 683565275, %v3333
        %v3337 = vshrl.u32 2475754826, %v3334
        %v3338 = vor.u32 %v3336, %v3337
        %v3339 = vshll.u32 2475754826, %v3333
        %v3340 = vshrl.u32 2131351028, %v3334
        %v3341 = vor.u32 %v3339, %v3340
        %v3342 = vshll.u32 2131351028, %v3333
        %v3343 = vshrl.u32 2102212464, %v3334
        %v3344 = vor.u32 %v3342, %v3343
        %v3345 = vshll.u32 2102212464, %v3333
        %v3346 = vshrl.u32 920167782, %v3334
        %v3347 = vor.u32 %v3345, %v3346
        %v3348 = vshll.u32 920167782, %v3333
        %v3349 = vshrl.u32 1326507024, %v3334
        %v3350 = vor.u32 %v3348, %v3349
        %vm3351 = vcmp.lt.s32.totalorder %v3332, 1
        %vm3352 = vcmp.lt.s32.totalorder %v3332, 2
        %vm3353 = vcmp.lt.s32.totalorder %v3332, 3
        %vm3354 = vcmp.lt.s32.totalorder %v3332, 4
        %v3355 = vsel %vm3351, %v3335, %v3338
        %v3356 = vsel %vm3354, %v3344, 2102212464
        %v3357 = vsel %vm3353, %v3341, %v3356
        %v3358 = vsel %vm3352, %v3355, %v3357
        %v3359 = vsel %vm3351, %v3338, %v3341
        %v3360 = vsel %vm3354, %v3347, 920167782
        %v3361 = vsel %vm3353, %v3344, %v3360
        %v3362 = vsel %vm3352, %v3359, %v3361
        %v3363 = vsel %vm3351, %v3341, %v3344
        %v3364 = vsel %vm3354, %v3350, 1326507024
        %v3365 = vsel %vm3353, %v3347, %v3364
        %v3366 = vsel %vm3352, %v3363, %v3365
        %v3367 = vshll.u32 %v3327, 8
        %v3368 = vmul.u32.u64.compose %v3367, %v3366
        %v3369 = vextract.low.u32 %v3368
        %v3370 = vextract.high.u32 %v3368
        %v3371 = vmul.u32.u64.compose %v3367, %v3362
        %v3372 = vextract.low.u32 %v3371
        %v3373 = vextract.high.u32 %v3371
        %v3374 = vmul.u32 %v3367, %v3358
        %v3375 = vadd.s32 %v3370, %v3372
        %vm3376 = vc.u32 %v3370, %v3372
        %v3377 = vadd.s32 %v3373, 1
        %v3378 = vsel %vm3376, %v3377, %v3373
        %v3379 = vadd.s32 %v3374, %v3378
        %v3380 = vadd.s32 %v3379, 536870912
        %v3381 = vshrl.u32 %v3380, 30
        %v3382 = vshll.u32 %v3381, 30
        %v3383 = vsub.s32 %v3379, %v3382
        %vm3384 = vcmp.lt.s32.totalorder %v3383, 0
        %v3385 = vsub.s32 0, %v3383
        %v3386 = vsel %vm3384, %v3385, %v3383
        %v3387 = vclz %v3386
        %v3388 = vsub.s32 %v3387, 2
        %vm3389 = vcmp.gt.s32.totalorder 0, %v3388
        %v3390 = vsel %vm3389, 0, %v3388
        %v3391 = vsub.s32 32, %v3390
        %v3392 = vshll.u32 %v3383, %v3390
        %v3393 = vshrl.u32 %v3375, %v3391
        %v3394 = vor.u32 %v3392, %v3393
        %v3395 = vsub.s32 4294967266, %v3390
        %v3396 = vadd.s32 %v3395, 127
        %v3397 = vshll.u32 %v3396, 23
        %v3398 = vor.u32 4788187, %v3397
        %v3399 = vand.u32 2147483647, %v3398
        %v3401 = vcvt.s32.f32 %v3394
        %v3402 = vmul.f32 %v3401, %v3399
        %v3403 = vxor.u32 %v3402, 2147483648
        %v3404 = vsel %vm3321, %v3403, %v3402
        %v3405 = vsub.s32 4, %v3381
        %v3406 = vsel %vm3321, %v3405, %v3381
        %v3407 = vsel %vm3320, %v281, %v3404
        %v3408 = vsel %vm3320, 0, %v3406
        %v3409 = vcosq.f32.pop %v3407
        %v3410 = vsinq.f32.pop %v3407
        %vm3411 = vweird.f32 %v281
        %v3412 = vand.u32 %v3408, 3
        %vm3413 = vcmp.lt.s32.totalorder %v3412, 2
        %vm3414 = vcmp.eq.s32.totalorder %v3412, 0
        %v3415 = vxor.u32 %v3410, 2147483648
        %v3416 = vsel %vm3414, %v3409, %v3415
        %vm3417 = vcmp.eq.s32.totalorder %v3412, 2
        %v3418 = vxor.u32 %v3409, 2147483648
        %v3419 = vsel %vm3417, %v3418, %v3410
        %v3420 = vsel %vm3413, %v3416, %v3419
        %v3421 = vsel %vm3411, nan, %v3420
        %v3422 = vand.u32 2147483647, %v282
        %vm3423 = vcmp.le.f32.partialorder %v3422, 0.7853982
        %vm3424 = vcmp.lt.s32.totalorder %v282, 0
        %v3425 = vand.u32 %v282, 2139095040
        %v3426 = vshrl.u32 %v3425, 23
        %v3427 = vsub.s32 %v3426, 127
        %v3428 = vand.u32 2147483647, %v282
        %v3429 = vand.u32 %v3428, 8388607
        %v3430 = vor.u32 %v3429, 8388608
        %v3431 = vsub.s32 0, %v3430
        %v3432 = vadd.s32 %v3427, 1
        %vm3433 = vcmp.gt.s32.totalorder %v3432, 0
        %v3434 = vsel %vm3433, %v3432, 0
        %v3435 = vshrl.u32 %v3434, 5
        %v3436 = vand.u32 %v3434, 31
        %v3437 = vsub.s32 32, %v3436
        %v3438 = vshrl.u32 683565275, %v3437
        %v3439 = vshll.u32 683565275, %v3436
        %v3440 = vshrl.u32 2475754826, %v3437
        %v3441 = vor.u32 %v3439, %v3440
        %v3442 = vshll.u32 2475754826, %v3436
        %v3443 = vshrl.u32 2131351028, %v3437
        %v3444 = vor.u32 %v3442, %v3443
        %v3445 = vshll.u32 2131351028, %v3436
        %v3446 = vshrl.u32 2102212464, %v3437
        %v3447 = vor.u32 %v3445, %v3446
        %v3448 = vshll.u32 2102212464, %v3436
        %v3449 = vshrl.u32 920167782, %v3437
        %v3450 = vor.u32 %v3448, %v3449
        %v3451 = vshll.u32 920167782, %v3436
        %v3452 = vshrl.u32 1326507024, %v3437
        %v3453 = vor.u32 %v3451, %v3452
        %vm3454 = vcmp.lt.s32.totalorder %v3435, 1
        %vm3455 = vcmp.lt.s32.totalorder %v3435, 2
        %vm3456 = vcmp.lt.s32.totalorder %v3435, 3
        %vm3457 = vcmp.lt.s32.totalorder %v3435, 4
        %v3458 = vsel %vm3454, %v3438, %v3441
        %v3459 = vsel %vm3457, %v3447, 2102212464
        %v3460 = vsel %vm3456, %v3444, %v3459
        %v3461 = vsel %vm3455, %v3458, %v3460
        %v3462 = vsel %vm3454, %v3441, %v3444
        %v3463 = vsel %vm3457, %v3450, 920167782
        %v3464 = vsel %vm3456, %v3447, %v3463
        %v3465 = vsel %vm3455, %v3462, %v3464
        %v3466 = vsel %vm3454, %v3444, %v3447
        %v3467 = vsel %vm3457, %v3453, 1326507024
        %v3468 = vsel %vm3456, %v3450, %v3467
        %v3469 = vsel %vm3455, %v3466, %v3468
        %v3470 = vshll.u32 %v3430, 8
        %v3471 = vmul.u32.u64.compose %v3470, %v3469
        %v3472 = vextract.low.u32 %v3471
        %v3473 = vextract.high.u32 %v3471
        %v3474 = vmul.u32.u64.compose %v3470, %v3465
        %v3475 = vextract.low.u32 %v3474
        %v3476 = vextract.high.u32 %v3474
        %v3477 = vmul.u32 %v3470, %v3461
        %v3478 = vadd.s32 %v3473, %v3475
        %vm3479 = vc.u32 %v3473, %v3475
        %v3480 = vadd.s32 %v3476, 1
        %v3481 = vsel %vm3479, %v3480, %v3476
        %v3482 = vadd.s32 %v3477, %v3481
        %v3483 = vadd.s32 %v3482, 536870912
        %v3484 = vshrl.u32 %v3483, 30
        %v3485 = vshll.u32 %v3484, 30
        %v3486 = vsub.s32 %v3482, %v3485
        %vm3487 = vcmp.lt.s32.totalorder %v3486, 0
        %v3488 = vsub.s32 0, %v3486
        %v3489 = vsel %vm3487, %v3488, %v3486
        %v3490 = vclz %v3489
        %v3491 = vsub.s32 %v3490, 2
        %vm3492 = vcmp.gt.s32.totalorder 0, %v3491
        %v3493 = vsel %vm3492, 0, %v3491
        %v3494 = vsub.s32 32, %v3493
        %v3495 = vshll.u32 %v3486, %v3493
        %v3496 = vshrl.u32 %v3478, %v3494
        %v3497 = vor.u32 %v3495, %v3496
        %v3498 = vsub.s32 4294967266, %v3493
        %v3499 = vadd.s32 %v3498, 127
        %v3500 = vshll.u32 %v3499, 23
        %v3501 = vor.u32 4788187, %v3500
        %v3502 = vand.u32 2147483647, %v3501
        %v3504 = vcvt.s32.f32 %v3497
        %v3505 = vmul.f32 %v3504, %v3502
        %v3506 = vxor.u32 %v3505, 2147483648
        %v3507 = vsel %vm3424, %v3506, %v3505
        %v3508 = vsub.s32 4, %v3484
        %v3509 = vsel %vm3424, %v3508, %v3484
        %v3510 = vsel %vm3423, %v282, %v3507
        %v3511 = vsel %vm3423, 0, %v3509
        %v3512 = vcosq.f32.pop %v3510
        %v3513 = vsinq.f32.pop %v3510
        %vm3514 = vweird.f32 %v282
        %v3515 = vand.u32 %v3511, 3
        %vm3516 = vcmp.lt.s32.totalorder %v3515, 2
        %vm3517 = vcmp.eq.s32.totalorder %v3515, 0
        %v3518 = vxor.u32 %v3513, 2147483648
        %v3519 = vsel %vm3517, %v3512, %v3518
        %vm3520 = vcmp.eq.s32.totalorder %v3515, 2
        %v3521 = vxor.u32 %v3512, 2147483648
        %v3522 = vsel %vm3520, %v3521, %v3513
        %v3523 = vsel %vm3516, %v3519, %v3522
        %v3524 = vsel %vm3514, nan, %v3523
        %v3525 = vand.u32 2147483647, %v283
        %vm3526 = vcmp.le.f32.partialorder %v3525, 0.7853982
        %vm3527 = vcmp.lt.s32.totalorder %v283, 0
        %v3528 = vand.u32 %v283, 2139095040
        %v3529 = vshrl.u32 %v3528, 23
        %v3530 = vsub.s32 %v3529, 127
        %v3531 = vand.u32 2147483647, %v283
        %v3532 = vand.u32 %v3531, 8388607
        %v3533 = vor.u32 %v3532, 8388608
        %v3534 = vsub.s32 0, %v3533
        %v3535 = vadd.s32 %v3530, 1
        %vm3536 = vcmp.gt.s32.totalorder %v3535, 0
        %v3537 = vsel %vm3536, %v3535, 0
        %v3538 = vshrl.u32 %v3537, 5
        %v3539 = vand.u32 %v3537, 31
        %v3540 = vsub.s32 32, %v3539
        %v3541 = vshrl.u32 683565275, %v3540
        %v3542 = vshll.u32 683565275, %v3539
        %v3543 = vshrl.u32 2475754826, %v3540
        %v3544 = vor.u32 %v3542, %v3543
        %v3545 = vshll.u32 2475754826, %v3539
        %v3546 = vshrl.u32 2131351028, %v3540
        %v3547 = vor.u32 %v3545, %v3546
        %v3548 = vshll.u32 2131351028, %v3539
        %v3549 = vshrl.u32 2102212464, %v3540
        %v3550 = vor.u32 %v3548, %v3549
        %v3551 = vshll.u32 2102212464, %v3539
        %v3552 = vshrl.u32 920167782, %v3540
        %v3553 = vor.u32 %v3551, %v3552
        %v3554 = vshll.u32 920167782, %v3539
        %v3555 = vshrl.u32 1326507024, %v3540
        %v3556 = vor.u32 %v3554, %v3555
        %vm3557 = vcmp.lt.s32.totalorder %v3538, 1
        %vm3558 = vcmp.lt.s32.totalorder %v3538, 2
        %vm3559 = vcmp.lt.s32.totalorder %v3538, 3
        %vm3560 = vcmp.lt.s32.totalorder %v3538, 4
        %v3561 = vsel %vm3557, %v3541, %v3544
        %v3562 = vsel %vm3560, %v3550, 2102212464
        %v3563 = vsel %vm3559, %v3547, %v3562
        %v3564 = vsel %vm3558, %v3561, %v3563
        %v3565 = vsel %vm3557, %v3544, %v3547
        %v3566 = vsel %vm3560, %v3553, 920167782
        %v3567 = vsel %vm3559, %v3550, %v3566
        %v3568 = vsel %vm3558, %v3565, %v3567
        %v3569 = vsel %vm3557, %v3547, %v3550
        %v3570 = vsel %vm3560, %v3556, 1326507024
        %v3571 = vsel %vm3559, %v3553, %v3570
        %v3572 = vsel %vm3558, %v3569, %v3571
        %v3573 = vshll.u32 %v3533, 8
        %v3574 = vmul.u32.u64.compose %v3573, %v3572
        %v3575 = vextract.low.u32 %v3574
        %v3576 = vextract.high.u32 %v3574
        %v3577 = vmul.u32.u64.compose %v3573, %v3568
        %v3578 = vextract.low.u32 %v3577
        %v3579 = vextract.high.u32 %v3577
        %v3580 = vmul.u32 %v3573, %v3564
        %v3581 = vadd.s32 %v3576, %v3578
        %vm3582 = vc.u32 %v3576, %v3578
        %v3583 = vadd.s32 %v3579, 1
        %v3584 = vsel %vm3582, %v3583, %v3579
        %v3585 = vadd.s32 %v3580, %v3584
        %v3586 = vadd.s32 %v3585, 536870912
        %v3587 = vshrl.u32 %v3586, 30
        %v3588 = vshll.u32 %v3587, 30
        %v3589 = vsub.s32 %v3585, %v3588
        %vm3590 = vcmp.lt.s32.totalorder %v3589, 0
        %v3591 = vsub.s32 0, %v3589
        %v3592 = vsel %vm3590, %v3591, %v3589
        %v3593 = vclz %v3592
        %v3594 = vsub.s32 %v3593, 2
        %vm3595 = vcmp.gt.s32.totalorder 0, %v3594
        %v3596 = vsel %vm3595, 0, %v3594
        %v3597 = vsub.s32 32, %v3596
        %v3598 = vshll.u32 %v3589, %v3596
        %v3599 = vshrl.u32 %v3581, %v3597
        %v3600 = vor.u32 %v3598, %v3599
        %v3601 = vsub.s32 4294967266, %v3596
        %v3602 = vadd.s32 %v3601, 127
        %v3603 = vshll.u32 %v3602, 23
        %v3604 = vor.u32 4788187, %v3603
        %v3605 = vand.u32 2147483647, %v3604
        %v3607 = vcvt.s32.f32 %v3600
        %v3608 = vmul.f32 %v3607, %v3605
        %v3609 = vxor.u32 %v3608, 2147483648
        %v3610 = vsel %vm3527, %v3609, %v3608
        %v3611 = vsub.s32 4, %v3587
        %v3612 = vsel %vm3527, %v3611, %v3587
        %v3613 = vsel %vm3526, %v283, %v3610
        %v3614 = vsel %vm3526, 0, %v3612
        %v3615 = vcosq.f32.pop %v3613
        %v3616 = vsinq.f32.pop %v3613
        %vm3617 = vweird.f32 %v283
        %v3618 = vand.u32 %v3614, 3
        %vm3619 = vcmp.lt.s32.totalorder %v3618, 2
        %vm3620 = vcmp.eq.s32.totalorder %v3618, 0
        %v3621 = vxor.u32 %v3616, 2147483648
        %v3622 = vsel %vm3620, %v3615, %v3621
        %vm3623 = vcmp.eq.s32.totalorder %v3618, 2
        %v3624 = vxor.u32 %v3615, 2147483648
        %v3625 = vsel %vm3623, %v3624, %v3616
        %v3626 = vsel %vm3619, %v3622, %v3625
        %v3627 = vsel %vm3617, nan, %v3626
        %v3628 = vand.u32 2147483647, %v284
        %vm3629 = vcmp.le.f32.partialorder %v3628, 0.7853982
        %vm3630 = vcmp.lt.s32.totalorder %v284, 0
        %v3631 = vand.u32 %v284, 2139095040
        %v3632 = vshrl.u32 %v3631, 23
        %v3633 = vsub.s32 %v3632, 127
        %v3634 = vand.u32 2147483647, %v284
        %v3635 = vand.u32 %v3634, 8388607
        %v3636 = vor.u32 %v3635, 8388608
        %v3637 = vsub.s32 0, %v3636
        %v3638 = vadd.s32 %v3633, 1
        %vm3639 = vcmp.gt.s32.totalorder %v3638, 0
        %v3640 = vsel %vm3639, %v3638, 0
        %v3641 = vshrl.u32 %v3640, 5
        %v3642 = vand.u32 %v3640, 31
        %v3643 = vsub.s32 32, %v3642
        %v3644 = vshrl.u32 683565275, %v3643
        %v3645 = vshll.u32 683565275, %v3642
        %v3646 = vshrl.u32 2475754826, %v3643
        %v3647 = vor.u32 %v3645, %v3646
        %v3648 = vshll.u32 2475754826, %v3642
        %v3649 = vshrl.u32 2131351028, %v3643
        %v3650 = vor.u32 %v3648, %v3649
        %v3651 = vshll.u32 2131351028, %v3642
        %v3652 = vshrl.u32 2102212464, %v3643
        %v3653 = vor.u32 %v3651, %v3652
        %v3654 = vshll.u32 2102212464, %v3642
        %v3655 = vshrl.u32 920167782, %v3643
        %v3656 = vor.u32 %v3654, %v3655
        %v3657 = vshll.u32 920167782, %v3642
        %v3658 = vshrl.u32 1326507024, %v3643
        %v3659 = vor.u32 %v3657, %v3658
        %vm3660 = vcmp.lt.s32.totalorder %v3641, 1
        %vm3661 = vcmp.lt.s32.totalorder %v3641, 2
        %vm3662 = vcmp.lt.s32.totalorder %v3641, 3
        %vm3663 = vcmp.lt.s32.totalorder %v3641, 4
        %v3664 = vsel %vm3660, %v3644, %v3647
        %v3665 = vsel %vm3663, %v3653, 2102212464
        %v3666 = vsel %vm3662, %v3650, %v3665
        %v3667 = vsel %vm3661, %v3664, %v3666
        %v3668 = vsel %vm3660, %v3647, %v3650
        %v3669 = vsel %vm3663, %v3656, 920167782
        %v3670 = vsel %vm3662, %v3653, %v3669
        %v3671 = vsel %vm3661, %v3668, %v3670
        %v3672 = vsel %vm3660, %v3650, %v3653
        %v3673 = vsel %vm3663, %v3659, 1326507024
        %v3674 = vsel %vm3662, %v3656, %v3673
        %v3675 = vsel %vm3661, %v3672, %v3674
        %v3676 = vshll.u32 %v3636, 8
        %v3677 = vmul.u32.u64.compose %v3676, %v3675
        %v3678 = vextract.low.u32 %v3677
        %v3679 = vextract.high.u32 %v3677
        %v3680 = vmul.u32.u64.compose %v3676, %v3671
        %v3681 = vextract.low.u32 %v3680
        %v3682 = vextract.high.u32 %v3680
        %v3683 = vmul.u32 %v3676, %v3667
        %v3684 = vadd.s32 %v3679, %v3681
        %vm3685 = vc.u32 %v3679, %v3681
        %v3686 = vadd.s32 %v3682, 1
        %v3687 = vsel %vm3685, %v3686, %v3682
        %v3688 = vadd.s32 %v3683, %v3687
        %v3689 = vadd.s32 %v3688, 536870912
        %v3690 = vshrl.u32 %v3689, 30
        %v3691 = vshll.u32 %v3690, 30
        %v3692 = vsub.s32 %v3688, %v3691
        %vm3693 = vcmp.lt.s32.totalorder %v3692, 0
        %v3694 = vsub.s32 0, %v3692
        %v3695 = vsel %vm3693, %v3694, %v3692
        %v3696 = vclz %v3695
        %v3697 = vsub.s32 %v3696, 2
        %vm3698 = vcmp.gt.s32.totalorder 0, %v3697
        %v3699 = vsel %vm3698, 0, %v3697
        %v3700 = vsub.s32 32, %v3699
        %v3701 = vshll.u32 %v3692, %v3699
        %v3702 = vshrl.u32 %v3684, %v3700
        %v3703 = vor.u32 %v3701, %v3702
        %v3704 = vsub.s32 4294967266, %v3699
        %v3705 = vadd.s32 %v3704, 127
        %v3706 = vshll.u32 %v3705, 23
        %v3707 = vor.u32 4788187, %v3706
        %v3708 = vand.u32 2147483647, %v3707
        %v3710 = vcvt.s32.f32 %v3703
        %v3711 = vmul.f32 %v3710, %v3708
        %v3712 = vxor.u32 %v3711, 2147483648
        %v3713 = vsel %vm3630, %v3712, %v3711
        %v3714 = vsub.s32 4, %v3690
        %v3715 = vsel %vm3630, %v3714, %v3690
        %v3716 = vsel %vm3629, %v284, %v3713
        %v3717 = vsel %vm3629, 0, %v3715
        %v3718 = vcosq.f32.pop %v3716
        %v3719 = vsinq.f32.pop %v3716
        %vm3720 = vweird.f32 %v284
        %v3721 = vand.u32 %v3717, 3
        %vm3722 = vcmp.lt.s32.totalorder %v3721, 2
        %vm3723 = vcmp.eq.s32.totalorder %v3721, 0
        %v3724 = vxor.u32 %v3719, 2147483648
        %v3725 = vsel %vm3723, %v3718, %v3724
        %vm3726 = vcmp.eq.s32.totalorder %v3721, 2
        %v3727 = vxor.u32 %v3718, 2147483648
        %v3728 = vsel %vm3726, %v3727, %v3719
        %v3729 = vsel %vm3722, %v3725, %v3728
        %v3730 = vsel %vm3720, nan, %v3729
        %v3731 = vand.u32 2147483647, %v285
        %vm3732 = vcmp.le.f32.partialorder %v3731, 0.7853982
        %vm3733 = vcmp.lt.s32.totalorder %v285, 0
        %v3734 = vand.u32 %v285, 2139095040
        %v3735 = vshrl.u32 %v3734, 23
        %v3736 = vsub.s32 %v3735, 127
        %v3737 = vand.u32 2147483647, %v285
        %v3738 = vand.u32 %v3737, 8388607
        %v3739 = vor.u32 %v3738, 8388608
        %v3740 = vsub.s32 0, %v3739
        %v3741 = vadd.s32 %v3736, 1
        %vm3742 = vcmp.gt.s32.totalorder %v3741, 0
        %v3743 = vsel %vm3742, %v3741, 0
        %v3744 = vshrl.u32 %v3743, 5
        %v3745 = vand.u32 %v3743, 31
        %v3746 = vsub.s32 32, %v3745
        %v3747 = vshrl.u32 683565275, %v3746
        %v3748 = vshll.u32 683565275, %v3745
        %v3749 = vshrl.u32 2475754826, %v3746
        %v3750 = vor.u32 %v3748, %v3749
        %v3751 = vshll.u32 2475754826, %v3745
        %v3752 = vshrl.u32 2131351028, %v3746
        %v3753 = vor.u32 %v3751, %v3752
        %v3754 = vshll.u32 2131351028, %v3745
        %v3755 = vshrl.u32 2102212464, %v3746
        %v3756 = vor.u32 %v3754, %v3755
        %v3757 = vshll.u32 2102212464, %v3745
        %v3758 = vshrl.u32 920167782, %v3746
        %v3759 = vor.u32 %v3757, %v3758
        %v3760 = vshll.u32 920167782, %v3745
        %v3761 = vshrl.u32 1326507024, %v3746
        %v3762 = vor.u32 %v3760, %v3761
        %vm3763 = vcmp.lt.s32.totalorder %v3744, 1
        %vm3764 = vcmp.lt.s32.totalorder %v3744, 2
        %vm3765 = vcmp.lt.s32.totalorder %v3744, 3
        %vm3766 = vcmp.lt.s32.totalorder %v3744, 4
        %v3767 = vsel %vm3763, %v3747, %v3750
        %v3768 = vsel %vm3766, %v3756, 2102212464
        %v3769 = vsel %vm3765, %v3753, %v3768
        %v3770 = vsel %vm3764, %v3767, %v3769
        %v3771 = vsel %vm3763, %v3750, %v3753
        %v3772 = vsel %vm3766, %v3759, 920167782
        %v3773 = vsel %vm3765, %v3756, %v3772
        %v3774 = vsel %vm3764, %v3771, %v3773
        %v3775 = vsel %vm3763, %v3753, %v3756
        %v3776 = vsel %vm3766, %v3762, 1326507024
        %v3777 = vsel %vm3765, %v3759, %v3776
        %v3778 = vsel %vm3764, %v3775, %v3777
        %v3779 = vshll.u32 %v3739, 8
        %v3780 = vmul.u32.u64.compose %v3779, %v3778
        %v3781 = vextract.low.u32 %v3780
        %v3782 = vextract.high.u32 %v3780
        %v3783 = vmul.u32.u64.compose %v3779, %v3774
        %v3784 = vextract.low.u32 %v3783
        %v3785 = vextract.high.u32 %v3783
        %v3786 = vmul.u32 %v3779, %v3770
        %v3787 = vadd.s32 %v3782, %v3784
        %vm3788 = vc.u32 %v3782, %v3784
        %v3789 = vadd.s32 %v3785, 1
        %v3790 = vsel %vm3788, %v3789, %v3785
        %v3791 = vadd.s32 %v3786, %v3790
        %v3792 = vadd.s32 %v3791, 536870912
        %v3793 = vshrl.u32 %v3792, 30
        %v3794 = vshll.u32 %v3793, 30
        %v3795 = vsub.s32 %v3791, %v3794
        %vm3796 = vcmp.lt.s32.totalorder %v3795, 0
        %v3797 = vsub.s32 0, %v3795
        %v3798 = vsel %vm3796, %v3797, %v3795
        %v3799 = vclz %v3798
        %v3800 = vsub.s32 %v3799, 2
        %vm3801 = vcmp.gt.s32.totalorder 0, %v3800
        %v3802 = vsel %vm3801, 0, %v3800
        %v3803 = vsub.s32 32, %v3802
        %v3804 = vshll.u32 %v3795, %v3802
        %v3805 = vshrl.u32 %v3787, %v3803
        %v3806 = vor.u32 %v3804, %v3805
        %v3807 = vsub.s32 4294967266, %v3802
        %v3808 = vadd.s32 %v3807, 127
        %v3809 = vshll.u32 %v3808, 23
        %v3810 = vor.u32 4788187, %v3809
        %v3811 = vand.u32 2147483647, %v3810
        %v3813 = vcvt.s32.f32 %v3806
        %v3814 = vmul.f32 %v3813, %v3811
        %v3815 = vxor.u32 %v3814, 2147483648
        %v3816 = vsel %vm3733, %v3815, %v3814
        %v3817 = vsub.s32 4, %v3793
        %v3818 = vsel %vm3733, %v3817, %v3793
        %v3819 = vsel %vm3732, %v285, %v3816
        %v3820 = vsel %vm3732, 0, %v3818
        %v3821 = vcosq.f32.pop %v3819
        %v3822 = vsinq.f32.pop %v3819
        %vm3823 = vweird.f32 %v285
        %v3824 = vand.u32 %v3820, 3
        %vm3825 = vcmp.lt.s32.totalorder %v3824, 2
        %vm3826 = vcmp.eq.s32.totalorder %v3824, 0
        %v3827 = vxor.u32 %v3822, 2147483648
        %v3828 = vsel %vm3826, %v3821, %v3827
        %vm3829 = vcmp.eq.s32.totalorder %v3824, 2
        %v3830 = vxor.u32 %v3821, 2147483648
        %v3831 = vsel %vm3829, %v3830, %v3822
        %v3832 = vsel %vm3825, %v3828, %v3831
        %v3833 = vsel %vm3823, nan, %v3832
        %v3834 = vand.u32 2147483647, %v286
        %vm3835 = vcmp.le.f32.partialorder %v3834, 0.7853982
        %vm3836 = vcmp.lt.s32.totalorder %v286, 0
        %v3837 = vand.u32 %v286, 2139095040
        %v3838 = vshrl.u32 %v3837, 23
        %v3839 = vsub.s32 %v3838, 127
        %v3840 = vand.u32 2147483647, %v286
        %v3841 = vand.u32 %v3840, 8388607
        %v3842 = vor.u32 %v3841, 8388608
        %v3843 = vsub.s32 0, %v3842
        %v3844 = vadd.s32 %v3839, 1
        %vm3845 = vcmp.gt.s32.totalorder %v3844, 0
        %v3846 = vsel %vm3845, %v3844, 0
        %v3847 = vshrl.u32 %v3846, 5
        %v3848 = vand.u32 %v3846, 31
        %v3849 = vsub.s32 32, %v3848
        %v3850 = vshrl.u32 683565275, %v3849
        %v3851 = vshll.u32 683565275, %v3848
        %v3852 = vshrl.u32 2475754826, %v3849
        %v3853 = vor.u32 %v3851, %v3852
        %v3854 = vshll.u32 2475754826, %v3848
        %v3855 = vshrl.u32 2131351028, %v3849
        %v3856 = vor.u32 %v3854, %v3855
        %v3857 = vshll.u32 2131351028, %v3848
        %v3858 = vshrl.u32 2102212464, %v3849
        %v3859 = vor.u32 %v3857, %v3858
        %v3860 = vshll.u32 2102212464, %v3848
        %v3861 = vshrl.u32 920167782, %v3849
        %v3862 = vor.u32 %v3860, %v3861
        %v3863 = vshll.u32 920167782, %v3848
        %v3864 = vshrl.u32 1326507024, %v3849
        %v3865 = vor.u32 %v3863, %v3864
        %vm3866 = vcmp.lt.s32.totalorder %v3847, 1
        %vm3867 = vcmp.lt.s32.totalorder %v3847, 2
        %vm3868 = vcmp.lt.s32.totalorder %v3847, 3
        %vm3869 = vcmp.lt.s32.totalorder %v3847, 4
        %v3870 = vsel %vm3866, %v3850, %v3853
        %v3871 = vsel %vm3869, %v3859, 2102212464
        %v3872 = vsel %vm3868, %v3856, %v3871
        %v3873 = vsel %vm3867, %v3870, %v3872
        %v3874 = vsel %vm3866, %v3853, %v3856
        %v3875 = vsel %vm3869, %v3862, 920167782
        %v3876 = vsel %vm3868, %v3859, %v3875
        %v3877 = vsel %vm3867, %v3874, %v3876
        %v3878 = vsel %vm3866, %v3856, %v3859
        %v3879 = vsel %vm3869, %v3865, 1326507024
        %v3880 = vsel %vm3868, %v3862, %v3879
        %v3881 = vsel %vm3867, %v3878, %v3880
        %v3882 = vshll.u32 %v3842, 8
        %v3883 = vmul.u32.u64.compose %v3882, %v3881
        %v3884 = vextract.low.u32 %v3883
        %v3885 = vextract.high.u32 %v3883
        %v3886 = vmul.u32.u64.compose %v3882, %v3877
        %v3887 = vextract.low.u32 %v3886
        %v3888 = vextract.high.u32 %v3886
        %v3889 = vmul.u32 %v3882, %v3873
        %v3890 = vadd.s32 %v3885, %v3887
        %vm3891 = vc.u32 %v3885, %v3887
        %v3892 = vadd.s32 %v3888, 1
        %v3893 = vsel %vm3891, %v3892, %v3888
        %v3894 = vadd.s32 %v3889, %v3893
        %v3895 = vadd.s32 %v3894, 536870912
        %v3896 = vshrl.u32 %v3895, 30
        %v3897 = vshll.u32 %v3896, 30
        %v3898 = vsub.s32 %v3894, %v3897
        %vm3899 = vcmp.lt.s32.totalorder %v3898, 0
        %v3900 = vsub.s32 0, %v3898
        %v3901 = vsel %vm3899, %v3900, %v3898
        %v3902 = vclz %v3901
        %v3903 = vsub.s32 %v3902, 2
        %vm3904 = vcmp.gt.s32.totalorder 0, %v3903
        %v3905 = vsel %vm3904, 0, %v3903
        %v3906 = vsub.s32 32, %v3905
        %v3907 = vshll.u32 %v3898, %v3905
        %v3908 = vshrl.u32 %v3890, %v3906
        %v3909 = vor.u32 %v3907, %v3908
        %v3910 = vsub.s32 4294967266, %v3905
        %v3911 = vadd.s32 %v3910, 127
        %v3912 = vshll.u32 %v3911, 23
        %v3913 = vor.u32 4788187, %v3912
        %v3914 = vand.u32 2147483647, %v3913
        %v3916 = vcvt.s32.f32 %v3909
        %v3917 = vmul.f32 %v3916, %v3914
        %v3918 = vxor.u32 %v3917, 2147483648
        %v3919 = vsel %vm3836, %v3918, %v3917
        %v3920 = vsub.s32 4, %v3896
        %v3921 = vsel %vm3836, %v3920, %v3896
        %v3922 = vsel %vm3835, %v286, %v3919
        %v3923 = vsel %vm3835, 0, %v3921
        %v3924 = vcosq.f32.pop %v3922
        %v3925 = vsinq.f32.pop %v3922
        %vm3926 = vweird.f32 %v286
        %v3927 = vand.u32 %v3923, 3
        %vm3928 = vcmp.lt.s32.totalorder %v3927, 2
        %vm3929 = vcmp.eq.s32.totalorder %v3927, 0
        %v3930 = vxor.u32 %v3925, 2147483648
        %v3931 = vsel %vm3929, %v3924, %v3930
        %vm3932 = vcmp.eq.s32.totalorder %v3927, 2
        %v3933 = vxor.u32 %v3924, 2147483648
        %v3934 = vsel %vm3932, %v3933, %v3925
        %v3935 = vsel %vm3928, %v3931, %v3934
        %v3936 = vsel %vm3926, nan, %v3935
        %v3937 = vand.u32 2147483647, %v287
        %vm3938 = vcmp.le.f32.partialorder %v3937, 0.7853982
        %vm3939 = vcmp.lt.s32.totalorder %v287, 0
        %v3940 = vand.u32 %v287, 2139095040
        %v3941 = vshrl.u32 %v3940, 23
        %v3942 = vsub.s32 %v3941, 127
        %v3943 = vand.u32 2147483647, %v287
        %v3944 = vand.u32 %v3943, 8388607
        %v3945 = vor.u32 %v3944, 8388608
        %v3946 = vsub.s32 0, %v3945
        %v3947 = vadd.s32 %v3942, 1
        %vm3948 = vcmp.gt.s32.totalorder %v3947, 0
        %v3949 = vsel %vm3948, %v3947, 0
        %v3950 = vshrl.u32 %v3949, 5
        %v3951 = vand.u32 %v3949, 31
        %v3952 = vsub.s32 32, %v3951
        %v3953 = vshrl.u32 683565275, %v3952
        %v3954 = vshll.u32 683565275, %v3951
        %v3955 = vshrl.u32 2475754826, %v3952
        %v3956 = vor.u32 %v3954, %v3955
        %v3957 = vshll.u32 2475754826, %v3951
        %v3958 = vshrl.u32 2131351028, %v3952
        %v3959 = vor.u32 %v3957, %v3958
        %v3960 = vshll.u32 2131351028, %v3951
        %v3961 = vshrl.u32 2102212464, %v3952
        %v3962 = vor.u32 %v3960, %v3961
        %v3963 = vshll.u32 2102212464, %v3951
        %v3964 = vshrl.u32 920167782, %v3952
        %v3965 = vor.u32 %v3963, %v3964
        %v3966 = vshll.u32 920167782, %v3951
        %v3967 = vshrl.u32 1326507024, %v3952
        %v3968 = vor.u32 %v3966, %v3967
        %vm3969 = vcmp.lt.s32.totalorder %v3950, 1
        %vm3970 = vcmp.lt.s32.totalorder %v3950, 2
        %vm3971 = vcmp.lt.s32.totalorder %v3950, 3
        %vm3972 = vcmp.lt.s32.totalorder %v3950, 4
        %v3973 = vsel %vm3969, %v3953, %v3956
        %v3974 = vsel %vm3972, %v3962, 2102212464
        %v3975 = vsel %vm3971, %v3959, %v3974
        %v3976 = vsel %vm3970, %v3973, %v3975
        %v3977 = vsel %vm3969, %v3956, %v3959
        %v3978 = vsel %vm3972, %v3965, 920167782
        %v3979 = vsel %vm3971, %v3962, %v3978
        %v3980 = vsel %vm3970, %v3977, %v3979
        %v3981 = vsel %vm3969, %v3959, %v3962
        %v3982 = vsel %vm3972, %v3968, 1326507024
        %v3983 = vsel %vm3971, %v3965, %v3982
        %v3984 = vsel %vm3970, %v3981, %v3983
        %v3985 = vshll.u32 %v3945, 8
        %v3986 = vmul.u32.u64.compose %v3985, %v3984
        %v3987 = vextract.low.u32 %v3986
        %v3988 = vextract.high.u32 %v3986
        %v3989 = vmul.u32.u64.compose %v3985, %v3980
        %v3990 = vextract.low.u32 %v3989
        %v3991 = vextract.high.u32 %v3989
        %v3992 = vmul.u32 %v3985, %v3976
        %v3993 = vadd.s32 %v3988, %v3990
        %vm3994 = vc.u32 %v3988, %v3990
        %v3995 = vadd.s32 %v3991, 1
        %v3996 = vsel %vm3994, %v3995, %v3991
        %v3997 = vadd.s32 %v3992, %v3996
        %v3998 = vadd.s32 %v3997, 536870912
        %v3999 = vshrl.u32 %v3998, 30
        %v4000 = vshll.u32 %v3999, 30
        %v4001 = vsub.s32 %v3997, %v4000
        %vm4002 = vcmp.lt.s32.totalorder %v4001, 0
        %v4003 = vsub.s32 0, %v4001
        %v4004 = vsel %vm4002, %v4003, %v4001
        %v4005 = vclz %v4004
        %v4006 = vsub.s32 %v4005, 2
        %vm4007 = vcmp.gt.s32.totalorder 0, %v4006
        %v4008 = vsel %vm4007, 0, %v4006
        %v4009 = vsub.s32 32, %v4008
        %v4010 = vshll.u32 %v4001, %v4008
        %v4011 = vshrl.u32 %v3993, %v4009
        %v4012 = vor.u32 %v4010, %v4011
        %v4013 = vsub.s32 4294967266, %v4008
        %v4014 = vadd.s32 %v4013, 127
        %v4015 = vshll.u32 %v4014, 23
        %v4016 = vor.u32 4788187, %v4015
        %v4017 = vand.u32 2147483647, %v4016
        %v4019 = vcvt.s32.f32 %v4012
        %v4020 = vmul.f32 %v4019, %v4017
        %v4021 = vxor.u32 %v4020, 2147483648
        %v4022 = vsel %vm3939, %v4021, %v4020
        %v4023 = vsub.s32 4, %v3999
        %v4024 = vsel %vm3939, %v4023, %v3999
        %v4025 = vsel %vm3938, %v287, %v4022
        %v4026 = vsel %vm3938, 0, %v4024
        %v4027 = vcosq.f32.pop %v4025
        %v4028 = vsinq.f32.pop %v4025
        %vm4029 = vweird.f32 %v287
        %v4030 = vand.u32 %v4026, 3
        %vm4031 = vcmp.lt.s32.totalorder %v4030, 2
        %vm4032 = vcmp.eq.s32.totalorder %v4030, 0
        %v4033 = vxor.u32 %v4028, 2147483648
        %v4034 = vsel %vm4032, %v4027, %v4033
        %vm4035 = vcmp.eq.s32.totalorder %v4030, 2
        %v4036 = vxor.u32 %v4027, 2147483648
        %v4037 = vsel %vm4035, %v4036, %v4028
        %v4038 = vsel %vm4031, %v4034, %v4037
        %v4039 = vsel %vm4029, nan, %v4038
        %v4040 = vand.u32 2147483647, %v288
        %vm4041 = vcmp.le.f32.partialorder %v4040, 0.7853982
        %vm4042 = vcmp.lt.s32.totalorder %v288, 0
        %v4043 = vand.u32 %v288, 2139095040
        %v4044 = vshrl.u32 %v4043, 23
        %v4045 = vsub.s32 %v4044, 127
        %v4046 = vand.u32 2147483647, %v288
        %v4047 = vand.u32 %v4046, 8388607
        %v4048 = vor.u32 %v4047, 8388608
        %v4049 = vsub.s32 0, %v4048
        %v4050 = vadd.s32 %v4045, 1
        %vm4051 = vcmp.gt.s32.totalorder %v4050, 0
        %v4052 = vsel %vm4051, %v4050, 0
        %v4053 = vshrl.u32 %v4052, 5
        %v4054 = vand.u32 %v4052, 31
        %v4055 = vsub.s32 32, %v4054
        %v4056 = vshrl.u32 683565275, %v4055
        %v4057 = vshll.u32 683565275, %v4054
        %v4058 = vshrl.u32 2475754826, %v4055
        %v4059 = vor.u32 %v4057, %v4058
        %v4060 = vshll.u32 2475754826, %v4054
        %v4061 = vshrl.u32 2131351028, %v4055
        %v4062 = vor.u32 %v4060, %v4061
        %v4063 = vshll.u32 2131351028, %v4054
        %v4064 = vshrl.u32 2102212464, %v4055
        %v4065 = vor.u32 %v4063, %v4064
        %v4066 = vshll.u32 2102212464, %v4054
        %v4067 = vshrl.u32 920167782, %v4055
        %v4068 = vor.u32 %v4066, %v4067
        %v4069 = vshll.u32 920167782, %v4054
        %v4070 = vshrl.u32 1326507024, %v4055
        %v4071 = vor.u32 %v4069, %v4070
        %vm4072 = vcmp.lt.s32.totalorder %v4053, 1
        %vm4073 = vcmp.lt.s32.totalorder %v4053, 2
        %vm4074 = vcmp.lt.s32.totalorder %v4053, 3
        %vm4075 = vcmp.lt.s32.totalorder %v4053, 4
        %v4076 = vsel %vm4072, %v4056, %v4059
        %v4077 = vsel %vm4075, %v4065, 2102212464
        %v4078 = vsel %vm4074, %v4062, %v4077
        %v4079 = vsel %vm4073, %v4076, %v4078
        %v4080 = vsel %vm4072, %v4059, %v4062
        %v4081 = vsel %vm4075, %v4068, 920167782
        %v4082 = vsel %vm4074, %v4065, %v4081
        %v4083 = vsel %vm4073, %v4080, %v4082
        %v4084 = vsel %vm4072, %v4062, %v4065
        %v4085 = vsel %vm4075, %v4071, 1326507024
        %v4086 = vsel %vm4074, %v4068, %v4085
        %v4087 = vsel %vm4073, %v4084, %v4086
        %v4088 = vshll.u32 %v4048, 8
        %v4089 = vmul.u32.u64.compose %v4088, %v4087
        %v4090 = vextract.low.u32 %v4089
        %v4091 = vextract.high.u32 %v4089
        %v4092 = vmul.u32.u64.compose %v4088, %v4083
        %v4093 = vextract.low.u32 %v4092
        %v4094 = vextract.high.u32 %v4092
        %v4095 = vmul.u32 %v4088, %v4079
        %v4096 = vadd.s32 %v4091, %v4093
        %vm4097 = vc.u32 %v4091, %v4093
        %v4098 = vadd.s32 %v4094, 1
        %v4099 = vsel %vm4097, %v4098, %v4094
        %v4100 = vadd.s32 %v4095, %v4099
        %v4101 = vadd.s32 %v4100, 536870912
        %v4102 = vshrl.u32 %v4101, 30
        %v4103 = vshll.u32 %v4102, 30
        %v4104 = vsub.s32 %v4100, %v4103
        %vm4105 = vcmp.lt.s32.totalorder %v4104, 0
        %v4106 = vsub.s32 0, %v4104
        %v4107 = vsel %vm4105, %v4106, %v4104
        %v4108 = vclz %v4107
        %v4109 = vsub.s32 %v4108, 2
        %vm4110 = vcmp.gt.s32.totalorder 0, %v4109
        %v4111 = vsel %vm4110, 0, %v4109
        %v4112 = vsub.s32 32, %v4111
        %v4113 = vshll.u32 %v4104, %v4111
        %v4114 = vshrl.u32 %v4096, %v4112
        %v4115 = vor.u32 %v4113, %v4114
        %v4116 = vsub.s32 4294967266, %v4111
        %v4117 = vadd.s32 %v4116, 127
        %v4118 = vshll.u32 %v4117, 23
        %v4119 = vor.u32 4788187, %v4118
        %v4120 = vand.u32 2147483647, %v4119
        %v4122 = vcvt.s32.f32 %v4115
        %v4123 = vmul.f32 %v4122, %v4120
        %v4124 = vxor.u32 %v4123, 2147483648
        %v4125 = vsel %vm4042, %v4124, %v4123
        %v4126 = vsub.s32 4, %v4102
        %v4127 = vsel %vm4042, %v4126, %v4102
        %v4128 = vsel %vm4041, %v288, %v4125
        %v4129 = vsel %vm4041, 0, %v4127
        %v4130 = vcosq.f32.pop %v4128
        %v4131 = vsinq.f32.pop %v4128
        %vm4132 = vweird.f32 %v288
        %v4133 = vand.u32 %v4129, 3
        %vm4134 = vcmp.lt.s32.totalorder %v4133, 2
        %vm4135 = vcmp.eq.s32.totalorder %v4133, 0
        %v4136 = vxor.u32 %v4131, 2147483648
        %v4137 = vsel %vm4135, %v4130, %v4136
        %vm4138 = vcmp.eq.s32.totalorder %v4133, 2
        %v4139 = vxor.u32 %v4130, 2147483648
        %v4140 = vsel %vm4138, %v4139, %v4131
        %v4141 = vsel %vm4134, %v4137, %v4140
        %v4142 = vsel %vm4132, nan, %v4141
        %v4143 = vand.u32 2147483647, %v289
        %vm4144 = vcmp.le.f32.partialorder %v4143, 0.7853982
        %vm4145 = vcmp.lt.s32.totalorder %v289, 0
        %v4146 = vand.u32 %v289, 2139095040
        %v4147 = vshrl.u32 %v4146, 23
        %v4148 = vsub.s32 %v4147, 127
        %v4149 = vand.u32 2147483647, %v289
        %v4150 = vand.u32 %v4149, 8388607
        %v4151 = vor.u32 %v4150, 8388608
        %v4152 = vsub.s32 0, %v4151
        %v4153 = vadd.s32 %v4148, 1
        %vm4154 = vcmp.gt.s32.totalorder %v4153, 0
        %v4155 = vsel %vm4154, %v4153, 0
        %v4156 = vshrl.u32 %v4155, 5
        %v4157 = vand.u32 %v4155, 31
        %v4158 = vsub.s32 32, %v4157
        %v4159 = vshrl.u32 683565275, %v4158
        %v4160 = vshll.u32 683565275, %v4157
        %v4161 = vshrl.u32 2475754826, %v4158
        %v4162 = vor.u32 %v4160, %v4161
        %v4163 = vshll.u32 2475754826, %v4157
        %v4164 = vshrl.u32 2131351028, %v4158
        %v4165 = vor.u32 %v4163, %v4164
        %v4166 = vshll.u32 2131351028, %v4157
        %v4167 = vshrl.u32 2102212464, %v4158
        %v4168 = vor.u32 %v4166, %v4167
        %v4169 = vshll.u32 2102212464, %v4157
        %v4170 = vshrl.u32 920167782, %v4158
        %v4171 = vor.u32 %v4169, %v4170
        %v4172 = vshll.u32 920167782, %v4157
        %v4173 = vshrl.u32 1326507024, %v4158
        %v4174 = vor.u32 %v4172, %v4173
        %vm4175 = vcmp.lt.s32.totalorder %v4156, 1
        %vm4176 = vcmp.lt.s32.totalorder %v4156, 2
        %vm4177 = vcmp.lt.s32.totalorder %v4156, 3
        %vm4178 = vcmp.lt.s32.totalorder %v4156, 4
        %v4179 = vsel %vm4175, %v4159, %v4162
        %v4180 = vsel %vm4178, %v4168, 2102212464
        %v4181 = vsel %vm4177, %v4165, %v4180
        %v4182 = vsel %vm4176, %v4179, %v4181
        %v4183 = vsel %vm4175, %v4162, %v4165
        %v4184 = vsel %vm4178, %v4171, 920167782
        %v4185 = vsel %vm4177, %v4168, %v4184
        %v4186 = vsel %vm4176, %v4183, %v4185
        %v4187 = vsel %vm4175, %v4165, %v4168
        %v4188 = vsel %vm4178, %v4174, 1326507024
        %v4189 = vsel %vm4177, %v4171, %v4188
        %v4190 = vsel %vm4176, %v4187, %v4189
        %v4191 = vshll.u32 %v4151, 8
        %v4192 = vmul.u32.u64.compose %v4191, %v4190
        %v4193 = vextract.low.u32 %v4192
        %v4194 = vextract.high.u32 %v4192
        %v4195 = vmul.u32.u64.compose %v4191, %v4186
        %v4196 = vextract.low.u32 %v4195
        %v4197 = vextract.high.u32 %v4195
        %v4198 = vmul.u32 %v4191, %v4182
        %v4199 = vadd.s32 %v4194, %v4196
        %vm4200 = vc.u32 %v4194, %v4196
        %v4201 = vadd.s32 %v4197, 1
        %v4202 = vsel %vm4200, %v4201, %v4197
        %v4203 = vadd.s32 %v4198, %v4202
        %v4204 = vadd.s32 %v4203, 536870912
        %v4205 = vshrl.u32 %v4204, 30
        %v4206 = vshll.u32 %v4205, 30
        %v4207 = vsub.s32 %v4203, %v4206
        %vm4208 = vcmp.lt.s32.totalorder %v4207, 0
        %v4209 = vsub.s32 0, %v4207
        %v4210 = vsel %vm4208, %v4209, %v4207
        %v4211 = vclz %v4210
        %v4212 = vsub.s32 %v4211, 2
        %vm4213 = vcmp.gt.s32.totalorder 0, %v4212
        %v4214 = vsel %vm4213, 0, %v4212
        %v4215 = vsub.s32 32, %v4214
        %v4216 = vshll.u32 %v4207, %v4214
        %v4217 = vshrl.u32 %v4199, %v4215
        %v4218 = vor.u32 %v4216, %v4217
        %v4219 = vsub.s32 4294967266, %v4214
        %v4220 = vadd.s32 %v4219, 127
        %v4221 = vshll.u32 %v4220, 23
        %v4222 = vor.u32 4788187, %v4221
        %v4223 = vand.u32 2147483647, %v4222
        %v4225 = vcvt.s32.f32 %v4218
        %v4226 = vmul.f32 %v4225, %v4223
        %v4227 = vxor.u32 %v4226, 2147483648
        %v4228 = vsel %vm4145, %v4227, %v4226
        %v4229 = vsub.s32 4, %v4205
        %v4230 = vsel %vm4145, %v4229, %v4205
        %v4231 = vsel %vm4144, %v289, %v4228
        %v4232 = vsel %vm4144, 0, %v4230
        %v4233 = vcosq.f32.pop %v4231
        %v4234 = vsinq.f32.pop %v4231
        %vm4235 = vweird.f32 %v289
        %v4236 = vand.u32 %v4232, 3
        %vm4237 = vcmp.lt.s32.totalorder %v4236, 2
        %vm4238 = vcmp.eq.s32.totalorder %v4236, 0
        %v4239 = vxor.u32 %v4234, 2147483648
        %v4240 = vsel %vm4238, %v4233, %v4239
        %vm4241 = vcmp.eq.s32.totalorder %v4236, 2
        %v4242 = vxor.u32 %v4233, 2147483648
        %v4243 = vsel %vm4241, %v4242, %v4234
        %v4244 = vsel %vm4237, %v4240, %v4243
        %v4245 = vsel %vm4235, nan, %v4244
        %v4246 = vand.u32 2147483647, %v290
        %vm4247 = vcmp.le.f32.partialorder %v4246, 0.7853982
        %vm4248 = vcmp.lt.s32.totalorder %v290, 0
        %v4249 = vand.u32 %v290, 2139095040
        %v4250 = vshrl.u32 %v4249, 23
        %v4251 = vsub.s32 %v4250, 127
        %v4252 = vand.u32 2147483647, %v290
        %v4253 = vand.u32 %v4252, 8388607
        %v4254 = vor.u32 %v4253, 8388608
        %v4255 = vsub.s32 0, %v4254
        %v4256 = vadd.s32 %v4251, 1
        %vm4257 = vcmp.gt.s32.totalorder %v4256, 0
        %v4258 = vsel %vm4257, %v4256, 0
        %v4259 = vshrl.u32 %v4258, 5
        %v4260 = vand.u32 %v4258, 31
        %v4261 = vsub.s32 32, %v4260
        %v4262 = vshrl.u32 683565275, %v4261
        %v4263 = vshll.u32 683565275, %v4260
        %v4264 = vshrl.u32 2475754826, %v4261
        %v4265 = vor.u32 %v4263, %v4264
        %v4266 = vshll.u32 2475754826, %v4260
        %v4267 = vshrl.u32 2131351028, %v4261
        %v4268 = vor.u32 %v4266, %v4267
        %v4269 = vshll.u32 2131351028, %v4260
        %v4270 = vshrl.u32 2102212464, %v4261
        %v4271 = vor.u32 %v4269, %v4270
        %v4272 = vshll.u32 2102212464, %v4260
        %v4273 = vshrl.u32 920167782, %v4261
        %v4274 = vor.u32 %v4272, %v4273
        %v4275 = vshll.u32 920167782, %v4260
        %v4276 = vshrl.u32 1326507024, %v4261
        %v4277 = vor.u32 %v4275, %v4276
        %vm4278 = vcmp.lt.s32.totalorder %v4259, 1
        %vm4279 = vcmp.lt.s32.totalorder %v4259, 2
        %vm4280 = vcmp.lt.s32.totalorder %v4259, 3
        %vm4281 = vcmp.lt.s32.totalorder %v4259, 4
        %v4282 = vsel %vm4278, %v4262, %v4265
        %v4283 = vsel %vm4281, %v4271, 2102212464
        %v4284 = vsel %vm4280, %v4268, %v4283
        %v4285 = vsel %vm4279, %v4282, %v4284
        %v4286 = vsel %vm4278, %v4265, %v4268
        %v4287 = vsel %vm4281, %v4274, 920167782
        %v4288 = vsel %vm4280, %v4271, %v4287
        %v4289 = vsel %vm4279, %v4286, %v4288
        %v4290 = vsel %vm4278, %v4268, %v4271
        %v4291 = vsel %vm4281, %v4277, 1326507024
        %v4292 = vsel %vm4280, %v4274, %v4291
        %v4293 = vsel %vm4279, %v4290, %v4292
        %v4294 = vshll.u32 %v4254, 8
        %v4295 = vmul.u32.u64.compose %v4294, %v4293
        %v4296 = vextract.low.u32 %v4295
        %v4297 = vextract.high.u32 %v4295
        %v4298 = vmul.u32.u64.compose %v4294, %v4289
        %v4299 = vextract.low.u32 %v4298
        %v4300 = vextract.high.u32 %v4298
        %v4301 = vmul.u32 %v4294, %v4285
        %v4302 = vadd.s32 %v4297, %v4299
        %vm4303 = vc.u32 %v4297, %v4299
        %v4304 = vadd.s32 %v4300, 1
        %v4305 = vsel %vm4303, %v4304, %v4300
        %v4306 = vadd.s32 %v4301, %v4305
        %v4307 = vadd.s32 %v4306, 536870912
        %v4308 = vshrl.u32 %v4307, 30
        %v4309 = vshll.u32 %v4308, 30
        %v4310 = vsub.s32 %v4306, %v4309
        %vm4311 = vcmp.lt.s32.totalorder %v4310, 0
        %v4312 = vsub.s32 0, %v4310
        %v4313 = vsel %vm4311, %v4312, %v4310
        %v4314 = vclz %v4313
        %v4315 = vsub.s32 %v4314, 2
        %vm4316 = vcmp.gt.s32.totalorder 0, %v4315
        %v4317 = vsel %vm4316, 0, %v4315
        %v4318 = vsub.s32 32, %v4317
        %v4319 = vshll.u32 %v4310, %v4317
        %v4320 = vshrl.u32 %v4302, %v4318
        %v4321 = vor.u32 %v4319, %v4320
        %v4322 = vsub.s32 4294967266, %v4317
        %v4323 = vadd.s32 %v4322, 127
        %v4324 = vshll.u32 %v4323, 23
        %v4325 = vor.u32 4788187, %v4324
        %v4326 = vand.u32 2147483647, %v4325
        %v4328 = vcvt.s32.f32 %v4321
        %v4329 = vmul.f32 %v4328, %v4326
        %v4330 = vxor.u32 %v4329, 2147483648
        %v4331 = vsel %vm4248, %v4330, %v4329
        %v4332 = vsub.s32 4, %v4308
        %v4333 = vsel %vm4248, %v4332, %v4308
        %v4334 = vsel %vm4247, %v290, %v4331
        %v4335 = vsel %vm4247, 0, %v4333
        %v4336 = vcosq.f32.pop %v4334
        %v4337 = vsinq.f32.pop %v4334
        %vm4338 = vweird.f32 %v290
        %v4339 = vand.u32 %v4335, 3
        %vm4340 = vcmp.lt.s32.totalorder %v4339, 2
        %vm4341 = vcmp.eq.s32.totalorder %v4339, 0
        %v4342 = vxor.u32 %v4337, 2147483648
        %v4343 = vsel %vm4341, %v4336, %v4342
        %vm4344 = vcmp.eq.s32.totalorder %v4339, 2
        %v4345 = vxor.u32 %v4336, 2147483648
        %v4346 = vsel %vm4344, %v4345, %v4337
        %v4347 = vsel %vm4340, %v4343, %v4346
        %v4348 = vsel %vm4338, nan, %v4347
        %v4349 = vand.u32 2147483647, %v291
        %vm4350 = vcmp.le.f32.partialorder %v4349, 0.7853982
        %vm4351 = vcmp.lt.s32.totalorder %v291, 0
        %v4352 = vand.u32 %v291, 2139095040
        %v4353 = vshrl.u32 %v4352, 23
        %v4354 = vsub.s32 %v4353, 127
        %v4355 = vand.u32 2147483647, %v291
        %v4356 = vand.u32 %v4355, 8388607
        %v4357 = vor.u32 %v4356, 8388608
        %v4358 = vsub.s32 0, %v4357
        %v4359 = vadd.s32 %v4354, 1
        %vm4360 = vcmp.gt.s32.totalorder %v4359, 0
        %v4361 = vsel %vm4360, %v4359, 0
        %v4362 = vshrl.u32 %v4361, 5
        %v4363 = vand.u32 %v4361, 31
        %v4364 = vsub.s32 32, %v4363
        %v4365 = vshrl.u32 683565275, %v4364
        %v4366 = vshll.u32 683565275, %v4363
        %v4367 = vshrl.u32 2475754826, %v4364
        %v4368 = vor.u32 %v4366, %v4367
        %v4369 = vshll.u32 2475754826, %v4363
        %v4370 = vshrl.u32 2131351028, %v4364
        %v4371 = vor.u32 %v4369, %v4370
        %v4372 = vshll.u32 2131351028, %v4363
        %v4373 = vshrl.u32 2102212464, %v4364
        %v4374 = vor.u32 %v4372, %v4373
        %v4375 = vshll.u32 2102212464, %v4363
        %v4376 = vshrl.u32 920167782, %v4364
        %v4377 = vor.u32 %v4375, %v4376
        %v4378 = vshll.u32 920167782, %v4363
        %v4379 = vshrl.u32 1326507024, %v4364
        %v4380 = vor.u32 %v4378, %v4379
        %vm4381 = vcmp.lt.s32.totalorder %v4362, 1
        %vm4382 = vcmp.lt.s32.totalorder %v4362, 2
        %vm4383 = vcmp.lt.s32.totalorder %v4362, 3
        %vm4384 = vcmp.lt.s32.totalorder %v4362, 4
        %v4385 = vsel %vm4381, %v4365, %v4368
        %v4386 = vsel %vm4384, %v4374, 2102212464
        %v4387 = vsel %vm4383, %v4371, %v4386
        %v4388 = vsel %vm4382, %v4385, %v4387
        %v4389 = vsel %vm4381, %v4368, %v4371
        %v4390 = vsel %vm4384, %v4377, 920167782
        %v4391 = vsel %vm4383, %v4374, %v4390
        %v4392 = vsel %vm4382, %v4389, %v4391
        %v4393 = vsel %vm4381, %v4371, %v4374
        %v4394 = vsel %vm4384, %v4380, 1326507024
        %v4395 = vsel %vm4383, %v4377, %v4394
        %v4396 = vsel %vm4382, %v4393, %v4395
        %v4397 = vshll.u32 %v4357, 8
        %v4398 = vmul.u32.u64.compose %v4397, %v4396
        %v4399 = vextract.low.u32 %v4398
        %v4400 = vextract.high.u32 %v4398
        %v4401 = vmul.u32.u64.compose %v4397, %v4392
        %v4402 = vextract.low.u32 %v4401
        %v4403 = vextract.high.u32 %v4401
        %v4404 = vmul.u32 %v4397, %v4388
        %v4405 = vadd.s32 %v4400, %v4402
        %vm4406 = vc.u32 %v4400, %v4402
        %v4407 = vadd.s32 %v4403, 1
        %v4408 = vsel %vm4406, %v4407, %v4403
        %v4409 = vadd.s32 %v4404, %v4408
        %v4410 = vadd.s32 %v4409, 536870912
        %v4411 = vshrl.u32 %v4410, 30
        %v4412 = vshll.u32 %v4411, 30
        %v4413 = vsub.s32 %v4409, %v4412
        %vm4414 = vcmp.lt.s32.totalorder %v4413, 0
        %v4415 = vsub.s32 0, %v4413
        %v4416 = vsel %vm4414, %v4415, %v4413
        %v4417 = vclz %v4416
        %v4418 = vsub.s32 %v4417, 2
        %vm4419 = vcmp.gt.s32.totalorder 0, %v4418
        %v4420 = vsel %vm4419, 0, %v4418
        %v4421 = vsub.s32 32, %v4420
        %v4422 = vshll.u32 %v4413, %v4420
        %v4423 = vshrl.u32 %v4405, %v4421
        %v4424 = vor.u32 %v4422, %v4423
        %v4425 = vsub.s32 4294967266, %v4420
        %v4426 = vadd.s32 %v4425, 127
        %v4427 = vshll.u32 %v4426, 23
        %v4428 = vor.u32 4788187, %v4427
        %v4429 = vand.u32 2147483647, %v4428
        %v4431 = vcvt.s32.f32 %v4424
        %v4432 = vmul.f32 %v4431, %v4429
        %v4433 = vxor.u32 %v4432, 2147483648
        %v4434 = vsel %vm4351, %v4433, %v4432
        %v4435 = vsub.s32 4, %v4411
        %v4436 = vsel %vm4351, %v4435, %v4411
        %v4437 = vsel %vm4350, %v291, %v4434
        %v4438 = vsel %vm4350, 0, %v4436
        %v4439 = vcosq.f32.pop %v4437
        %v4440 = vsinq.f32.pop %v4437
        %vm4441 = vweird.f32 %v291
        %v4442 = vand.u32 %v4438, 3
        %vm4443 = vcmp.lt.s32.totalorder %v4442, 2
        %vm4444 = vcmp.eq.s32.totalorder %v4442, 0
        %v4445 = vxor.u32 %v4440, 2147483648
        %v4446 = vsel %vm4444, %v4439, %v4445
        %vm4447 = vcmp.eq.s32.totalorder %v4442, 2
        %v4448 = vxor.u32 %v4439, 2147483648
        %v4449 = vsel %vm4447, %v4448, %v4440
        %v4450 = vsel %vm4443, %v4446, %v4449
        %v4451 = vsel %vm4441, nan, %v4450
        %4452 = vst [vmem:[%s137 + $0x8] sm:$0xff] %v2494
        %4453 = vst [vmem:[%s137 + $0x18] sm:$0xff] %v2597
        %4454 = vst [vmem:[%s137 + $0x28] sm:$0xff] %v2700
        %4455 = vst [vmem:[%s137 + $0x38] sm:$0xff] %v2803
        %4456 = vst [vmem:[%s137 + $0x48] sm:$0xff] %v2906
        %4457 = vst [vmem:[%s137 + $0x58] sm:$0xff] %v3009
        %4458 = vst [vmem:[%s137 + $0x68] sm:$0xff] %v3112
        %4459 = vst [vmem:[%s137 + $0x78] sm:$0xff] %v3215
        %4460 = vst [vmem:[%s137 + $0x88] sm:$0xff] %v3318
        %4461 = vst [vmem:[%s137 + $0x98] sm:$0xff] %v3421
        %4462 = vst [vmem:[%s137 + $0xa8] sm:$0xff] %v3524
        %4463 = vst [vmem:[%s137 + $0xb8] sm:$0xff] %v3627
        %4464 = vst [vmem:[%s137 + $0xc8] sm:$0xff] %v3730
        %4465 = vst [vmem:[%s137 + $0xd8] sm:$0xff] %v3833
        %4466 = vst [vmem:[%s137 + $0xe8] sm:$0xff] %v3936
        %4467 = vst [vmem:[%s137 + $0xf8] sm:$0xff] %v4039
        %4468 = vst [vmem:[%s137 + $0x108] sm:$0xff] %v4142
        %4469 = vst [vmem:[%s137 + $0x118] sm:$0xff] %v4245
        %4470 = vst [vmem:[%s137 + $0x128] sm:$0xff] %v4348
        %4471 = vst [vmem:[%s137 + $0x138] sm:$0xff] %v4451
        %s4472 = sand.u32 %s71, 1
        %s4473 = scalar_lea.sflag [#allocation3], %s4472
        %s4474 = sand.u32 %s71, 1
        %s4475 = smul.addr %s4474, 320
        %s4476 = scalar_lea.vmem [#allocation2], %s4475
        // Predicated region
        $region29: #{tpu_custom_call.1} parent=27 // pred_check
          %p4477 = pneg %p81
        $region30: #{tpu_custom_call.1} parent=27 // pred_check_branch
          %4479 = sbr.rel (%p4477) target = $region32
        $region31: #{tpu_custom_call.1} parent=27 // pred_region
          %s4480 = smul.u32 20, %s16
          %s4482 = ssub.s32 5120, 5120
          %4483 = vsyncadd %s4473, %s4482
          %s4484 = smul.addr %s4480, 2
          %s4485 = smul.addr %s4484, 128
          %s4486 = scalar_lea.hbm %s2, %s4485
          %s4487 = sshll.u32 %s4476, 4
          %s4488 = int_to_ptr.vmem [resolvable:$true] %s4487
          %4493 = dma.vmem_to_hbm [thread:$0]  %s4488, 5120, %s4486, %s4473, 256, 256, 16
        $region32: #{tpu_custom_call.1} parent=27 // pred_fallthru
          _
      $region28: #{tpu_custom_call.1} parent=5 // pred_fallthru
        _
      %p4494 = scmp.le.s32.totalorder 2, %s11
      // Predicated region
      $region33: #{tpu_custom_call.1} parent=5 // pred_check
        %p4495 = pneg %p4494
      $region34: #{tpu_custom_call.1} parent=5 // pred_check_branch
        %4497 = sbr.rel (%p4495) target = $region36
      $region35: #{tpu_custom_call.1} parent=5 // pred_region
        %s4498 = ssub.s32 %s11, 2
        // Predicated region
        $region37: #{tpu_custom_call.1} parent=35 // pred_check
          %p4499 = pneg %p87
        $region38: #{tpu_custom_call.1} parent=35 // pred_check_branch
          %4501 = sbr.rel (%p4499) target = $region40
        $region39: #{tpu_custom_call.1} parent=35 // pred_region
          %s4502 = sand.u32 %s72, 1
          %s4503 = scalar_lea.sflag [#allocation3], %s4502
          %s4504 = sand.u32 %s72, 1
          %s4505 = smul.addr %s4504, 320
          %s4506 = scalar_lea.vmem [#allocation2], %s4505
          %4507 = dma.done %s4503, 5120
        $region40: #{tpu_custom_call.1} parent=35 // pred_fallthru
          _
      $region36: #{tpu_custom_call.1} parent=5 // pred_fallthru
        _
    $region6: #{tpu_custom_call.1} parent=1 // loop_footer
      %s15 = sadd.s32 1, %s11
    $region7: #{tpu_custom_call.1} parent=1 // loop_footer_branch
      %10 = sbr.rel target = $region3
    $region8: #{tpu_custom_call.1} parent=1 // loop_exit
      _
    %4508 = vsyncpa [#allocation3], 1
    %s4509 = scalar_lea.sflag [#allocation3], 1
    %4510 = vsyncpa %s4509, 1

</llo_original>
